<compile_context>
chip_gen: v7x
topology: tpu7x:2x2x1
jax: 0.10.0
libtpu: 0.0.40
codegen_flags: <defaults>
</compile_context>

<pallas_src>
import numpy as np
import jax
import jax.numpy as jnp
from jax.experimental import pallas as pl
from jax.experimental.pallas import tpu as pltpu

HIDDEN = 128
Z_DIM = 64
N_FREQ_PTS = 10          # -> pts embed dim = 3 * 10 * 2 = 60
N_FREQ_VIEW = 4          # -> view embed dim = 3 * 4 * 2 = 24
PTS_EMB = 3 * N_FREQ_PTS * 2
VIEW_EMB = 3 * N_FREQ_VIEW * 2
RGB_OUT = 3
DOWNSCALE_P_BY = 0.5


# ----------------------------------------------------------------------------
# Positional encoding (cheap elementwise glue, done in plain JAX)
# ----------------------------------------------------------------------------
def transform_points(p, n_freq):
    """p: (M, 3) -> (M, 3*2*n_freq), matching the PyTorch 'normal' encoding."""
    p = p / DOWNSCALE_P_BY
    feats = []
    for i in range(n_freq):
        arg = (2.0 ** i) * jnp.pi * p
        feats.append(jnp.concatenate([jnp.sin(arg), jnp.cos(arg)], axis=-1))
    return jnp.concatenate(feats, axis=-1)


# ----------------------------------------------------------------------------
# Pallas kernel: the whole MLP hot path for one tile of points
#   x_ref    : (tm, 256) bf16  -- [p_emb|z|pad4] in lanes 0..127,
#                                 [z|v_emb|pad40] in lanes 128..255
#   wA_ref   : (128, 256) bf16 -- N-fused [input-layer | skip-layer] weights
#   wmid_ref : (3, 128, 128) bf16 -- blocks[0..2]
#   wV_ref   : (256, 128) bf16 -- K-fused view-layer weights [w_fv; w_zv; w_view; 0]
#   wout_ref : (128, 128) bf16 -- feat_out, zero-padded to 128 output lanes
#   b_ref    : (7, 1, 128) f32 -- fused biases (see pack_params)
#   o_ref    : (tm, 128) bf16  -- padded output (cols 0..2 are the rgb features)
#   kbuf     : (tm, 256) bf16 VMEM scratch -- staging for the K=256 view matmul
# ----------------------------------------------------------------------------
def decoder_kernel(x_ref, wA_ref, wmid_ref, wV_ref, wout_ref, b_ref, o_ref, kbuf):
    relu = lambda t: jnp.maximum(t, 0.0)
    bf16 = jnp.bfloat16

    xA = x_ref[:, :HIDDEN]        # (tm, 128) bf16  [p_emb | z | 0]
    # Stage the xB half ([z | v_emb | 0]) of the view-layer LHS early; the
    # vst slots have slack while the MXU is the binding unit.
    kbuf[:, HIDDEN:] = x_ref[:, HIDDEN:]

    # (1) N-fused input + skip layers: one K=128, N=256 MXU push.
    h = jnp.dot(xA, wA_ref[...], preferred_element_type=jnp.float32)   # (tm, 256)
    net = relu(h[:, :HIDDEN] + b_ref[0])          # fc_in(p) + fc_z(z), relu
    skip = h[:, HIDDEN:] + b_ref[3]               # fc_p_skips[0](p) + fc_z_skips[0](z)

    # (2) blocks[0]
    net = relu(jnp.dot(net.astype(bf16), wmid_ref[0],
                       preferred_element_type=jnp.float32) + b_ref[1])
    # (3) blocks[1] followed by the skip connection (idx+1 == 2 in skips)
    net = relu(jnp.dot(net.astype(bf16), wmid_ref[1],
                       preferred_element_type=jnp.float32) + b_ref[2])
    net = net + skip
    # (4) blocks[2]
    net = relu(jnp.dot(net.astype(bf16), wmid_ref[2],
                       preferred_element_type=jnp.float32) + b_ref[4])

    # (5) view layer, K-fused: [net | z | v_emb | 0] @ [w_fv ; w_zv ; w_view ; 0]
    kbuf[:, :HIDDEN] = net.astype(bf16)
    net = relu(jnp.dot(kbuf[...], wV_ref[...],
                       preferred_element_type=jnp.float32) + b_ref[5])

    # (6) feat_out (3 useful lanes zero-padded to 128; no final sigmoid), bf16 store
    o_ref[...] = (jnp.dot(net.astype(bf16), wout_ref[...],
                          preferred_element_type=jnp.float32)
                  + b_ref[6]).astype(o_ref.dtype)


# ----------------------------------------------------------------------------
# Parameter packing: fuse parallel matmuls (along N and along K), fold biases,
# pad to 128-lane multiples, cast weights to bf16.
# Returns (w_A (128,256), w_mid (3,128,128), w_V (256,128), w_out (128,128),
#          b_stack (7,1,128) f32)
# ----------------------------------------------------------------------------
def pack_params(params):
    (w_in, b_in, w_z, b_z, w_b0, b_b0, w_b1, b_b1, w_b2, b_b2,
     w_zs, b_zs, w_ps, b_ps, w_fv, b_fv, w_zv, b_zv,
     w_view, b_view, w_fo, b_fo) = params

    def pad_rows(w):
        return jnp.pad(w, ((0, HIDDEN - w.shape[0]), (0, 0)))

    # N-fused input-layer / skip-layer weights (both consume xA = [p_emb | z | 0])
    w_input = pad_rows(jnp.concatenate([w_in, w_z], axis=0))     # (128, 128)
    w_skip = pad_rows(jnp.concatenate([w_ps, w_zs], axis=0))     # (128, 128)
    w_A = jnp.concatenate([w_input, w_skip], axis=1).astype(jnp.bfloat16)  # (128, 256)

    # Hidden blocks
    w_mid = jnp.stack([w_b0, w_b1, w_b2]).astype(jnp.bfloat16)   # (3, 128, 128)

    # K-fused view layer: [net | z | v_emb | 0] @ [w_fv ; w_zv ; w_view ; 0]
    w_xB = pad_rows(jnp.concatenate([w_zv, w_view], axis=0))     # (128, 128)
    w_V = jnp.concatenate([w_fv, w_xB], axis=0).astype(jnp.bfloat16)       # (256, 128)

    # feat_out: 3 -> 128 output lanes (lane-dense store; wrapper slices [:, :3])
    w_out = jnp.pad(w_fo, ((0, 0), (0, HIDDEN - w_fo.shape[1]))).astype(jnp.bfloat16)

    b_stack = jnp.stack([
        b_in + b_z,                                              # 0: input layer
        b_b0,                                                    # 1: blocks[0]
        b_b1,                                                    # 2: blocks[1]
        b_zs + b_ps,                                             # 3: skip
        b_b2,                                                    # 4: blocks[2]
        b_fv + b_zv + b_view,                                    # 5: view layer
        jnp.pad(b_fo, ((0, 0), (0, HIDDEN - b_fo.shape[1]))),    # 6: feat_out
    ]).astype(jnp.float32)                                       # (7, 1, 128)

    return w_A, w_mid, w_V, w_out, b_stack


# ----------------------------------------------------------------------------
# Wrapper: build the lane-dense input slab, choose tile, pad rows, pallas_call
# ----------------------------------------------------------------------------
def giraffe_decoder_2d(pts, z, ray_d, params, *, tm_max=4096,
                       vmem_limit_bytes=48 * 1024 * 1024):
    B, N, _ = pts.shape
    M = B * N

    # Glue: positional encodings + per-point broadcast of the latent code.
    p_emb = transform_points(pts.reshape(M, 3), N_FREQ_PTS)             # (M, 60)
    rd = ray_d / jnp.linalg.norm(ray_d, axis=-1, keepdims=True)
    v_emb = transform_points(rd.reshape(M, 3), N_FREQ_VIEW)             # (M, 24)
    z_pp = jnp.broadcast_to(z[:, None, :], (B, N, Z_DIM)).reshape(M, Z_DIM)

    pad_a = HIDDEN - PTS_EMB - Z_DIM        # 4
    pad_b = HIDDEN - Z_DIM - VIEW_EMB       # 40
    slab_a = jnp.concatenate(
        [p_emb, z_pp, jnp.zeros((M, pad_a), jnp.float32)], axis=-1)     # (M, 128)
    slab_b = jnp.concatenate(
        [z_pp, v_emb, jnp.zeros((M, pad_b), jnp.float32)], axis=-1)     # (M, 128)
    slab = jnp.concatenate([slab_a, slab_b], axis=-1).astype(jnp.bfloat16)  # (M, 256)

    # Tile choice: as big as possible (amortize ~0.35us per-step pipeline
    # overhead) but keep >= 2 grid steps so both v7x TensorCores get work.
    half = (M + 1) // 2
    tm = min(tm_max, max(8, ((half + 7) // 8) * 8))
    grid_m = pl.cdiv(M, tm)
    m_pad = grid_m * tm
    if m_pad != M:
        slab = jnp.pad(slab, ((0, m_pad - M), (0, 0)))

    w_A, w_mid, w_V, w_out, b_stack = pack_params(params)

    grid_spec = pltpu.PrefetchScalarGridSpec(
        num_scalar_prefetch=0,
        grid=(grid_m,),
        in_specs=[
            pl.BlockSpec((tm, 2 * HIDDEN), lambda i: (i, 0)),            # input slab
            pl.BlockSpec((HIDDEN, 2 * HIDDEN), lambda i: (0, 0)),        # w_A
            pl.BlockSpec((3, HIDDEN, HIDDEN), lambda i: (0, 0, 0)),      # w_mid
            pl.BlockSpec((2 * HIDDEN, HIDDEN), lambda i: (0, 0)),        # w_V
            pl.BlockSpec((HIDDEN, HIDDEN), lambda i: (0, 0)),            # w_out
            pl.BlockSpec((7, 1, HIDDEN), lambda i: (0, 0, 0)),           # biases
        ],
        out_specs=pl.BlockSpec((tm, HIDDEN), lambda i: (i, 0)),
        scratch_shapes=[pltpu.VMEM((tm, 2 * HIDDEN), jnp.bfloat16)],
    )

    out = pl.pallas_call(
        decoder_kernel,
        out_shape=jax.ShapeDtypeStruct((m_pad, HIDDEN), jnp.bfloat16),
        grid_spec=grid_spec,
        compiler_params=pltpu.CompilerParams(
            dimension_semantics=("parallel",),
            vmem_limit_bytes=vmem_limit_bytes,
        ),
    )(slab, w_A, w_mid, w_V, w_out, b_stack)

    return out[:M, :RGB_OUT].astype(jnp.float32).reshape(B, N, RGB_OUT)


# ----------------------------------------------------------------------------
# Deterministic parameter init (PyTorch nn.Linear default: U(-1/sqrt(fi), ..))
# ----------------------------------------------------------------------------
def linear_params(key, fan_in, fan_out):
    kw, kb = jax.random.split(key)
    bound = 1.0 / np.sqrt(fan_in)
    w = jax.random.uniform(kw, (fan_in, fan_out), jnp.float32, -bound, bound)
    b = jax.random.uniform(kb, (1, fan_out), jnp.float32, -bound, bound)
    return w, b


def init_params(key):
    layer_dims = [
        (PTS_EMB, HIDDEN),    # fc_in
        (Z_DIM, HIDDEN),      # fc_z
        (HIDDEN, HIDDEN),     # blocks[0]
        (HIDDEN, HIDDEN),     # blocks[1]
        (HIDDEN, HIDDEN),     # blocks[2]
        (Z_DIM, HIDDEN),      # fc_z_skips[0]
        (PTS_EMB, HIDDEN),    # fc_p_skips[0]
        (HIDDEN, HIDDEN),     # feat_view
        (Z_DIM, HIDDEN),      # fc_z_view
        (VIEW_EMB, HIDDEN),   # fc_view
        (HIDDEN, RGB_OUT),    # feat_out
    ]
    params = []
    for dims in layer_dims:
        key, sub = jax.random.split(key)
        w, b = linear_params(sub, *dims)
        params += [w, b]
    return params


# ----------------------------------------------------------------------------
# Pure-JAX f32 reference (for correctness check)
# ----------------------------------------------------------------------------
def reference_forward(pts, z, ray_d, params):
    (w_in, b_in, w_z, b_z, w_b0, b_b0, w_b1, b_b1, w_b2, b_b2,
     w_zs, b_zs, w_ps, b_ps, w_fv, b_fv, w_zv, b_zv,
     w_view, b_view, w_fo, b_fo) = params
    B, N, _ = pts.shape
    M = B * N
    relu = lambda x: jnp.maximum(x, 0.0)

    p = transform_points(pts.reshape(M, 3), N_FREQ_PTS)
    rd = ray_d / jnp.linalg.norm(ray_d, axis=-1, keepdims=True)
    v = transform_points(rd.reshape(M, 3), N_FREQ_VIEW)
    zp = jnp.broadcast_to(z[:, None, :], (B, N, Z_DIM)).reshape(M, Z_DIM)

    net = p @ w_in + b_in + zp @ w_z + b_z
    net = relu(net)
    net = relu(net @ w_b0 + b_b0)
    net = relu(net @ w_b1 + b_b1)
    net = net + zp @ w_zs + b_zs
    net = net + p @ w_ps + b_ps
    net = relu(net @ w_b2 + b_b2)
    net = net @ w_fv + b_fv
    net = net + zp @ w_zv + b_zv
    net = net + v @ w_view + b_view
    net = relu(net)
    out = net @ w_fo + b_fo
    return out.reshape(B, N, RGB_OUT)


# ----------------------------------------------------------------------------
if __name__ == "__main__":
    key = jax.random.PRNGKey(0)
    k_pts, k_z, k_rd, k_par = jax.random.split(key, 4)

    B, N = 2, 512                      # M = 1024 points -> tm = 512, grid = 2
    pts = jax.random.normal(k_pts, (B, N, 3), jnp.float32)
    z = jax.random.normal(k_z, (B, Z_DIM), jnp.float32)
    ray_d = jax.random.normal(k_rd, (B, N, 3), jnp.float32)

    params = init_params(k_par)

    out = giraffe_decoder_2d(pts, z, ray_d, params)
    out = jax.block_until_ready(out)

    ref = reference_forward(pts, z, ray_d, params)
    # bf16 matmul path + bf16 output vs f32 reference -> relaxed tolerance
    # (acceptable for NeRF inference).
    np.testing.assert_allclose(np.asarray(out), np.asarray(ref),
                               rtol=3e-2, atol=3e-2)

    # TODO(synk): the PyTorch forward returns the undefined name `rgb_out`
    # (a bug); this kernel returns `feat_out`, the intended output.
    print("KERNEL_OK")
</pallas_src>

<mosaic_0001>
module attributes {stable_mosaic.version = 11 : i64} {
  func.func @decoder_kernel(%arg0: i32, %arg1: memref<512x256xbf16, #tpu.memory_space<vmem>>, %arg2: memref<128x256xbf16, #tpu.memory_space<vmem>>, %arg3: memref<3x128x128xbf16, #tpu.memory_space<vmem>>, %arg4: memref<256x128xbf16, #tpu.memory_space<vmem>>, %arg5: memref<128x128xbf16, #tpu.memory_space<vmem>>, %arg6: memref<7x1x128xf32, #tpu.memory_space<vmem>>, %arg7: memref<512x128xbf16, #tpu.memory_space<vmem>>, %arg8: memref<512x256xbf16, #tpu.memory_space<vmem>>) attributes {dimension_semantics = [#tpu.dimension_semantics<parallel>], iteration_bounds = array<i64: 2>, scalar_prefetch = 0 : i64, scratch_operands = 1 : i64, tpu.core_type = #tpu.core_type<tc>, window_params = [{transform_indices = @transform_0, window_bounds = array<i64: 512, 256>}, {pipeline_mode = #tpu.pipeline_mode<synchronous>, transform_indices = @transform_1, window_bounds = array<i64: 128, 256>}, {pipeline_mode = #tpu.pipeline_mode<synchronous>, transform_indices = @transform_2, window_bounds = array<i64: 3, 128, 128>}, {pipeline_mode = #tpu.pipeline_mode<synchronous>, transform_indices = @transform_3, window_bounds = array<i64: 256, 128>}, {pipeline_mode = #tpu.pipeline_mode<synchronous>, transform_indices = @transform_4, window_bounds = array<i64: 128, 128>}, {pipeline_mode = #tpu.pipeline_mode<synchronous>, transform_indices = @transform_5, window_bounds = array<i64: 7, 1, 128>}, {transform_indices = @transform_6, window_bounds = array<i64: 512, 128>}]} {
    %c0 = arith.constant 0 : index
    %c0_0 = arith.constant 0 : index
    %0 = vector.load %arg1[%c0, %c0_0] : memref<512x256xbf16, #tpu.memory_space<vmem>>, vector<512x128xbf16>
    %c0_1 = arith.constant 0 : index
    %c128 = arith.constant 128 : index
    %1 = vector.load %arg1[%c0_1, %c128] : memref<512x256xbf16, #tpu.memory_space<vmem>>, vector<512x128xbf16>
    %c0_2 = arith.constant 0 : index
    %c128_3 = arith.constant 128 : index
    %2 = vector.load %arg8[%c0_2, %c128_3] : memref<512x256xbf16, #tpu.memory_space<vmem>>, vector<512x128xbf16>
    tpu.vector_store %arg8[%c0_2, %c128_3], %1 {strides = array<i32>} : memref<512x256xbf16, #tpu.memory_space<vmem>>, vector<512x128xbf16>,
    %c0_4 = arith.constant 0 : index
    %c0_5 = arith.constant 0 : index
    %3 = vector.load %arg2[%c0_4, %c0_5] : memref<128x256xbf16, #tpu.memory_space<vmem>>, vector<128x256xbf16>
    %cst = arith.constant dense<0.000000e+00> : vector<512x256xf32>
    %4 = tpu.matmul %0, %3, %cst {dimension_numbers = #tpu.dot_dimension_numbers<[1], [0], [0], [1], [0, 0, 1, 1], [], []>} : vector<512x128xbf16>, vector<128x256xbf16>, vector<512x256xf32> -> vector<512x256xf32>
    %5 = vector.extract_strided_slice %4 {offsets = [0, 0], sizes = [512, 128], strides = [1, 1]} : vector<512x256xf32> to vector<512x128xf32>
    %c0_6 = arith.constant 0 : index
    %c0_7 = arith.constant 0 : index
    %c0_8 = arith.constant 0 : index
    %6 = vector.load %arg6[%c0_6, %c0_7, %c0_8] : memref<7x1x128xf32, #tpu.memory_space<vmem>>, vector<1x1x128xf32>
    %7 = vector.shape_cast %6 : vector<1x1x128xf32> to vector<1x128xf32>
    %8 = vector.broadcast %7 : vector<1x128xf32> to vector<512x128xf32>
    %9 = arith.addf %5, %8 : vector<512x128xf32>
    %cst_9 = arith.constant 0.000000e+00 : f32
    %10 = vector.broadcast %cst_9 : f32 to vector<512x128xf32>
    %11 = arith.maximumf %9, %10 : vector<512x128xf32>
    %12 = vector.extract_strided_slice %4 {offsets = [0, 128], sizes = [512, 128], strides = [1, 1]} : vector<512x256xf32> to vector<512x128xf32>
    %c3 = arith.constant 3 : index
    %c0_10 = arith.constant 0 : index
    %c0_11 = arith.constant 0 : index
    %13 = vector.load %arg6[%c3, %c0_10, %c0_11] : memref<7x1x128xf32, #tpu.memory_space<vmem>>, vector<1x1x128xf32>
    %14 = vector.shape_cast %13 : vector<1x1x128xf32> to vector<1x128xf32>
    %15 = vector.broadcast %14 : vector<1x128xf32> to vector<512x128xf32>
    %16 = arith.addf %12, %15 : vector<512x128xf32>
    %17 = arith.truncf %11 : vector<512x128xf32> to vector<512x128xbf16>
    %c0_12 = arith.constant 0 : index
    %c0_13 = arith.constant 0 : index
    %c0_14 = arith.constant 0 : index
    %18 = vector.load %arg3[%c0_12, %c0_13, %c0_14] : memref<3x128x128xbf16, #tpu.memory_space<vmem>>, vector<1x128x128xbf16>
    %19 = vector.shape_cast %18 : vector<1x128x128xbf16> to vector<128x128xbf16>
    %cst_15 = arith.constant dense<0.000000e+00> : vector<512x128xf32>
    %20 = tpu.matmul %17, %19, %cst_15 {dimension_numbers = #tpu.dot_dimension_numbers<[1], [0], [0], [1], [0, 0, 1, 1], [], []>} : vector<512x128xbf16>, vector<128x128xbf16>, vector<512x128xf32> -> vector<512x128xf32>
    %c1 = arith.constant 1 : index
    %c0_16 = arith.constant 0 : index
    %c0_17 = arith.constant 0 : index
    %21 = vector.load %arg6[%c1, %c0_16, %c0_17] : memref<7x1x128xf32, #tpu.memory_space<vmem>>, vector<1x1x128xf32>
    %22 = vector.shape_cast %21 : vector<1x1x128xf32> to vector<1x128xf32>
    %23 = vector.broadcast %22 : vector<1x128xf32> to vector<512x128xf32>
    %24 = arith.addf %20, %23 : vector<512x128xf32>
    %cst_18 = arith.constant 0.000000e+00 : f32
    %25 = vector.broadcast %cst_18 : f32 to vector<512x128xf32>
    %26 = arith.maximumf %24, %25 : vector<512x128xf32>
    %27 = arith.truncf %26 : vector<512x128xf32> to vector<512x128xbf16>
    %c1_19 = arith.constant 1 : index
    %c0_20 = arith.constant 0 : index
    %c0_21 = arith.constant 0 : index
    %28 = vector.load %arg3[%c1_19, %c0_20, %c0_21] : memref<3x128x128xbf16, #tpu.memory_space<vmem>>, vector<1x128x128xbf16>
    %29 = vector.shape_cast %28 : vector<1x128x128xbf16> to vector<128x128xbf16>
    %cst_22 = arith.constant dense<0.000000e+00> : vector<512x128xf32>
    %30 = tpu.matmul %27, %29, %cst_22 {dimension_numbers = #tpu.dot_dimension_numbers<[1], [0], [0], [1], [0, 0, 1, 1], [], []>} : vector<512x128xbf16>, vector<128x128xbf16>, vector<512x128xf32> -> vector<512x128xf32>
    %c2 = arith.constant 2 : index
    %c0_23 = arith.constant 0 : index
    %c0_24 = arith.constant 0 : index
    %31 = vector.load %arg6[%c2, %c0_23, %c0_24] : memref<7x1x128xf32, #tpu.memory_space<vmem>>, vector<1x1x128xf32>
    %32 = vector.shape_cast %31 : vector<1x1x128xf32> to vector<1x128xf32>
    %33 = vector.broadcast %32 : vector<1x128xf32> to vector<512x128xf32>
    %34 = arith.addf %30, %33 : vector<512x128xf32>
    %cst_25 = arith.constant 0.000000e+00 : f32
    %35 = vector.broadcast %cst_25 : f32 to vector<512x128xf32>
    %36 = arith.maximumf %34, %35 : vector<512x128xf32>
    %37 = arith.addf %36, %16 : vector<512x128xf32>
    %38 = arith.truncf %37 : vector<512x128xf32> to vector<512x128xbf16>
    %c2_26 = arith.constant 2 : index
    %c0_27 = arith.constant 0 : index
    %c0_28 = arith.constant 0 : index
    %39 = vector.load %arg3[%c2_26, %c0_27, %c0_28] : memref<3x128x128xbf16, #tpu.memory_space<vmem>>, vector<1x128x128xbf16>
    %40 = vector.shape_cast %39 : vector<1x128x128xbf16> to vector<128x128xbf16>
    %cst_29 = arith.constant dense<0.000000e+00> : vector<512x128xf32>
    %41 = tpu.matmul %38, %40, %cst_29 {dimension_numbers = #tpu.dot_dimension_numbers<[1], [0], [0], [1], [0, 0, 1, 1], [], []>} : vector<512x128xbf16>, vector<128x128xbf16>, vector<512x128xf32> -> vector<512x128xf32>
    %c4 = arith.constant 4 : index
    %c0_30 = arith.constant 0 : index
    %c0_31 = arith.constant 0 : index
    %42 = vector.load %arg6[%c4, %c0_30, %c0_31] : memref<7x1x128xf32, #tpu.memory_space<vmem>>, vector<1x1x128xf32>
    %43 = vector.shape_cast %42 : vector<1x1x128xf32> to vector<1x128xf32>
    %44 = vector.broadcast %43 : vector<1x128xf32> to vector<512x128xf32>
    %45 = arith.addf %41, %44 : vector<512x128xf32>
    %cst_32 = arith.constant 0.000000e+00 : f32
    %46 = vector.broadcast %cst_32 : f32 to vector<512x128xf32>
    %47 = arith.maximumf %45, %46 : vector<512x128xf32>
    %48 = arith.truncf %47 : vector<512x128xf32> to vector<512x128xbf16>
    %c0_33 = arith.constant 0 : index
    %c0_34 = arith.constant 0 : index
    %49 = vector.load %arg8[%c0_33, %c0_34] : memref<512x256xbf16, #tpu.memory_space<vmem>>, vector<512x128xbf16>
    tpu.vector_store %arg8[%c0_33, %c0_34], %48 {strides = array<i32>} : memref<512x256xbf16, #tpu.memory_space<vmem>>, vector<512x128xbf16>,
    %c0_35 = arith.constant 0 : index
    %c0_36 = arith.constant 0 : index
    %50 = vector.load %arg8[%c0_35, %c0_36] : memref<512x256xbf16, #tpu.memory_space<vmem>>, vector<512x256xbf16>
    %c0_37 = arith.constant 0 : index
    %c0_38 = arith.constant 0 : index
    %51 = vector.load %arg4[%c0_37, %c0_38] : memref<256x128xbf16, #tpu.memory_space<vmem>>, vector<256x128xbf16>
    %cst_39 = arith.constant dense<0.000000e+00> : vector<512x128xf32>
    %52 = tpu.matmul %50, %51, %cst_39 {dimension_numbers = #tpu.dot_dimension_numbers<[1], [0], [0], [1], [0, 0, 1, 1], [], []>} : vector<512x256xbf16>, vector<256x128xbf16>, vector<512x128xf32> -> vector<512x128xf32>
    %c5 = arith.constant 5 : index
    %c0_40 = arith.constant 0 : index
    %c0_41 = arith.constant 0 : index
    %53 = vector.load %arg6[%c5, %c0_40, %c0_41] : memref<7x1x128xf32, #tpu.memory_space<vmem>>, vector<1x1x128xf32>
    %54 = vector.shape_cast %53 : vector<1x1x128xf32> to vector<1x128xf32>
    %55 = vector.broadcast %54 : vector<1x128xf32> to vector<512x128xf32>
    %56 = arith.addf %52, %55 : vector<512x128xf32>
    %cst_42 = arith.constant 0.000000e+00 : f32
    %57 = vector.broadcast %cst_42 : f32 to vector<512x128xf32>
    %58 = arith.maximumf %56, %57 : vector<512x128xf32>
    %59 = arith.truncf %58 : vector<512x128xf32> to vector<512x128xbf16>
    %c0_43 = arith.constant 0 : index
    %c0_44 = arith.constant 0 : index
    %60 = vector.load %arg5[%c0_43, %c0_44] : memref<128x128xbf16, #tpu.memory_space<vmem>>, vector<128x128xbf16>
    %cst_45 = arith.constant dense<0.000000e+00> : vector<512x128xf32>
    %61 = tpu.matmul %59, %60, %cst_45 {dimension_numbers = #tpu.dot_dimension_numbers<[1], [0], [0], [1], [0, 0, 1, 1], [], []>} : vector<512x128xbf16>, vector<128x128xbf16>, vector<512x128xf32> -> vector<512x128xf32>
    %c6 = arith.constant 6 : index
    %c0_46 = arith.constant 0 : index
    %c0_47 = arith.constant 0 : index
    %62 = vector.load %arg6[%c6, %c0_46, %c0_47] : memref<7x1x128xf32, #tpu.memory_space<vmem>>, vector<1x1x128xf32>
    %63 = vector.shape_cast %62 : vector<1x1x128xf32> to vector<1x128xf32>
    %64 = vector.broadcast %63 : vector<1x128xf32> to vector<512x128xf32>
    %65 = arith.addf %61, %64 : vector<512x128xf32>
    %66 = arith.truncf %65 : vector<512x128xf32> to vector<512x128xbf16>
    %c0_48 = arith.constant 0 : index
    %c0_49 = arith.constant 0 : index
    %67 = vector.load %arg7[%c0_48, %c0_49] : memref<512x128xbf16, #tpu.memory_space<vmem>>, vector<512x128xbf16>
    tpu.vector_store %arg7[%c0_48, %c0_49], %66 {strides = array<i32>} : memref<512x128xbf16, #tpu.memory_space<vmem>>, vector<512x128xbf16>,
    return
  }
  func.func @transform_0(%arg0: i32) -> (i32, i32) {
    %c0_i32 = arith.constant 0 : i32
    %c0_i32_0 = arith.constant 0 : i32
    return %arg0, %c0_i32 : i32, i32
  }
  func.func @transform_1(%arg0: i32) -> (i32, i32) {
    %c0_i32 = arith.constant 0 : i32
    %c0_i32_0 = arith.constant 0 : i32
    %c0_i32_1 = arith.constant 0 : i32
    return %c0_i32, %c0_i32_0 : i32, i32
  }
  func.func @transform_2(%arg0: i32) -> (i32, i32, i32) {
    %c0_i32 = arith.constant 0 : i32
    %c0_i32_0 = arith.constant 0 : i32
    %c0_i32_1 = arith.constant 0 : i32
    %c0_i32_2 = arith.constant 0 : i32
    return %c0_i32, %c0_i32_0, %c0_i32_1 : i32, i32, i32
  }
  func.func @transform_3(%arg0: i32) -> (i32, i32) {
    %c0_i32 = arith.constant 0 : i32
    %c0_i32_0 = arith.constant 0 : i32
    %c0_i32_1 = arith.constant 0 : i32
    return %c0_i32, %c0_i32_0 : i32, i32
  }
  func.func @transform_4(%arg0: i32) -> (i32, i32) {
    %c0_i32 = arith.constant 0 : i32
    %c0_i32_0 = arith.constant 0 : i32
    %c0_i32_1 = arith.constant 0 : i32
    return %c0_i32, %c0_i32_0 : i32, i32
  }
  func.func @transform_5(%arg0: i32) -> (i32, i32, i32) {
    %c0_i32 = arith.constant 0 : i32
    %c0_i32_0 = arith.constant 0 : i32
    %c0_i32_1 = arith.constant 0 : i32
    %c0_i32_2 = arith.constant 0 : i32
    return %c0_i32, %c0_i32_0, %c0_i32_1 : i32, i32, i32
  }
  func.func @transform_6(%arg0: i32) -> (i32, i32) {
    %c0_i32 = arith.constant 0 : i32
    %c0_i32_0 = arith.constant 0 : i32
    return %arg0, %c0_i32 : i32, i32
  }
}

</mosaic_0001>

<llo_original>
// kernel: tpu_custom_call.1
$region0: #{tpu_custom_call.1}
  #allocation0 [shape = 'u32[]', space=smem, size = 0x4, offset = 0x4, fixed_abs, tag = 'smem constant byte address 0x4 - core index']
  #allocation1 [shape = 'u32[144,128]{1,0:T(1,128)}', space=vmem, size = 0x12000, scoped, tag = 'internal scratch']
  #allocation2 [shape = 'bf16[512,256]{1,0:T(16,128)(2,1)}', space=vmem, size = 0x40000, scoped, tag = 'scratch operand']
  %s0 = inlined_call_operand.hbm [shape: bf16[1024,256], index: 0, kind: input, shape index: {}]
  %s1 = inlined_call_operand.hbm [shape: bf16[128,256], index: 1, kind: input, shape index: {}]
  %s2 = inlined_call_operand.hbm [shape: bf16[3,128,128], index: 2, kind: input, shape index: {}]
  %s3 = inlined_call_operand.hbm [shape: bf16[256,128], index: 3, kind: input, shape index: {}]
  %s4 = inlined_call_operand.hbm [shape: bf16[128,128], index: 4, kind: input, shape index: {}]
  %s5 = inlined_call_operand.vmem [shape: f32[7,1,128], index: 5, kind: input, shape index: {}]
  %s6 = inlined_call_operand.hbm [shape: bf16[1024,128], index: 6, kind: output, shape index: {}]
  %s7 = sld [smem:[#allocation0]]
  $region77: #{tpu_custom_call.1} parent=0
    _
  %s9 = ssub.s32 1, %s7
  %s10 = scalar_select 0, %s9, %s7
  $region1: #{tpu_custom_call.1} parent=0
    #allocation3 [shape = 'u8[524288]{0}', space=vmem, size = 0x80000, scoped, tag = 'input window, operand 0']
    #allocation4 [shape = 's32[2]{0}', space=sflag, size = 0x8, scoped, tag = 'scoped memory for tpu_custom_call.1']
    #allocation5 [shape = 's32[2]{0}', space=sflag, size = 0x8, scoped, tag = 'scoped memory for tpu_custom_call.1']
    #allocation6 [shape = 'u8[65536]{0}', space=vmem, size = 0x10000, scoped, tag = 'input window, operand 1, single buffered']
    #allocation7 [shape = 's32[1]{0}', space=sflag, size = 0x4, scoped, tag = 'scoped memory for tpu_custom_call.1']
    #allocation8 [shape = 'u8[98304]{0}', space=vmem, size = 0x18000, scoped, tag = 'input window, operand 2, single buffered']
    #allocation9 [shape = 'u8[65536]{0}', space=vmem, size = 0x10000, scoped, tag = 'input window, operand 3, single buffered']
    #allocation10 [shape = 's32[1]{0}', space=sflag, size = 0x4, scoped, tag = 'scoped memory for tpu_custom_call.1']
    #allocation11 [shape = 'u8[32768]{0}', space=vmem, size = 0x8000, scoped, tag = 'input window, operand 4, single buffered']
    #allocation12 [shape = 'u8[262144]{0}', space=vmem, size = 0x40000, scoped, tag = 'output window, operand 0']
    %11 = vsyncpa [#allocation4], 0
    %s12 = scalar_lea.sflag [#allocation4], 1
    %13 = vsyncpa %s12, 0
    %14 = vsyncpa [#allocation7], 0
    %15 = vsyncpa [#allocation10], 0
    %16 = vsyncpa [#allocation5], 0
    %s17 = scalar_lea.sflag [#allocation5], 1
    %18 = vsyncpa %s17, 0
    loop: start=0, step=1, limit=4
    $region2: #{tpu_custom_call.1} parent=1 // loop_pre_header
      _
    $region3: #{tpu_custom_call.1} parent=1 // loop_header
      %s20 = sphi 0, %s24
      %p21 = scmp.ge.s32.totalorder %s20, 4
      %s30 = sphi 0, %s32
      %s33 = sphi 0, %s30
      %s34 = sphi 0, %s33
      %s50 = sphi 0, %s34
      %s54 = sphi 0, %s54
      %s56 = sphi 0, %s54
      %s57 = sphi 0, %s56
      %s71 = sphi 0, %s57
      %s75 = sphi 0, %s75
      %s77 = sphi 0, %s75
      %s78 = sphi 0, %s77
      %s92 = sphi 0, %s78
      %s96 = sphi 0, %s96
      %s98 = sphi 0, %s96
      %s99 = sphi 0, %s98
      %s113 = sphi 0, %s99
      %s117 = sphi 0, %s117
      %s119 = sphi 0, %s117
      %s120 = sphi 0, %s119
      %s134 = sphi 0, %s120
      %s138 = sphi 0, %s138
      %s140 = sphi 0, %s138
      %s141 = sphi 0, %s140
      %s155 = sphi 0, %s141
      %s161 = sphi 0, %s163
      %s164 = sphi 0, %s161
      %s165 = sphi 0, %s164
      %s181 = sphi 0, %s165
    $region4: #{tpu_custom_call.1} parent=1 // loop_header_branch
      %23 = sbr.rel (%p21) target = $region8
    $region5: #{tpu_custom_call.1} parent=1 // loop_body
      %s25 = ssub.s32 %s20, 1
      %s26 = ssub.s32 %s20, 2
      %s27 = sadd.s32 %s20, 1
      %s28 = ssub.s32 %s20, %s27
      %p29 = scmp.eq.s32.totalorder %s28, 0
      %s31 = sadd.s32 %s30, 1
      %s32 = scalar_select %p29, %s30, %s31
      %p35 = pneg %p29
      %p36 = scmp.eq.s32.totalorder %s20, 1
      %p37 = por %p35, %p36
      %p38 = scmp.ne.s32.totalorder %s30, %s33
      %p39 = scmp.eq.s32.totalorder %s20, 0
      %p40 = por %p38, %p39
      %p41 = scmp.ne.s32.totalorder %s30, %s33
      %p42 = scmp.eq.s32.totalorder %s25, 1
      %p43 = por %p41, %p42
      %p44 = scmp.ne.s32.totalorder %s33, %s34
      %p45 = scmp.eq.s32.totalorder %s25, 0
      %p46 = por %p44, %p45
      %p47 = scmp.ne.s32.totalorder %s33, %s34
      %p48 = scmp.eq.s32.totalorder %s26, 1
      %p49 = por %p47, %p48
      %p51 = scmp.ne.s32.totalorder %s34, %s50
      %p52 = scmp.eq.s32.totalorder %s26, 0
      %p53 = por %p51, %p52
      %s55 = sadd.s32 %s54, 1
      %p58 = scmp.eq.s32.totalorder %s20, 1
      %p59 = scmp.ne.s32.totalorder %s54, %s56
      %p60 = scmp.eq.s32.totalorder %s20, 0
      %p61 = por %p59, %p60
      %p62 = scmp.ne.s32.totalorder %s54, %s56
      %p63 = scmp.eq.s32.totalorder %s25, 1
      %p64 = por %p62, %p63
      %p65 = scmp.ne.s32.totalorder %s56, %s57
      %p66 = scmp.eq.s32.totalorder %s25, 0
      %p67 = por %p65, %p66
      %p68 = scmp.ne.s32.totalorder %s56, %s57
      %p69 = scmp.eq.s32.totalorder %s26, 1
      %p70 = por %p68, %p69
      %p72 = scmp.ne.s32.totalorder %s57, %s71
      %p73 = scmp.eq.s32.totalorder %s26, 0
      %p74 = por %p72, %p73
      %s76 = sadd.s32 %s75, 1
      %p79 = scmp.eq.s32.totalorder %s20, 1
      %p80 = scmp.ne.s32.totalorder %s75, %s77
      %p81 = scmp.eq.s32.totalorder %s20, 0
      %p82 = por %p80, %p81
      %p83 = scmp.ne.s32.totalorder %s75, %s77
      %p84 = scmp.eq.s32.totalorder %s25, 1
      %p85 = por %p83, %p84
      %p86 = scmp.ne.s32.totalorder %s77, %s78
      %p87 = scmp.eq.s32.totalorder %s25, 0
      %p88 = por %p86, %p87
      %p89 = scmp.ne.s32.totalorder %s77, %s78
      %p90 = scmp.eq.s32.totalorder %s26, 1
      %p91 = por %p89, %p90
      %p93 = scmp.ne.s32.totalorder %s78, %s92
      %p94 = scmp.eq.s32.totalorder %s26, 0
      %p95 = por %p93, %p94
      %s97 = sadd.s32 %s96, 1
      %p100 = scmp.eq.s32.totalorder %s20, 1
      %p101 = scmp.ne.s32.totalorder %s96, %s98
      %p102 = scmp.eq.s32.totalorder %s20, 0
      %p103 = por %p101, %p102
      %p104 = scmp.ne.s32.totalorder %s96, %s98
      %p105 = scmp.eq.s32.totalorder %s25, 1
      %p106 = por %p104, %p105
      %p107 = scmp.ne.s32.totalorder %s98, %s99
      %p108 = scmp.eq.s32.totalorder %s25, 0
      %p109 = por %p107, %p108
      %p110 = scmp.ne.s32.totalorder %s98, %s99
      %p111 = scmp.eq.s32.totalorder %s26, 1
      %p112 = por %p110, %p111
      %p114 = scmp.ne.s32.totalorder %s99, %s113
      %p115 = scmp.eq.s32.totalorder %s26, 0
      %p116 = por %p114, %p115
      %s118 = sadd.s32 %s117, 1
      %p121 = scmp.eq.s32.totalorder %s20, 1
      %p122 = scmp.ne.s32.totalorder %s117, %s119
      %p123 = scmp.eq.s32.totalorder %s20, 0
      %p124 = por %p122, %p123
      %p125 = scmp.ne.s32.totalorder %s117, %s119
      %p126 = scmp.eq.s32.totalorder %s25, 1
      %p127 = por %p125, %p126
      %p128 = scmp.ne.s32.totalorder %s119, %s120
      %p129 = scmp.eq.s32.totalorder %s25, 0
      %p130 = por %p128, %p129
      %p131 = scmp.ne.s32.totalorder %s119, %s120
      %p132 = scmp.eq.s32.totalorder %s26, 1
      %p133 = por %p131, %p132
      %p135 = scmp.ne.s32.totalorder %s120, %s134
      %p136 = scmp.eq.s32.totalorder %s26, 0
      %p137 = por %p135, %p136
      %s139 = sadd.s32 %s138, 1
      %p142 = scmp.eq.s32.totalorder %s20, 1
      %p143 = scmp.ne.s32.totalorder %s138, %s140
      %p144 = scmp.eq.s32.totalorder %s20, 0
      %p145 = por %p143, %p144
      %p146 = scmp.ne.s32.totalorder %s138, %s140
      %p147 = scmp.eq.s32.totalorder %s25, 1
      %p148 = por %p146, %p147
      %p149 = scmp.ne.s32.totalorder %s140, %s141
      %p150 = scmp.eq.s32.totalorder %s25, 0
      %p151 = por %p149, %p150
      %p152 = scmp.ne.s32.totalorder %s140, %s141
      %p153 = scmp.eq.s32.totalorder %s26, 1
      %p154 = por %p152, %p153
      %p156 = scmp.ne.s32.totalorder %s141, %s155
      %p157 = scmp.eq.s32.totalorder %s26, 0
      %p158 = por %p156, %p157
      %s159 = ssub.s32 %s20, %s27
      %p160 = scmp.eq.s32.totalorder %s159, 0
      %s162 = sadd.s32 %s161, 1
      %s163 = scalar_select %p160, %s161, %s162
      %p166 = pneg %p160
      %p167 = scmp.eq.s32.totalorder %s20, 1
      %p168 = por %p166, %p167
      %p169 = scmp.ne.s32.totalorder %s161, %s164
      %p170 = scmp.eq.s32.totalorder %s20, 0
      %p171 = por %p169, %p170
      %p172 = scmp.ne.s32.totalorder %s161, %s164
      %p173 = scmp.eq.s32.totalorder %s25, 1
      %p174 = por %p172, %p173
      %p175 = scmp.ne.s32.totalorder %s164, %s165
      %p176 = scmp.eq.s32.totalorder %s25, 0
      %p177 = por %p175, %p176
      %p178 = scmp.ne.s32.totalorder %s164, %s165
      %p179 = scmp.eq.s32.totalorder %s26, 1
      %p180 = por %p178, %p179
      %p182 = scmp.ne.s32.totalorder %s165, %s181
      %p183 = scmp.eq.s32.totalorder %s26, 0
      %p184 = por %p182, %p183
      %p185 = scmp.le.s32.totalorder 1, %s20
      %p186 = scmp.lt.s32.totalorder %s20, 3
      %p187 = pnand %p185, %p186
      %p188 = pneg %p187
      // Predicated region
      $region9: #{tpu_custom_call.1} parent=5 // pred_check
        _
      $region10: #{tpu_custom_call.1} parent=5 // pred_check_branch
        %190 = sbr.rel (%p187) target = $region12
      $region11: #{tpu_custom_call.1} parent=5 // pred_region
        %s191 = ssub.s32 %s20, 1
        // Predicated region
        $region13: #{tpu_custom_call.1} parent=11 // pred_check
          %p192 = pneg %p67
        $region14: #{tpu_custom_call.1} parent=11 // pred_check_branch
          %194 = sbr.rel (%p192) target = $region16
        $region15: #{tpu_custom_call.1} parent=11 // pred_region
          %s196 = ssub.s32 2048, 2048
          %197 = vsyncadd [#allocation7], %s196
          %s198 = sshll.u32 [#allocation6], 4
          %s199 = int_to_ptr.vmem [resolvable:$true] %s198
          %204 = dma.hbm_to_vmem [thread:$0]  %s1, 2048, %s199, [#allocation7], 128, 128, 8
        $region16: #{tpu_custom_call.1} parent=11 // pred_fallthru
          _
        // Predicated region
        $region17: #{tpu_custom_call.1} parent=11 // pred_check
          %p205 = pneg %p88
        $region18: #{tpu_custom_call.1} parent=11 // pred_check_branch
          %207 = sbr.rel (%p205) target = $region20
        $region19: #{tpu_custom_call.1} parent=11 // pred_region
          %s209 = ssub.s32 3072, 3072
          %210 = vsyncadd [#allocation7], %s209
          %s211 = sshll.u32 [#allocation8], 4
          %s212 = int_to_ptr.vmem [resolvable:$true] %s211
          %217 = dma.hbm_to_vmem [thread:$0]  %s2, 3072, %s212, [#allocation7], 64, 64, 4
        $region20: #{tpu_custom_call.1} parent=11 // pred_fallthru
          _
        // Predicated region
        $region21: #{tpu_custom_call.1} parent=11 // pred_check
          %p218 = pneg %p109
        $region22: #{tpu_custom_call.1} parent=11 // pred_check_branch
          %220 = sbr.rel (%p218) target = $region24
        $region23: #{tpu_custom_call.1} parent=11 // pred_region
          %s222 = ssub.s32 2048, 2048
          %223 = vsyncadd [#allocation10], %s222
          %s224 = sshll.u32 [#allocation9], 4
          %s225 = int_to_ptr.vmem [resolvable:$true] %s224
          %230 = dma.hbm_to_vmem [thread:$0]  %s3, 2048, %s225, [#allocation10], 64, 64, 4
        $region24: #{tpu_custom_call.1} parent=11 // pred_fallthru
          _
        // Predicated region
        $region25: #{tpu_custom_call.1} parent=11 // pred_check
          %p231 = pneg %p130
        $region26: #{tpu_custom_call.1} parent=11 // pred_check_branch
          %233 = sbr.rel (%p231) target = $region28
        $region27: #{tpu_custom_call.1} parent=11 // pred_region
          %s235 = ssub.s32 1024, 1024
          %236 = vsyncadd [#allocation10], %s235
          %s237 = sshll.u32 [#allocation11], 4
          %s238 = int_to_ptr.vmem [resolvable:$true] %s237
          %243 = dma.hbm_to_vmem [thread:$0]  %s4, 1024, %s238, [#allocation10], 64, 64, 4
        $region28: #{tpu_custom_call.1} parent=11 // pred_fallthru
          _
        // Predicated region
        $region29: #{tpu_custom_call.1} parent=11 // pred_check
          %p244 = pneg %p151
        $region30: #{tpu_custom_call.1} parent=11 // pred_check_branch
          %246 = sbr.rel (%p244) target = $region32
        $region31: #{tpu_custom_call.1} parent=11 // pred_region
          _
        $region32: #{tpu_custom_call.1} parent=11 // pred_fallthru
          _
      $region12: #{tpu_custom_call.1} parent=5 // pred_fallthru
        _
      %p247 = scmp.lt.s32.totalorder %s20, 2
      // Predicated region
      $region33: #{tpu_custom_call.1} parent=5 // pred_check
        %p248 = pneg %p247
      $region34: #{tpu_custom_call.1} parent=5 // pred_check_branch
        %250 = sbr.rel (%p248) target = $region36
      $region35: #{tpu_custom_call.1} parent=5 // pred_region
        // Predicated region
        $region37: #{tpu_custom_call.1} parent=35 // pred_check
          %p251 = pneg %p40
        $region38: #{tpu_custom_call.1} parent=35 // pred_check_branch
          %253 = sbr.rel (%p251) target = $region40
        $region39: #{tpu_custom_call.1} parent=35 // pred_region
          %s254 = sand.u32 %s30, 1
          %s255 = scalar_lea.sflag [#allocation4], %s254
          %s256 = sand.u32 %s30, 1
          %s257 = smul.addr %s256, 512
          %s258 = scalar_lea.vmem [#allocation3], %s257
          %s259 = smul.u32 64, %s20
          %s261 = ssub.s32 8192, 8192
          %262 = vsyncadd %s255, %s261
          %s263 = smul.addr %s259, 2
          %s264 = smul.addr %s263, 64
          %s265 = scalar_lea.hbm %s0, %s264
          %s266 = sshll.u32 %s258, 4
          %s267 = int_to_ptr.vmem [resolvable:$true] %s266
          %272 = dma.hbm_to_vmem [thread:$0]  %s265, 8192, %s267, %s255, 128, 128, 8
        $region40: #{tpu_custom_call.1} parent=35 // pred_fallthru
          _
      $region36: #{tpu_custom_call.1} parent=5 // pred_fallthru
        _
      %p273 = scmp.le.s32.totalorder 1, %s20
      %p274 = scmp.lt.s32.totalorder %s20, 3
      %p275 = pnand %p273, %p274
      %p276 = pneg %p275
      // Predicated region
      $region41: #{tpu_custom_call.1} parent=5 // pred_check
        _
      $region42: #{tpu_custom_call.1} parent=5 // pred_check_branch
        %278 = sbr.rel (%p275) target = $region44
      $region43: #{tpu_custom_call.1} parent=5 // pred_region
        %s279 = ssub.s32 %s20, 1
        %s280 = sand.u32 %s33, 1
        %s281 = scalar_lea.sflag [#allocation4], %s280
        %s282 = sand.u32 %s33, 1
        %s283 = smul.addr %s282, 512
        %s284 = scalar_lea.vmem [#allocation3], %s283
        // Predicated region
        $region45: #{tpu_custom_call.1} parent=43 // pred_check
          %p285 = pneg %p46
        $region46: #{tpu_custom_call.1} parent=43 // pred_check_branch
          %287 = sbr.rel (%p285) target = $region48
        $region47: #{tpu_custom_call.1} parent=43 // pred_region
          %288 = dma.done %s281, 8192
        $region48: #{tpu_custom_call.1} parent=43 // pred_fallthru
          _
        // Predicated region
        $region49: #{tpu_custom_call.1} parent=43 // pred_check
          %p289 = pneg %p67
        $region50: #{tpu_custom_call.1} parent=43 // pred_check_branch
          %291 = sbr.rel (%p289) target = $region52
        $region51: #{tpu_custom_call.1} parent=43 // pred_region
          %292 = dma.done [#allocation7], 2048
        $region52: #{tpu_custom_call.1} parent=43 // pred_fallthru
          _
        // Predicated region
        $region53: #{tpu_custom_call.1} parent=43 // pred_check
          %p293 = pneg %p88
        $region54: #{tpu_custom_call.1} parent=43 // pred_check_branch
          %295 = sbr.rel (%p293) target = $region56
        $region55: #{tpu_custom_call.1} parent=43 // pred_region
          %296 = dma.done [#allocation7], 3072
        $region56: #{tpu_custom_call.1} parent=43 // pred_fallthru
          _
        // Predicated region
        $region57: #{tpu_custom_call.1} parent=43 // pred_check
          %p297 = pneg %p109
        $region58: #{tpu_custom_call.1} parent=43 // pred_check_branch
          %299 = sbr.rel (%p297) target = $region60
        $region59: #{tpu_custom_call.1} parent=43 // pred_region
          %300 = dma.done [#allocation10], 2048
        $region60: #{tpu_custom_call.1} parent=43 // pred_fallthru
          _
        // Predicated region
        $region61: #{tpu_custom_call.1} parent=43 // pred_check
          %p301 = pneg %p130
        $region62: #{tpu_custom_call.1} parent=43 // pred_check_branch
          %303 = sbr.rel (%p301) target = $region64
        $region63: #{tpu_custom_call.1} parent=43 // pred_region
          %304 = dma.done [#allocation10], 1024
        $region64: #{tpu_custom_call.1} parent=43 // pred_fallthru
          _
        %s305 = sand.u32 %s33, 1
        %s306 = scalar_lea.sflag [#allocation4], %s305
        %s307 = sand.u32 %s33, 1
        %s308 = smul.addr %s307, 512
        %s309 = scalar_lea.vmem [#allocation3], %s308
        %p310 = pneg %p46
        %p311 = pneg %p43
        %p312 = pneg %p67
        %p313 = pneg %p64
        %p314 = pneg %p88
        %p315 = pneg %p85
        %p316 = pneg %p109
        %p317 = pneg %p106
        %p318 = pneg %p130
        %p319 = pneg %p127
        %p320 = pneg %p151
        %p321 = pneg %p148
        %p322 = pneg %p177
        %p323 = pneg %p174
        %s324 = sand.u32 %s164, 1
        %s325 = scalar_lea.sflag [#allocation5], %s324
        %s326 = sand.u32 %s164, 1
        %s327 = smul.addr %s326, 256
        %s328 = scalar_lea.vmem [#allocation12], %s327
        %s329 = smul.u32 64, %s25
        %s330 = smul.u32 64, %s25
        %v332 = vld [vmem:[%s284] sm:$0xf]
        %v333 = vld [vmem:[%s284 + $0x8] sm:$0xf]
        %v334 = vld [vmem:[%s284 + $0x10] sm:$0xf]
        %v335 = vld [vmem:[%s284 + $0x18] sm:$0xf]
        %v336 = vld [vmem:[%s284 + $0x20] sm:$0xf]
        %v337 = vld [vmem:[%s284 + $0x28] sm:$0xf]
        %v338 = vld [vmem:[%s284 + $0x30] sm:$0xf]
        %v339 = vld [vmem:[%s284 + $0x38] sm:$0xf]
        %v340 = vld [vmem:[%s284 + $0x40] sm:$0xf]
        %v341 = vld [vmem:[%s284 + $0x48] sm:$0xf]
        %v342 = vld [vmem:[%s284 + $0x50] sm:$0xf]
        %v343 = vld [vmem:[%s284 + $0x58] sm:$0xf]
        %v344 = vld [vmem:[%s284 + $0x60] sm:$0xf]
        %v345 = vld [vmem:[%s284 + $0x68] sm:$0xf]
        %v346 = vld [vmem:[%s284 + $0x70] sm:$0xf]
        %v347 = vld [vmem:[%s284 + $0x78] sm:$0xf]
        %v348 = vld [vmem:[%s284 + $0x80] sm:$0xf]
        %v349 = vld [vmem:[%s284 + $0x88] sm:$0xf]
        %v350 = vld [vmem:[%s284 + $0x90] sm:$0xf]
        %v351 = vld [vmem:[%s284 + $0x98] sm:$0xf]
        %v352 = vld [vmem:[%s284 + $0xa0] sm:$0xf]
        %v353 = vld [vmem:[%s284 + $0xa8] sm:$0xf]
        %v354 = vld [vmem:[%s284 + $0xb0] sm:$0xf]
        %v355 = vld [vmem:[%s284 + $0xb8] sm:$0xf]
        %v356 = vld [vmem:[%s284 + $0xc0] sm:$0xf]
        %v357 = vld [vmem:[%s284 + $0xc8] sm:$0xf]
        %v358 = vld [vmem:[%s284 + $0xd0] sm:$0xf]
        %v359 = vld [vmem:[%s284 + $0xd8] sm:$0xf]
        %v360 = vld [vmem:[%s284 + $0xe0] sm:$0xf]
        %v361 = vld [vmem:[%s284 + $0xe8] sm:$0xf]
        %v362 = vld [vmem:[%s284 + $0xf0] sm:$0xf]
        %v363 = vld [vmem:[%s284 + $0xf8] sm:$0xf]
        %v364 = vld [vmem:[%s284 + $0x100] sm:$0xf]
        %v365 = vld [vmem:[%s284 + $0x108] sm:$0xf]
        %v366 = vld [vmem:[%s284 + $0x110] sm:$0xf]
        %v367 = vld [vmem:[%s284 + $0x118] sm:$0xf]
        %v368 = vld [vmem:[%s284 + $0x120] sm:$0xf]
        %v369 = vld [vmem:[%s284 + $0x128] sm:$0xf]
        %v370 = vld [vmem:[%s284 + $0x130] sm:$0xf]
        %v371 = vld [vmem:[%s284 + $0x138] sm:$0xf]
        %v372 = vld [vmem:[%s284 + $0x140] sm:$0xf]
        %v373 = vld [vmem:[%s284 + $0x148] sm:$0xf]
        %v374 = vld [vmem:[%s284 + $0x150] sm:$0xf]
        %v375 = vld [vmem:[%s284 + $0x158] sm:$0xf]
        %v376 = vld [vmem:[%s284 + $0x160] sm:$0xf]
        %v377 = vld [vmem:[%s284 + $0x168] sm:$0xf]
        %v378 = vld [vmem:[%s284 + $0x170] sm:$0xf]
        %v379 = vld [vmem:[%s284 + $0x178] sm:$0xf]
        %v380 = vld [vmem:[%s284 + $0x180] sm:$0xf]
        %v381 = vld [vmem:[%s284 + $0x188] sm:$0xf]
        %v382 = vld [vmem:[%s284 + $0x190] sm:$0xf]
        %v383 = vld [vmem:[%s284 + $0x198] sm:$0xf]
        %v384 = vld [vmem:[%s284 + $0x1a0] sm:$0xf]
        %v385 = vld [vmem:[%s284 + $0x1a8] sm:$0xf]
        %v386 = vld [vmem:[%s284 + $0x1b0] sm:$0xf]
        %v387 = vld [vmem:[%s284 + $0x1b8] sm:$0xf]
        %v388 = vld [vmem:[%s284 + $0x1c0] sm:$0xf]
        %v389 = vld [vmem:[%s284 + $0x1c8] sm:$0xf]
        %v390 = vld [vmem:[%s284 + $0x1d0] sm:$0xf]
        %v391 = vld [vmem:[%s284 + $0x1d8] sm:$0xf]
        %v392 = vld [vmem:[%s284 + $0x1e0] sm:$0xf]
        %v393 = vld [vmem:[%s284 + $0x1e8] sm:$0xf]
        %v394 = vld [vmem:[%s284 + $0x1f0] sm:$0xf]
        %v395 = vld [vmem:[%s284 + $0x1f8] sm:$0xf]
        %v396 = vld [vmem:[%s284 + $0x4] sm:$0xf]
        %v397 = vld [vmem:[%s284 + $0xc] sm:$0xf]
        %v398 = vld [vmem:[%s284 + $0x14] sm:$0xf]
        %v399 = vld [vmem:[%s284 + $0x1c] sm:$0xf]
        %v400 = vld [vmem:[%s284 + $0x24] sm:$0xf]
        %v401 = vld [vmem:[%s284 + $0x2c] sm:$0xf]
        %v402 = vld [vmem:[%s284 + $0x34] sm:$0xf]
        %v403 = vld [vmem:[%s284 + $0x3c] sm:$0xf]
        %v404 = vld [vmem:[%s284 + $0x44] sm:$0xf]
        %v405 = vld [vmem:[%s284 + $0x4c] sm:$0xf]
        %v406 = vld [vmem:[%s284 + $0x54] sm:$0xf]
        %v407 = vld [vmem:[%s284 + $0x5c] sm:$0xf]
        %v408 = vld [vmem:[%s284 + $0x64] sm:$0xf]
        %v409 = vld [vmem:[%s284 + $0x6c] sm:$0xf]
        %v410 = vld [vmem:[%s284 + $0x74] sm:$0xf]
        %v411 = vld [vmem:[%s284 + $0x7c] sm:$0xf]
        %v412 = vld [vmem:[%s284 + $0x84] sm:$0xf]
        %v413 = vld [vmem:[%s284 + $0x8c] sm:$0xf]
        %v414 = vld [vmem:[%s284 + $0x94] sm:$0xf]
        %v415 = vld [vmem:[%s284 + $0x9c] sm:$0xf]
        %v416 = vld [vmem:[%s284 + $0xa4] sm:$0xf]
        %v417 = vld [vmem:[%s284 + $0xac] sm:$0xf]
        %v418 = vld [vmem:[%s284 + $0xb4] sm:$0xf]
        %v419 = vld [vmem:[%s284 + $0xbc] sm:$0xf]
        %v420 = vld [vmem:[%s284 + $0xc4] sm:$0xf]
        %v421 = vld [vmem:[%s284 + $0xcc] sm:$0xf]
        %v422 = vld [vmem:[%s284 + $0xd4] sm:$0xf]
        %v423 = vld [vmem:[%s284 + $0xdc] sm:$0xf]
        %v424 = vld [vmem:[%s284 + $0xe4] sm:$0xf]
        %v425 = vld [vmem:[%s284 + $0xec] sm:$0xf]
        %v426 = vld [vmem:[%s284 + $0xf4] sm:$0xf]
        %v427 = vld [vmem:[%s284 + $0xfc] sm:$0xf]
        %v428 = vld [vmem:[%s284 + $0x104] sm:$0xf]
        %v429 = vld [vmem:[%s284 + $0x10c] sm:$0xf]
        %v430 = vld [vmem:[%s284 + $0x114] sm:$0xf]
        %v431 = vld [vmem:[%s284 + $0x11c] sm:$0xf]
        %v432 = vld [vmem:[%s284 + $0x124] sm:$0xf]
        %v433 = vld [vmem:[%s284 + $0x12c] sm:$0xf]
        %v434 = vld [vmem:[%s284 + $0x134] sm:$0xf]
        %v435 = vld [vmem:[%s284 + $0x13c] sm:$0xf]
        %v436 = vld [vmem:[%s284 + $0x144] sm:$0xf]
        %v437 = vld [vmem:[%s284 + $0x14c] sm:$0xf]
        %v438 = vld [vmem:[%s284 + $0x154] sm:$0xf]
        %v439 = vld [vmem:[%s284 + $0x15c] sm:$0xf]
        %v440 = vld [vmem:[%s284 + $0x164] sm:$0xf]
        %v441 = vld [vmem:[%s284 + $0x16c] sm:$0xf]
        %v442 = vld [vmem:[%s284 + $0x174] sm:$0xf]
        %v443 = vld [vmem:[%s284 + $0x17c] sm:$0xf]
        %v444 = vld [vmem:[%s284 + $0x184] sm:$0xf]
        %v445 = vld [vmem:[%s284 + $0x18c] sm:$0xf]
        %v446 = vld [vmem:[%s284 + $0x194] sm:$0xf]
        %v447 = vld [vmem:[%s284 + $0x19c] sm:$0xf]
        %v448 = vld [vmem:[%s284 + $0x1a4] sm:$0xf]
        %v449 = vld [vmem:[%s284 + $0x1ac] sm:$0xf]
        %v450 = vld [vmem:[%s284 + $0x1b4] sm:$0xf]
        %v451 = vld [vmem:[%s284 + $0x1bc] sm:$0xf]
        %v452 = vld [vmem:[%s284 + $0x1c4] sm:$0xf]
        %v453 = vld [vmem:[%s284 + $0x1cc] sm:$0xf]
        %v454 = vld [vmem:[%s284 + $0x1d4] sm:$0xf]
        %v455 = vld [vmem:[%s284 + $0x1dc] sm:$0xf]
        %v456 = vld [vmem:[%s284 + $0x1e4] sm:$0xf]
        %v457 = vld [vmem:[%s284 + $0x1ec] sm:$0xf]
        %v458 = vld [vmem:[%s284 + $0x1f4] sm:$0xf]
        %v459 = vld [vmem:[%s284 + $0x1fc] sm:$0xf]
        %v524 = vunpack.c.l.b16 %v396
        %v525 = vunpack.c.l.b16 %v397
        %v526 = vunpack.c.l.b16 %v398
        %v527 = vunpack.c.l.b16 %v399
        %v528 = vunpack.c.l.b16 %v400
        %v529 = vunpack.c.l.b16 %v401
        %v530 = vunpack.c.l.b16 %v402
        %v531 = vunpack.c.l.b16 %v403
        %v532 = vunpack.c.l.b16 %v404
        %v533 = vunpack.c.l.b16 %v405
        %v534 = vunpack.c.l.b16 %v406
        %v535 = vunpack.c.l.b16 %v407
        %v536 = vunpack.c.l.b16 %v408
        %v537 = vunpack.c.l.b16 %v409
        %v538 = vunpack.c.l.b16 %v410
        %v539 = vunpack.c.l.b16 %v411
        %v540 = vunpack.c.l.b16 %v412
        %v541 = vunpack.c.l.b16 %v413
        %v542 = vunpack.c.l.b16 %v414
        %v543 = vunpack.c.l.b16 %v415
        %v544 = vunpack.c.l.b16 %v416
        %v545 = vunpack.c.l.b16 %v417
        %v546 = vunpack.c.l.b16 %v418
        %v547 = vunpack.c.l.b16 %v419
        %v548 = vunpack.c.l.b16 %v420
        %v549 = vunpack.c.l.b16 %v421
        %v550 = vunpack.c.l.b16 %v422
        %v551 = vunpack.c.l.b16 %v423
        %v552 = vunpack.c.l.b16 %v424
        %v553 = vunpack.c.l.b16 %v425
        %v554 = vunpack.c.l.b16 %v426
        %v555 = vunpack.c.l.b16 %v427
        %v556 = vunpack.c.l.b16 %v428
        %v557 = vunpack.c.l.b16 %v429
        %v558 = vunpack.c.l.b16 %v430
        %v559 = vunpack.c.l.b16 %v431
        %v560 = vunpack.c.l.b16 %v432
        %v561 = vunpack.c.l.b16 %v433
        %v562 = vunpack.c.l.b16 %v434
        %v563 = vunpack.c.l.b16 %v435
        %v564 = vunpack.c.l.b16 %v436
        %v565 = vunpack.c.l.b16 %v437
        %v566 = vunpack.c.l.b16 %v438
        %v567 = vunpack.c.l.b16 %v439
        %v568 = vunpack.c.l.b16 %v440
        %v569 = vunpack.c.l.b16 %v441
        %v570 = vunpack.c.l.b16 %v442
        %v571 = vunpack.c.l.b16 %v443
        %v572 = vunpack.c.l.b16 %v444
        %v573 = vunpack.c.l.b16 %v445
        %v574 = vunpack.c.l.b16 %v446
        %v575 = vunpack.c.l.b16 %v447
        %v576 = vunpack.c.l.b16 %v448
        %v577 = vunpack.c.l.b16 %v449
        %v578 = vunpack.c.l.b16 %v450
        %v579 = vunpack.c.l.b16 %v451
        %v580 = vunpack.c.l.b16 %v452
        %v581 = vunpack.c.l.b16 %v453
        %v582 = vunpack.c.l.b16 %v454
        %v583 = vunpack.c.l.b16 %v455
        %v584 = vunpack.c.l.b16 %v456
        %v585 = vunpack.c.l.b16 %v457
        %v586 = vunpack.c.l.b16 %v458
        %v587 = vunpack.c.l.b16 %v459
        %v588 = vpack.c.b16 %v525, %v524
        %v589 = vpack.c.b16 %v527, %v526
        %v590 = vpack.c.b16 %v529, %v528
        %v591 = vpack.c.b16 %v531, %v530
        %v592 = vpack.c.b16 %v533, %v532
        %v593 = vpack.c.b16 %v535, %v534
        %v594 = vpack.c.b16 %v537, %v536
        %v595 = vpack.c.b16 %v539, %v538
        %v596 = vpack.c.b16 %v541, %v540
        %v597 = vpack.c.b16 %v543, %v542
        %v598 = vpack.c.b16 %v545, %v544
        %v599 = vpack.c.b16 %v547, %v546
        %v600 = vpack.c.b16 %v549, %v548
        %v601 = vpack.c.b16 %v551, %v550
        %v602 = vpack.c.b16 %v553, %v552
        %v603 = vpack.c.b16 %v555, %v554
        %v604 = vpack.c.b16 %v557, %v556
        %v605 = vpack.c.b16 %v559, %v558
        %v606 = vpack.c.b16 %v561, %v560
        %v607 = vpack.c.b16 %v563, %v562
        %v608 = vpack.c.b16 %v565, %v564
        %v609 = vpack.c.b16 %v567, %v566
        %v610 = vpack.c.b16 %v569, %v568
        %v611 = vpack.c.b16 %v571, %v570
        %v612 = vpack.c.b16 %v573, %v572
        %v613 = vpack.c.b16 %v575, %v574
        %v614 = vpack.c.b16 %v577, %v576
        %v615 = vpack.c.b16 %v579, %v578
        %v616 = vpack.c.b16 %v581, %v580
        %v617 = vpack.c.b16 %v583, %v582
        %v618 = vpack.c.b16 %v585, %v584
        %v619 = vpack.c.b16 %v587, %v586
        %652 = vst [vmem:[#allocation2 + $0x8] sm:$0xff] %v588
        %653 = vst [vmem:[#allocation2 + $0x18] sm:$0xff] %v589
        %654 = vst [vmem:[#allocation2 + $0x28] sm:$0xff] %v590
        %655 = vst [vmem:[#allocation2 + $0x38] sm:$0xff] %v591
        %656 = vst [vmem:[#allocation2 + $0x48] sm:$0xff] %v592
        %657 = vst [vmem:[#allocation2 + $0x58] sm:$0xff] %v593
        %658 = vst [vmem:[#allocation2 + $0x68] sm:$0xff] %v594
        %659 = vst [vmem:[#allocation2 + $0x78] sm:$0xff] %v595
        %660 = vst [vmem:[#allocation2 + $0x88] sm:$0xff] %v596
        %661 = vst [vmem:[#allocation2 + $0x98] sm:$0xff] %v597
        %662 = vst [vmem:[#allocation2 + $0xa8] sm:$0xff] %v598
        %663 = vst [vmem:[#allocation2 + $0xb8] sm:$0xff] %v599
        %664 = vst [vmem:[#allocation2 + $0xc8] sm:$0xff] %v600
        %665 = vst [vmem:[#allocation2 + $0xd8] sm:$0xff] %v601
        %666 = vst [vmem:[#allocation2 + $0xe8] sm:$0xff] %v602
        %667 = vst [vmem:[#allocation2 + $0xf8] sm:$0xff] %v603
        %668 = vst [vmem:[#allocation2 + $0x108] sm:$0xff] %v604
        %669 = vst [vmem:[#allocation2 + $0x118] sm:$0xff] %v605
        %670 = vst [vmem:[#allocation2 + $0x128] sm:$0xff] %v606
        %671 = vst [vmem:[#allocation2 + $0x138] sm:$0xff] %v607
        %672 = vst [vmem:[#allocation2 + $0x148] sm:$0xff] %v608
        %673 = vst [vmem:[#allocation2 + $0x158] sm:$0xff] %v609
        %674 = vst [vmem:[#allocation2 + $0x168] sm:$0xff] %v610
        %675 = vst [vmem:[#allocation2 + $0x178] sm:$0xff] %v611
        %676 = vst [vmem:[#allocation2 + $0x188] sm:$0xff] %v612
        %677 = vst [vmem:[#allocation2 + $0x198] sm:$0xff] %v613
        %678 = vst [vmem:[#allocation2 + $0x1a8] sm:$0xff] %v614
        %679 = vst [vmem:[#allocation2 + $0x1b8] sm:$0xff] %v615
        %680 = vst [vmem:[#allocation2 + $0x1c8] sm:$0xff] %v616
        %681 = vst [vmem:[#allocation2 + $0x1d8] sm:$0xff] %v617
        %682 = vst [vmem:[#allocation2 + $0x1e8] sm:$0xff] %v618
        %683 = vst [vmem:[#allocation2 + $0x1f8] sm:$0xff] %v619
        %v684 = vld [vmem:[#allocation6] sm:$0xff]
        %v685 = vld [vmem:[#allocation6 + $0x8] sm:$0xff]
        %v686 = vld [vmem:[#allocation6 + $0x10] sm:$0xff]
        %v687 = vld [vmem:[#allocation6 + $0x18] sm:$0xff]
        %v688 = vld [vmem:[#allocation6 + $0x20] sm:$0xff]
        %v689 = vld [vmem:[#allocation6 + $0x28] sm:$0xff]
        %v690 = vld [vmem:[#allocation6 + $0x30] sm:$0xff]
        %v691 = vld [vmem:[#allocation6 + $0x38] sm:$0xff]
        %v692 = vld [vmem:[#allocation6 + $0x40] sm:$0xff]
        %v693 = vld [vmem:[#allocation6 + $0x48] sm:$0xff]
        %v694 = vld [vmem:[#allocation6 + $0x50] sm:$0xff]
        %v695 = vld [vmem:[#allocation6 + $0x58] sm:$0xff]
        %v696 = vld [vmem:[#allocation6 + $0x60] sm:$0xff]
        %v697 = vld [vmem:[#allocation6 + $0x68] sm:$0xff]
        %v698 = vld [vmem:[#allocation6 + $0x70] sm:$0xff]
        %v699 = vld [vmem:[#allocation6 + $0x78] sm:$0xff]
        %v764 = vunpack.c.l.b16 %v332
        %v765 = vunpack.c.l.b16 %v333
        %v766 = vunpack.c.l.b16 %v334
        %v767 = vunpack.c.l.b16 %v335
        %v768 = vunpack.c.l.b16 %v336
        %v769 = vunpack.c.l.b16 %v337
        %v770 = vunpack.c.l.b16 %v338
        %v771 = vunpack.c.l.b16 %v339
        %v772 = vunpack.c.l.b16 %v340
        %v773 = vunpack.c.l.b16 %v341
        %v774 = vunpack.c.l.b16 %v342
        %v775 = vunpack.c.l.b16 %v343
        %v776 = vunpack.c.l.b16 %v344
        %v777 = vunpack.c.l.b16 %v345
        %v778 = vunpack.c.l.b16 %v346
        %v779 = vunpack.c.l.b16 %v347
        %v780 = vunpack.c.l.b16 %v348
        %v781 = vunpack.c.l.b16 %v349
        %v782 = vunpack.c.l.b16 %v350
        %v783 = vunpack.c.l.b16 %v351
        %v784 = vunpack.c.l.b16 %v352
        %v785 = vunpack.c.l.b16 %v353
        %v786 = vunpack.c.l.b16 %v354
        %v787 = vunpack.c.l.b16 %v355
        %v788 = vunpack.c.l.b16 %v356
        %v789 = vunpack.c.l.b16 %v357
        %v790 = vunpack.c.l.b16 %v358
        %v791 = vunpack.c.l.b16 %v359
        %v792 = vunpack.c.l.b16 %v360
        %v793 = vunpack.c.l.b16 %v361
        %v794 = vunpack.c.l.b16 %v362
        %v795 = vunpack.c.l.b16 %v363
        %v796 = vunpack.c.l.b16 %v364
        %v797 = vunpack.c.l.b16 %v365
        %v798 = vunpack.c.l.b16 %v366
        %v799 = vunpack.c.l.b16 %v367
        %v800 = vunpack.c.l.b16 %v368
        %v801 = vunpack.c.l.b16 %v369
        %v802 = vunpack.c.l.b16 %v370
        %v803 = vunpack.c.l.b16 %v371
        %v804 = vunpack.c.l.b16 %v372
        %v805 = vunpack.c.l.b16 %v373
        %v806 = vunpack.c.l.b16 %v374
        %v807 = vunpack.c.l.b16 %v375
        %v808 = vunpack.c.l.b16 %v376
        %v809 = vunpack.c.l.b16 %v377
        %v810 = vunpack.c.l.b16 %v378
        %v811 = vunpack.c.l.b16 %v379
        %v812 = vunpack.c.l.b16 %v380
        %v813 = vunpack.c.l.b16 %v381
        %v814 = vunpack.c.l.b16 %v382
        %v815 = vunpack.c.l.b16 %v383
        %v816 = vunpack.c.l.b16 %v384
        %v817 = vunpack.c.l.b16 %v385
        %v818 = vunpack.c.l.b16 %v386
        %v819 = vunpack.c.l.b16 %v387
        %v820 = vunpack.c.l.b16 %v388
        %v821 = vunpack.c.l.b16 %v389
        %v822 = vunpack.c.l.b16 %v390
        %v823 = vunpack.c.l.b16 %v391
        %v824 = vunpack.c.l.b16 %v392
        %v825 = vunpack.c.l.b16 %v393
        %v826 = vunpack.c.l.b16 %v394
        %v827 = vunpack.c.l.b16 %v395
        %v828 = vpack.c.b16 %v765, %v764
        %v829 = vpack.c.b16 %v767, %v766
        %v830 = vpack.c.b16 %v769, %v768
        %v831 = vpack.c.b16 %v771, %v770
        %v832 = vpack.c.b16 %v773, %v772
        %v833 = vpack.c.b16 %v775, %v774
        %v834 = vpack.c.b16 %v777, %v776
        %v835 = vpack.c.b16 %v779, %v778
        %v836 = vpack.c.b16 %v781, %v780
        %v837 = vpack.c.b16 %v783, %v782
        %v838 = vpack.c.b16 %v785, %v784
        %v839 = vpack.c.b16 %v787, %v786
        %v840 = vpack.c.b16 %v789, %v788
        %v841 = vpack.c.b16 %v791, %v790
        %v842 = vpack.c.b16 %v793, %v792
        %v843 = vpack.c.b16 %v795, %v794
        %v844 = vpack.c.b16 %v797, %v796
        %v845 = vpack.c.b16 %v799, %v798
        %v846 = vpack.c.b16 %v801, %v800
        %v847 = vpack.c.b16 %v803, %v802
        %v848 = vpack.c.b16 %v805, %v804
        %v849 = vpack.c.b16 %v807, %v806
        %v850 = vpack.c.b16 %v809, %v808
        %v851 = vpack.c.b16 %v811, %v810
        %v852 = vpack.c.b16 %v813, %v812
        %v853 = vpack.c.b16 %v815, %v814
        %v854 = vpack.c.b16 %v817, %v816
        %v855 = vpack.c.b16 %v819, %v818
        %v856 = vpack.c.b16 %v821, %v820
        %v857 = vpack.c.b16 %v823, %v822
        %v858 = vpack.c.b16 %v825, %v824
        %v859 = vpack.c.b16 %v827, %v826
        %v908 = vunpack.c.l.b16 %v684
        %v909 = vunpack.c.h.b16 %v684
        %v910 = vunpack.c.l.b16 %v685
        %v911 = vunpack.c.h.b16 %v685
        %v912 = vunpack.c.l.b16 %v686
        %v913 = vunpack.c.h.b16 %v686
        %v914 = vunpack.c.l.b16 %v687
        %v915 = vunpack.c.h.b16 %v687
        %v916 = vunpack.c.l.b16 %v688
        %v917 = vunpack.c.h.b16 %v688
        %v918 = vunpack.c.l.b16 %v689
        %v919 = vunpack.c.h.b16 %v689
        %v920 = vunpack.c.l.b16 %v690
        %v921 = vunpack.c.h.b16 %v690
        %v922 = vunpack.c.l.b16 %v691
        %v923 = vunpack.c.h.b16 %v691
        %v924 = vunpack.c.l.b16 %v692
        %v925 = vunpack.c.h.b16 %v692
        %v926 = vunpack.c.l.b16 %v693
        %v927 = vunpack.c.h.b16 %v693
        %v928 = vunpack.c.l.b16 %v694
        %v929 = vunpack.c.h.b16 %v694
        %v930 = vunpack.c.l.b16 %v695
        %v931 = vunpack.c.h.b16 %v695
        %v932 = vunpack.c.l.b16 %v696
        %v933 = vunpack.c.h.b16 %v696
        %v934 = vunpack.c.l.b16 %v697
        %v935 = vunpack.c.h.b16 %v697
        %v936 = vunpack.c.l.b16 %v698
        %v937 = vunpack.c.h.b16 %v698
        %v938 = vunpack.c.l.b16 %v699
        %v939 = vunpack.c.h.b16 %v699
        %v940 = vpack.c.b16 %v910, %v908
        %v941 = vpack.c.b16 %v911, %v909
        %v942 = vpack.c.b16 %v914, %v912
        %v943 = vpack.c.b16 %v915, %v913
        %v944 = vpack.c.b16 %v918, %v916
        %v945 = vpack.c.b16 %v919, %v917
        %v946 = vpack.c.b16 %v922, %v920
        %v947 = vpack.c.b16 %v923, %v921
        %v948 = vpack.c.b16 %v926, %v924
        %v949 = vpack.c.b16 %v927, %v925
        %v950 = vpack.c.b16 %v930, %v928
        %v951 = vpack.c.b16 %v931, %v929
        %v952 = vpack.c.b16 %v934, %v932
        %v953 = vpack.c.b16 %v935, %v933
        %v954 = vpack.c.b16 %v938, %v936
        %v955 = vpack.c.b16 %v939, %v937
        %972 = vmatprep.subr.bf16.mxu0 %v941
        %973 = vmatpush1.bf16.msra.mxu0 %v940
        %974 = vmatprep.subr.bf16.mxu0 %v943
        %975 = vmatpush1.bf16.msra.mxu0 %v942
        %976 = vmatprep.subr.bf16.mxu0 %v945
        %977 = vmatpush1.bf16.msra.mxu0 %v944
        %978 = vmatprep.subr.bf16.mxu0 %v947
        %979 = vmatpush1.bf16.msra.mxu0 %v946
        %980 = vmatprep.subr.bf16.mxu0 %v949
        %981 = vmatpush1.bf16.msra.mxu0 %v948
        %982 = vmatprep.subr.bf16.mxu0 %v951
        %983 = vmatpush1.bf16.msra.mxu0 %v950
        %984 = vmatprep.subr.bf16.mxu0 %v953
        %985 = vmatpush1.bf16.msra.mxu0 %v952
        %986 = vmatprep.subr.bf16.mxu0 %v955
        %987 = vmatpush1.bf16.msra.mxu0 %v954
        %988 = vmatprep.subr.bf16.mxu0 0
        %989 = vmatpush1.bf16.msra.mxu0 0
        %990 = vmatprep.subr.bf16.mxu0 0
        %991 = vmatpush1.bf16.msra.mxu0 0
        %992 = vmatprep.subr.bf16.mxu0 0
        %993 = vmatpush1.bf16.msra.mxu0 0
        %994 = vmatprep.subr.bf16.mxu0 0
        %995 = vmatpush1.bf16.msra.mxu0 0
        %996 = vmatprep.subr.bf16.mxu0 0
        %997 = vmatpush1.bf16.msra.mxu0 0
        %998 = vmatprep.subr.bf16.mxu0 0
        %999 = vmatpush1.bf16.msra.mxu0 0
        %1000 = vmatprep.subr.bf16.mxu0 0
        %1001 = vmatpush1.bf16.msra.mxu0 0
        %1002 = vmatprep.subr.bf16.mxu0 0
        %1003 = vmatpush1.bf16.msra.mxu0 0
        %1004 = vmatprep.mubr.bf16.mxu0 0
        %1005 = vmatmul.mubr.bf16.gmra.mrb[0].mxu0 %v828
        %v1006 = vpop.f32.mrb[0].mxu0
        %v1007 = vadd.f32 0.0, %v1006
        %v1008 = vpop.f32.mrb[0].mxu0
        %v1009 = vadd.f32 0.0, %v1008
        %v1010 = vpop.f32.mrb[0].mxu0
        %v1011 = vadd.f32 0.0, %v1010
        %v1012 = vpop.f32.mrb[0].mxu0
        %v1013 = vadd.f32 0.0, %v1012
        %1014 = vmatprep.mubr.bf16.mxu0 0
        %1015 = vmatmul.mubr.bf16.gmra.mrb[0].mxu0 %v829
        %v1016 = vpop.f32.mrb[0].mxu0
        %v1017 = vadd.f32 0.0, %v1016
        %v1018 = vpop.f32.mrb[0].mxu0
        %v1019 = vadd.f32 0.0, %v1018
        %v1020 = vpop.f32.mrb[0].mxu0
        %v1021 = vadd.f32 0.0, %v1020
        %v1022 = vpop.f32.mrb[0].mxu0
        %v1023 = vadd.f32 0.0, %v1022
        %1024 = vmatprep.mubr.bf16.mxu0 0
        %1025 = vmatmul.mubr.bf16.gmra.mrb[0].mxu0 %v830
        %v1026 = vpop.f32.mrb[0].mxu0
        %v1027 = vadd.f32 0.0, %v1026
        %v1028 = vpop.f32.mrb[0].mxu0
        %v1029 = vadd.f32 0.0, %v1028
        %v1030 = vpop.f32.mrb[0].mxu0
        %v1031 = vadd.f32 0.0, %v1030
        %v1032 = vpop.f32.mrb[0].mxu0
        %v1033 = vadd.f32 0.0, %v1032
        %1034 = vmatprep.mubr.bf16.mxu0 0
        %1035 = vmatmul.mubr.bf16.gmra.mrb[0].mxu0 %v831
        %v1036 = vpop.f32.mrb[0].mxu0
        %v1037 = vadd.f32 0.0, %v1036
        %v1038 = vpop.f32.mrb[0].mxu0
        %v1039 = vadd.f32 0.0, %v1038
        %v1040 = vpop.f32.mrb[0].mxu0
        %v1041 = vadd.f32 0.0, %v1040
        %v1042 = vpop.f32.mrb[0].mxu0
        %v1043 = vadd.f32 0.0, %v1042
        %1044 = vmatprep.mubr.bf16.mxu0 0
        %1045 = vmatmul.mubr.bf16.gmra.mrb[0].mxu0 %v832
        %v1046 = vpop.f32.mrb[0].mxu0
        %v1047 = vadd.f32 0.0, %v1046
        %v1048 = vpop.f32.mrb[0].mxu0
        %v1049 = vadd.f32 0.0, %v1048
        %v1050 = vpop.f32.mrb[0].mxu0
        %v1051 = vadd.f32 0.0, %v1050
        %v1052 = vpop.f32.mrb[0].mxu0
        %v1053 = vadd.f32 0.0, %v1052
        %1054 = vmatprep.mubr.bf16.mxu0 0
        %1055 = vmatmul.mubr.bf16.gmra.mrb[0].mxu0 %v833
        %v1056 = vpop.f32.mrb[0].mxu0
        %v1057 = vadd.f32 0.0, %v1056
        %v1058 = vpop.f32.mrb[0].mxu0
        %v1059 = vadd.f32 0.0, %v1058
        %v1060 = vpop.f32.mrb[0].mxu0
        %v1061 = vadd.f32 0.0, %v1060
        %v1062 = vpop.f32.mrb[0].mxu0
        %v1063 = vadd.f32 0.0, %v1062
        %1064 = vmatprep.mubr.bf16.mxu0 0
        %1065 = vmatmul.mubr.bf16.gmra.mrb[0].mxu0 %v834
        %v1066 = vpop.f32.mrb[0].mxu0
        %v1067 = vadd.f32 0.0, %v1066
        %v1068 = vpop.f32.mrb[0].mxu0
        %v1069 = vadd.f32 0.0, %v1068
        %v1070 = vpop.f32.mrb[0].mxu0
        %v1071 = vadd.f32 0.0, %v1070
        %v1072 = vpop.f32.mrb[0].mxu0
        %v1073 = vadd.f32 0.0, %v1072
        %1074 = vmatprep.mubr.bf16.mxu0 0
        %1075 = vmatmul.mubr.bf16.gmra.mrb[0].mxu0 %v835
        %v1076 = vpop.f32.mrb[0].mxu0
        %v1077 = vadd.f32 0.0, %v1076
        %v1078 = vpop.f32.mrb[0].mxu0
        %v1079 = vadd.f32 0.0, %v1078
        %v1080 = vpop.f32.mrb[0].mxu0
        %v1081 = vadd.f32 0.0, %v1080
        %v1082 = vpop.f32.mrb[0].mxu0
        %v1083 = vadd.f32 0.0, %v1082
        %1084 = vmatprep.mubr.bf16.mxu0 0
        %1085 = vmatmul.mubr.bf16.gmra.mrb[0].mxu0 %v836
        %v1086 = vpop.f32.mrb[0].mxu0
        %v1087 = vadd.f32 0.0, %v1086
        %v1088 = vpop.f32.mrb[0].mxu0
        %v1089 = vadd.f32 0.0, %v1088
        %v1090 = vpop.f32.mrb[0].mxu0
        %v1091 = vadd.f32 0.0, %v1090
        %v1092 = vpop.f32.mrb[0].mxu0
        %v1093 = vadd.f32 0.0, %v1092
        %1094 = vmatprep.mubr.bf16.mxu0 0
        %1095 = vmatmul.mubr.bf16.gmra.mrb[0].mxu0 %v837
        %v1096 = vpop.f32.mrb[0].mxu0
        %v1097 = vadd.f32 0.0, %v1096
        %v1098 = vpop.f32.mrb[0].mxu0
        %v1099 = vadd.f32 0.0, %v1098
        %v1100 = vpop.f32.mrb[0].mxu0
        %v1101 = vadd.f32 0.0, %v1100
        %v1102 = vpop.f32.mrb[0].mxu0
        %v1103 = vadd.f32 0.0, %v1102
        %1104 = vmatprep.mubr.bf16.mxu0 0
        %1105 = vmatmul.mubr.bf16.gmra.mrb[0].mxu0 %v838
        %v1106 = vpop.f32.mrb[0].mxu0
        %v1107 = vadd.f32 0.0, %v1106
        %v1108 = vpop.f32.mrb[0].mxu0
        %v1109 = vadd.f32 0.0, %v1108
        %v1110 = vpop.f32.mrb[0].mxu0
        %v1111 = vadd.f32 0.0, %v1110
        %v1112 = vpop.f32.mrb[0].mxu0
        %v1113 = vadd.f32 0.0, %v1112
        %1114 = vmatprep.mubr.bf16.mxu0 0
        %1115 = vmatmul.mubr.bf16.gmra.mrb[0].mxu0 %v839
        %v1116 = vpop.f32.mrb[0].mxu0
        %v1117 = vadd.f32 0.0, %v1116
        %v1118 = vpop.f32.mrb[0].mxu0
        %v1119 = vadd.f32 0.0, %v1118
        %v1120 = vpop.f32.mrb[0].mxu0
        %v1121 = vadd.f32 0.0, %v1120
        %v1122 = vpop.f32.mrb[0].mxu0
        %v1123 = vadd.f32 0.0, %v1122
        %1124 = vmatprep.mubr.bf16.mxu0 0
        %1125 = vmatmul.mubr.bf16.gmra.mrb[0].mxu0 %v840
        %v1126 = vpop.f32.mrb[0].mxu0
        %v1127 = vadd.f32 0.0, %v1126
        %v1128 = vpop.f32.mrb[0].mxu0
        %v1129 = vadd.f32 0.0, %v1128
        %v1130 = vpop.f32.mrb[0].mxu0
        %v1131 = vadd.f32 0.0, %v1130
        %v1132 = vpop.f32.mrb[0].mxu0
        %v1133 = vadd.f32 0.0, %v1132
        %1134 = vmatprep.mubr.bf16.mxu0 0
        %1135 = vmatmul.mubr.bf16.gmra.mrb[0].mxu0 %v841
        %v1136 = vpop.f32.mrb[0].mxu0
        %v1137 = vadd.f32 0.0, %v1136
        %v1138 = vpop.f32.mrb[0].mxu0
        %v1139 = vadd.f32 0.0, %v1138
        %v1140 = vpop.f32.mrb[0].mxu0
        %v1141 = vadd.f32 0.0, %v1140
        %v1142 = vpop.f32.mrb[0].mxu0
        %v1143 = vadd.f32 0.0, %v1142
        %1144 = vmatprep.mubr.bf16.mxu0 0
        %1145 = vmatmul.mubr.bf16.gmra.mrb[0].mxu0 %v842
        %v1146 = vpop.f32.mrb[0].mxu0
        %v1147 = vadd.f32 0.0, %v1146
        %v1148 = vpop.f32.mrb[0].mxu0
        %v1149 = vadd.f32 0.0, %v1148
        %v1150 = vpop.f32.mrb[0].mxu0
        %v1151 = vadd.f32 0.0, %v1150
        %v1152 = vpop.f32.mrb[0].mxu0
        %v1153 = vadd.f32 0.0, %v1152
        %1154 = vmatprep.mubr.bf16.mxu0 0
        %1155 = vmatmul.mubr.bf16.gmra.mrb[0].mxu0 %v843
        %v1156 = vpop.f32.mrb[0].mxu0
        %v1157 = vadd.f32 0.0, %v1156
        %v1158 = vpop.f32.mrb[0].mxu0
        %v1159 = vadd.f32 0.0, %v1158
        %v1160 = vpop.f32.mrb[0].mxu0
        %v1161 = vadd.f32 0.0, %v1160
        %v1162 = vpop.f32.mrb[0].mxu0
        %v1163 = vadd.f32 0.0, %v1162
        %1164 = vmatprep.mubr.bf16.mxu0 0
        %1165 = vmatmul.mubr.bf16.gmra.mrb[0].mxu0 %v844
        %v1166 = vpop.f32.mrb[0].mxu0
        %v1167 = vadd.f32 0.0, %v1166
        %v1168 = vpop.f32.mrb[0].mxu0
        %v1169 = vadd.f32 0.0, %v1168
        %v1170 = vpop.f32.mrb[0].mxu0
        %v1171 = vadd.f32 0.0, %v1170
        %v1172 = vpop.f32.mrb[0].mxu0
        %v1173 = vadd.f32 0.0, %v1172
        %1174 = vmatprep.mubr.bf16.mxu0 0
        %1175 = vmatmul.mubr.bf16.gmra.mrb[0].mxu0 %v845
        %v1176 = vpop.f32.mrb[0].mxu0
        %v1177 = vadd.f32 0.0, %v1176
        %v1178 = vpop.f32.mrb[0].mxu0
        %v1179 = vadd.f32 0.0, %v1178
        %v1180 = vpop.f32.mrb[0].mxu0
        %v1181 = vadd.f32 0.0, %v1180
        %v1182 = vpop.f32.mrb[0].mxu0
        %v1183 = vadd.f32 0.0, %v1182
        %1184 = vmatprep.mubr.bf16.mxu0 0
        %1185 = vmatmul.mubr.bf16.gmra.mrb[0].mxu0 %v846
        %v1186 = vpop.f32.mrb[0].mxu0
        %v1187 = vadd.f32 0.0, %v1186
        %v1188 = vpop.f32.mrb[0].mxu0
        %v1189 = vadd.f32 0.0, %v1188
        %v1190 = vpop.f32.mrb[0].mxu0
        %v1191 = vadd.f32 0.0, %v1190
        %v1192 = vpop.f32.mrb[0].mxu0
        %v1193 = vadd.f32 0.0, %v1192
        %1194 = vmatprep.mubr.bf16.mxu0 0
        %1195 = vmatmul.mubr.bf16.gmra.mrb[0].mxu0 %v847
        %v1196 = vpop.f32.mrb[0].mxu0
        %v1197 = vadd.f32 0.0, %v1196
        %v1198 = vpop.f32.mrb[0].mxu0
        %v1199 = vadd.f32 0.0, %v1198
        %v1200 = vpop.f32.mrb[0].mxu0
        %v1201 = vadd.f32 0.0, %v1200
        %v1202 = vpop.f32.mrb[0].mxu0
        %v1203 = vadd.f32 0.0, %v1202
        %1204 = vmatprep.mubr.bf16.mxu0 0
        %1205 = vmatmul.mubr.bf16.gmra.mrb[0].mxu0 %v848
        %v1206 = vpop.f32.mrb[0].mxu0
        %v1207 = vadd.f32 0.0, %v1206
        %v1208 = vpop.f32.mrb[0].mxu0
        %v1209 = vadd.f32 0.0, %v1208
        %v1210 = vpop.f32.mrb[0].mxu0
        %v1211 = vadd.f32 0.0, %v1210
        %v1212 = vpop.f32.mrb[0].mxu0
        %v1213 = vadd.f32 0.0, %v1212
        %1214 = vmatprep.mubr.bf16.mxu0 0
        %1215 = vmatmul.mubr.bf16.gmra.mrb[0].mxu0 %v849
        %v1216 = vpop.f32.mrb[0].mxu0
        %v1217 = vadd.f32 0.0, %v1216
        %v1218 = vpop.f32.mrb[0].mxu0
        %v1219 = vadd.f32 0.0, %v1218
        %v1220 = vpop.f32.mrb[0].mxu0
        %v1221 = vadd.f32 0.0, %v1220
        %v1222 = vpop.f32.mrb[0].mxu0
        %v1223 = vadd.f32 0.0, %v1222
        %1224 = vmatprep.mubr.bf16.mxu0 0
        %1225 = vmatmul.mubr.bf16.gmra.mrb[0].mxu0 %v850
        %v1226 = vpop.f32.mrb[0].mxu0
        %v1227 = vadd.f32 0.0, %v1226
        %v1228 = vpop.f32.mrb[0].mxu0
        %v1229 = vadd.f32 0.0, %v1228
        %v1230 = vpop.f32.mrb[0].mxu0
        %v1231 = vadd.f32 0.0, %v1230
        %v1232 = vpop.f32.mrb[0].mxu0
        %v1233 = vadd.f32 0.0, %v1232
        %1234 = vmatprep.mubr.bf16.mxu0 0
        %1235 = vmatmul.mubr.bf16.gmra.mrb[0].mxu0 %v851
        %v1236 = vpop.f32.mrb[0].mxu0
        %v1237 = vadd.f32 0.0, %v1236
        %v1238 = vpop.f32.mrb[0].mxu0
        %v1239 = vadd.f32 0.0, %v1238
        %v1240 = vpop.f32.mrb[0].mxu0
        %v1241 = vadd.f32 0.0, %v1240
        %v1242 = vpop.f32.mrb[0].mxu0
        %v1243 = vadd.f32 0.0, %v1242
        %1244 = vmatprep.mubr.bf16.mxu0 0
        %1245 = vmatmul.mubr.bf16.gmra.mrb[0].mxu0 %v852
        %v1246 = vpop.f32.mrb[0].mxu0
        %v1247 = vadd.f32 0.0, %v1246
        %v1248 = vpop.f32.mrb[0].mxu0
        %v1249 = vadd.f32 0.0, %v1248
        %v1250 = vpop.f32.mrb[0].mxu0
        %v1251 = vadd.f32 0.0, %v1250
        %v1252 = vpop.f32.mrb[0].mxu0
        %v1253 = vadd.f32 0.0, %v1252
        %1254 = vmatprep.mubr.bf16.mxu0 0
        %1255 = vmatmul.mubr.bf16.gmra.mrb[0].mxu0 %v853
        %v1256 = vpop.f32.mrb[0].mxu0
        %v1257 = vadd.f32 0.0, %v1256
        %v1258 = vpop.f32.mrb[0].mxu0
        %v1259 = vadd.f32 0.0, %v1258
        %v1260 = vpop.f32.mrb[0].mxu0
        %v1261 = vadd.f32 0.0, %v1260
        %v1262 = vpop.f32.mrb[0].mxu0
        %v1263 = vadd.f32 0.0, %v1262
        %1264 = vmatprep.mubr.bf16.mxu0 0
        %1265 = vmatmul.mubr.bf16.gmra.mrb[0].mxu0 %v854
        %v1266 = vpop.f32.mrb[0].mxu0
        %v1267 = vadd.f32 0.0, %v1266
        %v1268 = vpop.f32.mrb[0].mxu0
        %v1269 = vadd.f32 0.0, %v1268
        %v1270 = vpop.f32.mrb[0].mxu0
        %v1271 = vadd.f32 0.0, %v1270
        %v1272 = vpop.f32.mrb[0].mxu0
        %v1273 = vadd.f32 0.0, %v1272
        %1274 = vmatprep.mubr.bf16.mxu0 0
        %1275 = vmatmul.mubr.bf16.gmra.mrb[0].mxu0 %v855
        %v1276 = vpop.f32.mrb[0].mxu0
        %v1277 = vadd.f32 0.0, %v1276
        %v1278 = vpop.f32.mrb[0].mxu0
        %v1279 = vadd.f32 0.0, %v1278
        %v1280 = vpop.f32.mrb[0].mxu0
        %v1281 = vadd.f32 0.0, %v1280
        %v1282 = vpop.f32.mrb[0].mxu0
        %v1283 = vadd.f32 0.0, %v1282
        %1284 = vmatprep.mubr.bf16.mxu0 0
        %1285 = vmatmul.mubr.bf16.gmra.mrb[0].mxu0 %v856
        %v1286 = vpop.f32.mrb[0].mxu0
        %v1287 = vadd.f32 0.0, %v1286
        %v1288 = vpop.f32.mrb[0].mxu0
        %v1289 = vadd.f32 0.0, %v1288
        %v1290 = vpop.f32.mrb[0].mxu0
        %v1291 = vadd.f32 0.0, %v1290
        %v1292 = vpop.f32.mrb[0].mxu0
        %v1293 = vadd.f32 0.0, %v1292
        %1294 = vmatprep.mubr.bf16.mxu0 0
        %1295 = vmatmul.mubr.bf16.gmra.mrb[0].mxu0 %v857
        %v1296 = vpop.f32.mrb[0].mxu0
        %v1297 = vadd.f32 0.0, %v1296
        %v1298 = vpop.f32.mrb[0].mxu0
        %v1299 = vadd.f32 0.0, %v1298
        %v1300 = vpop.f32.mrb[0].mxu0
        %v1301 = vadd.f32 0.0, %v1300
        %v1302 = vpop.f32.mrb[0].mxu0
        %v1303 = vadd.f32 0.0, %v1302
        %1304 = vmatprep.mubr.bf16.mxu0 0
        %1305 = vmatmul.mubr.bf16.gmra.mrb[0].mxu0 %v858
        %v1306 = vpop.f32.mrb[0].mxu0
        %v1307 = vadd.f32 0.0, %v1306
        %v1308 = vpop.f32.mrb[0].mxu0
        %v1309 = vadd.f32 0.0, %v1308
        %v1310 = vpop.f32.mrb[0].mxu0
        %v1311 = vadd.f32 0.0, %v1310
        %v1312 = vpop.f32.mrb[0].mxu0
        %v1313 = vadd.f32 0.0, %v1312
        %1314 = vmatprep.mubr.bf16.mxu0 0
        %1315 = vmatmul.mubr.bf16.gmra.mrb[0].mxu0 %v859
        %v1316 = vpop.f32.mrb[0].mxu0
        %v1317 = vadd.f32 0.0, %v1316
        %v1318 = vpop.f32.mrb[0].mxu0
        %v1319 = vadd.f32 0.0, %v1318
        %v1320 = vpop.f32.mrb[0].mxu0
        %v1321 = vadd.f32 0.0, %v1320
        %v1322 = vpop.f32.mrb[0].mxu0
        %v1323 = vadd.f32 0.0, %v1322
        %1324 = vdwg.mxu0
        %v1325 = vld [vmem:[%s5] sm:$0x1]
        %v1327 = vlaneseq
        %v1328 = vshrl.u32 %v1327, 7
        %v1329 = vsub.s32 0, %v1328
        %v1330 = vrot.slane %v1325, %v1329
        %v1332 = vadd.f32 %v1007, %v1330
        %v1333 = vadd.f32 %v1011, %v1330
        %v1334 = vadd.f32 %v1017, %v1330
        %v1335 = vadd.f32 %v1021, %v1330
        %v1336 = vadd.f32 %v1027, %v1330
        %v1337 = vadd.f32 %v1031, %v1330
        %v1338 = vadd.f32 %v1037, %v1330
        %v1339 = vadd.f32 %v1041, %v1330
        %v1340 = vadd.f32 %v1047, %v1330
        %v1341 = vadd.f32 %v1051, %v1330
        %v1342 = vadd.f32 %v1057, %v1330
        %v1343 = vadd.f32 %v1061, %v1330
        %v1344 = vadd.f32 %v1067, %v1330
        %v1345 = vadd.f32 %v1071, %v1330
        %v1346 = vadd.f32 %v1077, %v1330
        %v1347 = vadd.f32 %v1081, %v1330
        %v1348 = vadd.f32 %v1087, %v1330
        %v1349 = vadd.f32 %v1091, %v1330
        %v1350 = vadd.f32 %v1097, %v1330
        %v1351 = vadd.f32 %v1101, %v1330
        %v1352 = vadd.f32 %v1107, %v1330
        %v1353 = vadd.f32 %v1111, %v1330
        %v1354 = vadd.f32 %v1117, %v1330
        %v1355 = vadd.f32 %v1121, %v1330
        %v1356 = vadd.f32 %v1127, %v1330
        %v1357 = vadd.f32 %v1131, %v1330
        %v1358 = vadd.f32 %v1137, %v1330
        %v1359 = vadd.f32 %v1141, %v1330
        %v1360 = vadd.f32 %v1147, %v1330
        %v1361 = vadd.f32 %v1151, %v1330
        %v1362 = vadd.f32 %v1157, %v1330
        %v1363 = vadd.f32 %v1161, %v1330
        %v1364 = vadd.f32 %v1167, %v1330
        %v1365 = vadd.f32 %v1171, %v1330
        %v1366 = vadd.f32 %v1177, %v1330
        %v1367 = vadd.f32 %v1181, %v1330
        %v1368 = vadd.f32 %v1187, %v1330
        %v1369 = vadd.f32 %v1191, %v1330
        %v1370 = vadd.f32 %v1197, %v1330
        %v1371 = vadd.f32 %v1201, %v1330
        %v1372 = vadd.f32 %v1207, %v1330
        %v1373 = vadd.f32 %v1211, %v1330
        %v1374 = vadd.f32 %v1217, %v1330
        %v1375 = vadd.f32 %v1221, %v1330
        %v1376 = vadd.f32 %v1227, %v1330
        %v1377 = vadd.f32 %v1231, %v1330
        %v1378 = vadd.f32 %v1237, %v1330
        %v1379 = vadd.f32 %v1241, %v1330
        %v1380 = vadd.f32 %v1247, %v1330
        %v1381 = vadd.f32 %v1251, %v1330
        %v1382 = vadd.f32 %v1257, %v1330
        %v1383 = vadd.f32 %v1261, %v1330
        %v1384 = vadd.f32 %v1267, %v1330
        %v1385 = vadd.f32 %v1271, %v1330
        %v1386 = vadd.f32 %v1277, %v1330
        %v1387 = vadd.f32 %v1281, %v1330
        %v1388 = vadd.f32 %v1287, %v1330
        %v1389 = vadd.f32 %v1291, %v1330
        %v1390 = vadd.f32 %v1297, %v1330
        %v1391 = vadd.f32 %v1301, %v1330
        %v1392 = vadd.f32 %v1307, %v1330
        %v1393 = vadd.f32 %v1311, %v1330
        %v1394 = vadd.f32 %v1317, %v1330
        %v1395 = vadd.f32 %v1321, %v1330
        %v1396 = vmax.f32 %v1332, 0.0
        %v1397 = vmax.f32 %v1333, 0.0
        %v1398 = vmax.f32 %v1334, 0.0
        %v1399 = vmax.f32 %v1335, 0.0
        %v1400 = vmax.f32 %v1336, 0.0
        %v1401 = vmax.f32 %v1337, 0.0
        %v1402 = vmax.f32 %v1338, 0.0
        %v1403 = vmax.f32 %v1339, 0.0
        %v1404 = vmax.f32 %v1340, 0.0
        %v1405 = vmax.f32 %v1341, 0.0
        %v1406 = vmax.f32 %v1342, 0.0
        %v1407 = vmax.f32 %v1343, 0.0
        %v1408 = vmax.f32 %v1344, 0.0
        %v1409 = vmax.f32 %v1345, 0.0
        %v1410 = vmax.f32 %v1346, 0.0
        %v1411 = vmax.f32 %v1347, 0.0
        %v1412 = vmax.f32 %v1348, 0.0
        %v1413 = vmax.f32 %v1349, 0.0
        %v1414 = vmax.f32 %v1350, 0.0
        %v1415 = vmax.f32 %v1351, 0.0
        %v1416 = vmax.f32 %v1352, 0.0
        %v1417 = vmax.f32 %v1353, 0.0
        %v1418 = vmax.f32 %v1354, 0.0
        %v1419 = vmax.f32 %v1355, 0.0
        %v1420 = vmax.f32 %v1356, 0.0
        %v1421 = vmax.f32 %v1357, 0.0
        %v1422 = vmax.f32 %v1358, 0.0
        %v1423 = vmax.f32 %v1359, 0.0
        %v1424 = vmax.f32 %v1360, 0.0
        %v1425 = vmax.f32 %v1361, 0.0
        %v1426 = vmax.f32 %v1362, 0.0
        %v1427 = vmax.f32 %v1363, 0.0
        %v1428 = vmax.f32 %v1364, 0.0
        %v1429 = vmax.f32 %v1365, 0.0
        %v1430 = vmax.f32 %v1366, 0.0
        %v1431 = vmax.f32 %v1367, 0.0
        %v1432 = vmax.f32 %v1368, 0.0
        %v1433 = vmax.f32 %v1369, 0.0
        %v1434 = vmax.f32 %v1370, 0.0
        %v1435 = vmax.f32 %v1371, 0.0
        %v1436 = vmax.f32 %v1372, 0.0
        %v1437 = vmax.f32 %v1373, 0.0
        %v1438 = vmax.f32 %v1374, 0.0
        %v1439 = vmax.f32 %v1375, 0.0
        %v1440 = vmax.f32 %v1376, 0.0
        %v1441 = vmax.f32 %v1377, 0.0
        %v1442 = vmax.f32 %v1378, 0.0
        %v1443 = vmax.f32 %v1379, 0.0
        %v1444 = vmax.f32 %v1380, 0.0
        %v1445 = vmax.f32 %v1381, 0.0
        %v1446 = vmax.f32 %v1382, 0.0
        %v1447 = vmax.f32 %v1383, 0.0
        %v1448 = vmax.f32 %v1384, 0.0
        %v1449 = vmax.f32 %v1385, 0.0
        %v1450 = vmax.f32 %v1386, 0.0
        %v1451 = vmax.f32 %v1387, 0.0
        %v1452 = vmax.f32 %v1388, 0.0
        %v1453 = vmax.f32 %v1389, 0.0
        %v1454 = vmax.f32 %v1390, 0.0
        %v1455 = vmax.f32 %v1391, 0.0
        %v1456 = vmax.f32 %v1392, 0.0
        %v1457 = vmax.f32 %v1393, 0.0
        %v1458 = vmax.f32 %v1394, 0.0
        %v1459 = vmax.f32 %v1395, 0.0
        %s1460 = scalar_lea.vmem %s5, 3
        %v1461 = vld [vmem:[%s1460] sm:$0x1]
        %v1463 = vlaneseq
        %v1464 = vshrl.u32 %v1463, 7
        %v1465 = vsub.s32 0, %v1464
        %v1466 = vrot.slane %v1461, %v1465
        %v1468 = vadd.f32 %v1009, %v1466
        %v1469 = vadd.f32 %v1013, %v1466
        %v1470 = vadd.f32 %v1019, %v1466
        %v1471 = vadd.f32 %v1023, %v1466
        %v1472 = vadd.f32 %v1029, %v1466
        %v1473 = vadd.f32 %v1033, %v1466
        %v1474 = vadd.f32 %v1039, %v1466
        %v1475 = vadd.f32 %v1043, %v1466
        %v1476 = vadd.f32 %v1049, %v1466
        %v1477 = vadd.f32 %v1053, %v1466
        %v1478 = vadd.f32 %v1059, %v1466
        %v1479 = vadd.f32 %v1063, %v1466
        %v1480 = vadd.f32 %v1069, %v1466
        %v1481 = vadd.f32 %v1073, %v1466
        %v1482 = vadd.f32 %v1079, %v1466
        %v1483 = vadd.f32 %v1083, %v1466
        %v1484 = vadd.f32 %v1089, %v1466
        %v1485 = vadd.f32 %v1093, %v1466
        %v1486 = vadd.f32 %v1099, %v1466
        %v1487 = vadd.f32 %v1103, %v1466
        %v1488 = vadd.f32 %v1109, %v1466
        %v1489 = vadd.f32 %v1113, %v1466
        %v1490 = vadd.f32 %v1119, %v1466
        %v1491 = vadd.f32 %v1123, %v1466
        %v1492 = vadd.f32 %v1129, %v1466
        %v1493 = vadd.f32 %v1133, %v1466
        %v1494 = vadd.f32 %v1139, %v1466
        %v1495 = vadd.f32 %v1143, %v1466
        %v1496 = vadd.f32 %v1149, %v1466
        %v1497 = vadd.f32 %v1153, %v1466
        %v1498 = vadd.f32 %v1159, %v1466
        %v1499 = vadd.f32 %v1163, %v1466
        %v1500 = vadd.f32 %v1169, %v1466
        %v1501 = vadd.f32 %v1173, %v1466
        %v1502 = vadd.f32 %v1179, %v1466
        %v1503 = vadd.f32 %v1183, %v1466
        %v1504 = vadd.f32 %v1189, %v1466
        %v1505 = vadd.f32 %v1193, %v1466
        %v1506 = vadd.f32 %v1199, %v1466
        %v1507 = vadd.f32 %v1203, %v1466
        %v1508 = vadd.f32 %v1209, %v1466
        %v1509 = vadd.f32 %v1213, %v1466
        %v1510 = vadd.f32 %v1219, %v1466
        %v1511 = vadd.f32 %v1223, %v1466
        %v1512 = vadd.f32 %v1229, %v1466
        %v1513 = vadd.f32 %v1233, %v1466
        %v1514 = vadd.f32 %v1239, %v1466
        %v1515 = vadd.f32 %v1243, %v1466
        %v1516 = vadd.f32 %v1249, %v1466
        %v1517 = vadd.f32 %v1253, %v1466
        %v1518 = vadd.f32 %v1259, %v1466
        %v1519 = vadd.f32 %v1263, %v1466
        %v1520 = vadd.f32 %v1269, %v1466
        %v1521 = vadd.f32 %v1273, %v1466
        %v1522 = vadd.f32 %v1279, %v1466
        %v1523 = vadd.f32 %v1283, %v1466
        %v1524 = vadd.f32 %v1289, %v1466
        %v1525 = vadd.f32 %v1293, %v1466
        %v1526 = vadd.f32 %v1299, %v1466
        %v1527 = vadd.f32 %v1303, %v1466
        %v1528 = vadd.f32 %v1309, %v1466
        %v1529 = vadd.f32 %v1313, %v1466
        %v1530 = vadd.f32 %v1319, %v1466
        %v1531 = vadd.f32 %v1323, %v1466
        %v1532 = vpack.c.bf16 %v1397, %v1396
        %v1533 = vpack.c.bf16 %v1399, %v1398
        %v1534 = vpack.c.bf16 %v1401, %v1400
        %v1535 = vpack.c.bf16 %v1403, %v1402
        %v1536 = vpack.c.bf16 %v1405, %v1404
        %v1537 = vpack.c.bf16 %v1407, %v1406
        %v1538 = vpack.c.bf16 %v1409, %v1408
        %v1539 = vpack.c.bf16 %v1411, %v1410
        %v1540 = vpack.c.bf16 %v1413, %v1412
        %v1541 = vpack.c.bf16 %v1415, %v1414
        %v1542 = vpack.c.bf16 %v1417, %v1416
        %v1543 = vpack.c.bf16 %v1419, %v1418
        %v1544 = vpack.c.bf16 %v1421, %v1420
        %v1545 = vpack.c.bf16 %v1423, %v1422
        %v1546 = vpack.c.bf16 %v1425, %v1424
        %v1547 = vpack.c.bf16 %v1427, %v1426
        %v1548 = vpack.c.bf16 %v1429, %v1428
        %v1549 = vpack.c.bf16 %v1431, %v1430
        %v1550 = vpack.c.bf16 %v1433, %v1432
        %v1551 = vpack.c.bf16 %v1435, %v1434
        %v1552 = vpack.c.bf16 %v1437, %v1436
        %v1553 = vpack.c.bf16 %v1439, %v1438
        %v1554 = vpack.c.bf16 %v1441, %v1440
        %v1555 = vpack.c.bf16 %v1443, %v1442
        %v1556 = vpack.c.bf16 %v1445, %v1444
        %v1557 = vpack.c.bf16 %v1447, %v1446
        %v1558 = vpack.c.bf16 %v1449, %v1448
        %v1559 = vpack.c.bf16 %v1451, %v1450
        %v1560 = vpack.c.bf16 %v1453, %v1452
        %v1561 = vpack.c.bf16 %v1455, %v1454
        %v1562 = vpack.c.bf16 %v1457, %v1456
        %v1563 = vpack.c.bf16 %v1459, %v1458
        %v1564 = vld [vmem:[#allocation8] sm:$0xf]
        %v1565 = vld [vmem:[#allocation8 + $0x4] sm:$0xf]
        %v1566 = vld [vmem:[#allocation8 + $0x8] sm:$0xf]
        %v1567 = vld [vmem:[#allocation8 + $0xc] sm:$0xf]
        %v1568 = vld [vmem:[#allocation8 + $0x10] sm:$0xf]
        %v1569 = vld [vmem:[#allocation8 + $0x14] sm:$0xf]
        %v1570 = vld [vmem:[#allocation8 + $0x18] sm:$0xf]
        %v1571 = vld [vmem:[#allocation8 + $0x1c] sm:$0xf]
        %v1572 = vld [vmem:[#allocation8 + $0x20] sm:$0xf]
        %v1573 = vld [vmem:[#allocation8 + $0x24] sm:$0xf]
        %v1574 = vld [vmem:[#allocation8 + $0x28] sm:$0xf]
        %v1575 = vld [vmem:[#allocation8 + $0x2c] sm:$0xf]
        %v1576 = vld [vmem:[#allocation8 + $0x30] sm:$0xf]
        %v1577 = vld [vmem:[#allocation8 + $0x34] sm:$0xf]
        %v1578 = vld [vmem:[#allocation8 + $0x38] sm:$0xf]
        %v1579 = vld [vmem:[#allocation8 + $0x3c] sm:$0xf]
        %s1580 = scalar_lea.vmem %s5, 1
        %v1581 = vld [vmem:[%s1580] sm:$0x1]
        %v1583 = vlaneseq
        %v1584 = vshrl.u32 %v1583, 7
        %v1585 = vsub.s32 0, %v1584
        %v1586 = vrot.slane %v1581, %v1585
        %v1604 = vunpack.c.l.b16 %v1564
        %v1605 = vunpack.c.l.b16 %v1565
        %v1606 = vunpack.c.l.b16 %v1566
        %v1607 = vunpack.c.l.b16 %v1567
        %v1608 = vunpack.c.l.b16 %v1568
        %v1609 = vunpack.c.l.b16 %v1569
        %v1610 = vunpack.c.l.b16 %v1570
        %v1611 = vunpack.c.l.b16 %v1571
        %v1612 = vunpack.c.l.b16 %v1572
        %v1613 = vunpack.c.l.b16 %v1573
        %v1614 = vunpack.c.l.b16 %v1574
        %v1615 = vunpack.c.l.b16 %v1575
        %v1616 = vunpack.c.l.b16 %v1576
        %v1617 = vunpack.c.l.b16 %v1577
        %v1618 = vunpack.c.l.b16 %v1578
        %v1619 = vunpack.c.l.b16 %v1579
        %v1620 = vpack.c.b16 %v1605, %v1604
        %v1621 = vpack.c.b16 %v1607, %v1606
        %v1622 = vpack.c.b16 %v1609, %v1608
        %v1623 = vpack.c.b16 %v1611, %v1610
        %v1624 = vpack.c.b16 %v1613, %v1612
        %v1625 = vpack.c.b16 %v1615, %v1614
        %v1626 = vpack.c.b16 %v1617, %v1616
        %v1627 = vpack.c.b16 %v1619, %v1618
        %1636 = vmatprep.subr.bf16.mxu0 0
        %1637 = vmatpush1.bf16.msra.mxu0 %v1620
        %1638 = vmatprep.subr.bf16.mxu0 0
        %1639 = vmatpush1.bf16.msra.mxu0 %v1621
        %1640 = vmatprep.subr.bf16.mxu0 0
        %1641 = vmatpush1.bf16.msra.mxu0 %v1622
        %1642 = vmatprep.subr.bf16.mxu0 0
        %1643 = vmatpush1.bf16.msra.mxu0 %v1623
        %1644 = vmatprep.subr.bf16.mxu0 0
        %1645 = vmatpush1.bf16.msra.mxu0 %v1624
        %1646 = vmatprep.subr.bf16.mxu0 0
        %1647 = vmatpush1.bf16.msra.mxu0 %v1625
        %1648 = vmatprep.subr.bf16.mxu0 0
        %1649 = vmatpush1.bf16.msra.mxu0 %v1626
        %1650 = vmatprep.subr.bf16.mxu0 0
        %1651 = vmatpush1.bf16.msra.mxu0 %v1627
        %1652 = vmatprep.subr.bf16.mxu0 0
        %1653 = vmatpush1.bf16.msra.mxu0 0
        %1654 = vmatprep.subr.bf16.mxu0 0
        %1655 = vmatpush1.bf16.msra.mxu0 0
        %1656 = vmatprep.subr.bf16.mxu0 0
        %1657 = vmatpush1.bf16.msra.mxu0 0
        %1658 = vmatprep.subr.bf16.mxu0 0
        %1659 = vmatpush1.bf16.msra.mxu0 0
        %1660 = vmatprep.subr.bf16.mxu0 0
        %1661 = vmatpush1.bf16.msra.mxu0 0
        %1662 = vmatprep.subr.bf16.mxu0 0
        %1663 = vmatpush1.bf16.msra.mxu0 0
        %1664 = vmatprep.subr.bf16.mxu0 0
        %1665 = vmatpush1.bf16.msra.mxu0 0
        %1666 = vmatprep.subr.bf16.mxu0 0
        %1667 = vmatpush1.bf16.msra.mxu0 0
        %1668 = vmatprep.mubr.bf16.mxu0 0
        %1669 = vmatmul.mubr.bf16.gmra.mrb[0].mxu0 %v1532
        %v1670 = vpop.f32.mrb[0].mxu0
        %v1671 = vadd.f32 %v1586, %v1670
        %v1672 = vpop.f32.mrb[0].mxu0
        %v1673 = vpop.f32.mrb[0].mxu0
        %v1674 = vadd.f32 %v1586, %v1673
        %v1675 = vpop.f32.mrb[0].mxu0
        %1676 = vmatprep.mubr.bf16.mxu0 0
        %1677 = vmatmul.mubr.bf16.gmra.mrb[0].mxu0 %v1533
        %v1678 = vpop.f32.mrb[0].mxu0
        %v1679 = vadd.f32 %v1586, %v1678
        %v1680 = vpop.f32.mrb[0].mxu0
        %v1681 = vpop.f32.mrb[0].mxu0
        %v1682 = vadd.f32 %v1586, %v1681
        %v1683 = vpop.f32.mrb[0].mxu0
        %1684 = vmatprep.mubr.bf16.mxu0 0
        %1685 = vmatmul.mubr.bf16.gmra.mrb[0].mxu0 %v1534
        %v1686 = vpop.f32.mrb[0].mxu0
        %v1687 = vadd.f32 %v1586, %v1686
        %v1688 = vpop.f32.mrb[0].mxu0
        %v1689 = vpop.f32.mrb[0].mxu0
        %v1690 = vadd.f32 %v1586, %v1689
        %v1691 = vpop.f32.mrb[0].mxu0
        %1692 = vmatprep.mubr.bf16.mxu0 0
        %1693 = vmatmul.mubr.bf16.gmra.mrb[0].mxu0 %v1535
        %v1694 = vpop.f32.mrb[0].mxu0
        %v1695 = vadd.f32 %v1586, %v1694
        %v1696 = vpop.f32.mrb[0].mxu0
        %v1697 = vpop.f32.mrb[0].mxu0
        %v1698 = vadd.f32 %v1586, %v1697
        %v1699 = vpop.f32.mrb[0].mxu0
        %1700 = vmatprep.mubr.bf16.mxu0 0
        %1701 = vmatmul.mubr.bf16.gmra.mrb[0].mxu0 %v1536
        %v1702 = vpop.f32.mrb[0].mxu0
        %v1703 = vadd.f32 %v1586, %v1702
        %v1704 = vpop.f32.mrb[0].mxu0
        %v1705 = vpop.f32.mrb[0].mxu0
        %v1706 = vadd.f32 %v1586, %v1705
        %v1707 = vpop.f32.mrb[0].mxu0
        %1708 = vmatprep.mubr.bf16.mxu0 0
        %1709 = vmatmul.mubr.bf16.gmra.mrb[0].mxu0 %v1537
        %v1710 = vpop.f32.mrb[0].mxu0
        %v1711 = vadd.f32 %v1586, %v1710
        %v1712 = vpop.f32.mrb[0].mxu0
        %v1713 = vpop.f32.mrb[0].mxu0
        %v1714 = vadd.f32 %v1586, %v1713
        %v1715 = vpop.f32.mrb[0].mxu0
        %1716 = vmatprep.mubr.bf16.mxu0 0
        %1717 = vmatmul.mubr.bf16.gmra.mrb[0].mxu0 %v1538
        %v1718 = vpop.f32.mrb[0].mxu0
        %v1719 = vadd.f32 %v1586, %v1718
        %v1720 = vpop.f32.mrb[0].mxu0
        %v1721 = vpop.f32.mrb[0].mxu0
        %v1722 = vadd.f32 %v1586, %v1721
        %v1723 = vpop.f32.mrb[0].mxu0
        %1724 = vmatprep.mubr.bf16.mxu0 0
        %1725 = vmatmul.mubr.bf16.gmra.mrb[0].mxu0 %v1539
        %v1726 = vpop.f32.mrb[0].mxu0
        %v1727 = vadd.f32 %v1586, %v1726
        %v1728 = vpop.f32.mrb[0].mxu0
        %v1729 = vpop.f32.mrb[0].mxu0
        %v1730 = vadd.f32 %v1586, %v1729
        %v1731 = vpop.f32.mrb[0].mxu0
        %1732 = vmatprep.mubr.bf16.mxu0 0
        %1733 = vmatmul.mubr.bf16.gmra.mrb[0].mxu0 %v1540
        %v1734 = vpop.f32.mrb[0].mxu0
        %v1735 = vadd.f32 %v1586, %v1734
        %v1736 = vpop.f32.mrb[0].mxu0
        %v1737 = vpop.f32.mrb[0].mxu0
        %v1738 = vadd.f32 %v1586, %v1737
        %v1739 = vpop.f32.mrb[0].mxu0
        %1740 = vmatprep.mubr.bf16.mxu0 0
        %1741 = vmatmul.mubr.bf16.gmra.mrb[0].mxu0 %v1541
        %v1742 = vpop.f32.mrb[0].mxu0
        %v1743 = vadd.f32 %v1586, %v1742
        %v1744 = vpop.f32.mrb[0].mxu0
        %v1745 = vpop.f32.mrb[0].mxu0
        %v1746 = vadd.f32 %v1586, %v1745
        %v1747 = vpop.f32.mrb[0].mxu0
        %1748 = vmatprep.mubr.bf16.mxu0 0
        %1749 = vmatmul.mubr.bf16.gmra.mrb[0].mxu0 %v1542
        %v1750 = vpop.f32.mrb[0].mxu0
        %v1751 = vadd.f32 %v1586, %v1750
        %v1752 = vpop.f32.mrb[0].mxu0
        %v1753 = vpop.f32.mrb[0].mxu0
        %v1754 = vadd.f32 %v1586, %v1753
        %v1755 = vpop.f32.mrb[0].mxu0
        %1756 = vmatprep.mubr.bf16.mxu0 0
        %1757 = vmatmul.mubr.bf16.gmra.mrb[0].mxu0 %v1543
        %v1758 = vpop.f32.mrb[0].mxu0
        %v1759 = vadd.f32 %v1586, %v1758
        %v1760 = vpop.f32.mrb[0].mxu0
        %v1761 = vpop.f32.mrb[0].mxu0
        %v1762 = vadd.f32 %v1586, %v1761
        %v1763 = vpop.f32.mrb[0].mxu0
        %1764 = vmatprep.mubr.bf16.mxu0 0
        %1765 = vmatmul.mubr.bf16.gmra.mrb[0].mxu0 %v1544
        %v1766 = vpop.f32.mrb[0].mxu0
        %v1767 = vadd.f32 %v1586, %v1766
        %v1768 = vpop.f32.mrb[0].mxu0
        %v1769 = vpop.f32.mrb[0].mxu0
        %v1770 = vadd.f32 %v1586, %v1769
        %v1771 = vpop.f32.mrb[0].mxu0
        %1772 = vmatprep.mubr.bf16.mxu0 0
        %1773 = vmatmul.mubr.bf16.gmra.mrb[0].mxu0 %v1545
        %v1774 = vpop.f32.mrb[0].mxu0
        %v1775 = vadd.f32 %v1586, %v1774
        %v1776 = vpop.f32.mrb[0].mxu0
        %v1777 = vpop.f32.mrb[0].mxu0
        %v1778 = vadd.f32 %v1586, %v1777
        %v1779 = vpop.f32.mrb[0].mxu0
        %1780 = vmatprep.mubr.bf16.mxu0 0
        %1781 = vmatmul.mubr.bf16.gmra.mrb[0].mxu0 %v1546
        %v1782 = vpop.f32.mrb[0].mxu0
        %v1783 = vadd.f32 %v1586, %v1782
        %v1784 = vpop.f32.mrb[0].mxu0
        %v1785 = vpop.f32.mrb[0].mxu0
        %v1786 = vadd.f32 %v1586, %v1785
        %v1787 = vpop.f32.mrb[0].mxu0
        %1788 = vmatprep.mubr.bf16.mxu0 0
        %1789 = vmatmul.mubr.bf16.gmra.mrb[0].mxu0 %v1547
        %v1790 = vpop.f32.mrb[0].mxu0
        %v1791 = vadd.f32 %v1586, %v1790
        %v1792 = vpop.f32.mrb[0].mxu0
        %v1793 = vpop.f32.mrb[0].mxu0
        %v1794 = vadd.f32 %v1586, %v1793
        %v1795 = vpop.f32.mrb[0].mxu0
        %1796 = vmatprep.mubr.bf16.mxu0 0
        %1797 = vmatmul.mubr.bf16.gmra.mrb[0].mxu0 %v1548
        %v1798 = vpop.f32.mrb[0].mxu0
        %v1799 = vadd.f32 %v1586, %v1798
        %v1800 = vpop.f32.mrb[0].mxu0
        %v1801 = vpop.f32.mrb[0].mxu0
        %v1802 = vadd.f32 %v1586, %v1801
        %v1803 = vpop.f32.mrb[0].mxu0
        %1804 = vmatprep.mubr.bf16.mxu0 0
        %1805 = vmatmul.mubr.bf16.gmra.mrb[0].mxu0 %v1549
        %v1806 = vpop.f32.mrb[0].mxu0
        %v1807 = vadd.f32 %v1586, %v1806
        %v1808 = vpop.f32.mrb[0].mxu0
        %v1809 = vpop.f32.mrb[0].mxu0
        %v1810 = vadd.f32 %v1586, %v1809
        %v1811 = vpop.f32.mrb[0].mxu0
        %1812 = vmatprep.mubr.bf16.mxu0 0
        %1813 = vmatmul.mubr.bf16.gmra.mrb[0].mxu0 %v1550
        %v1814 = vpop.f32.mrb[0].mxu0
        %v1815 = vadd.f32 %v1586, %v1814
        %v1816 = vpop.f32.mrb[0].mxu0
        %v1817 = vpop.f32.mrb[0].mxu0
        %v1818 = vadd.f32 %v1586, %v1817
        %v1819 = vpop.f32.mrb[0].mxu0
        %1820 = vmatprep.mubr.bf16.mxu0 0
        %1821 = vmatmul.mubr.bf16.gmra.mrb[0].mxu0 %v1551
        %v1822 = vpop.f32.mrb[0].mxu0
        %v1823 = vadd.f32 %v1586, %v1822
        %v1824 = vpop.f32.mrb[0].mxu0
        %v1825 = vpop.f32.mrb[0].mxu0
        %v1826 = vadd.f32 %v1586, %v1825
        %v1827 = vpop.f32.mrb[0].mxu0
        %1828 = vmatprep.mubr.bf16.mxu0 0
        %1829 = vmatmul.mubr.bf16.gmra.mrb[0].mxu0 %v1552
        %v1830 = vpop.f32.mrb[0].mxu0
        %v1831 = vadd.f32 %v1586, %v1830
        %v1832 = vpop.f32.mrb[0].mxu0
        %v1833 = vpop.f32.mrb[0].mxu0
        %v1834 = vadd.f32 %v1586, %v1833
        %v1835 = vpop.f32.mrb[0].mxu0
        %1836 = vmatprep.mubr.bf16.mxu0 0
        %1837 = vmatmul.mubr.bf16.gmra.mrb[0].mxu0 %v1553
        %v1838 = vpop.f32.mrb[0].mxu0
        %v1839 = vadd.f32 %v1586, %v1838
        %v1840 = vpop.f32.mrb[0].mxu0
        %v1841 = vpop.f32.mrb[0].mxu0
        %v1842 = vadd.f32 %v1586, %v1841
        %v1843 = vpop.f32.mrb[0].mxu0
        %1844 = vmatprep.mubr.bf16.mxu0 0
        %1845 = vmatmul.mubr.bf16.gmra.mrb[0].mxu0 %v1554
        %v1846 = vpop.f32.mrb[0].mxu0
        %v1847 = vadd.f32 %v1586, %v1846
        %v1848 = vpop.f32.mrb[0].mxu0
        %v1849 = vpop.f32.mrb[0].mxu0
        %v1850 = vadd.f32 %v1586, %v1849
        %v1851 = vpop.f32.mrb[0].mxu0
        %1852 = vmatprep.mubr.bf16.mxu0 0
        %1853 = vmatmul.mubr.bf16.gmra.mrb[0].mxu0 %v1555
        %v1854 = vpop.f32.mrb[0].mxu0
        %v1855 = vadd.f32 %v1586, %v1854
        %v1856 = vpop.f32.mrb[0].mxu0
        %v1857 = vpop.f32.mrb[0].mxu0
        %v1858 = vadd.f32 %v1586, %v1857
        %v1859 = vpop.f32.mrb[0].mxu0
        %1860 = vmatprep.mubr.bf16.mxu0 0
        %1861 = vmatmul.mubr.bf16.gmra.mrb[0].mxu0 %v1556
        %v1862 = vpop.f32.mrb[0].mxu0
        %v1863 = vadd.f32 %v1586, %v1862
        %v1864 = vpop.f32.mrb[0].mxu0
        %v1865 = vpop.f32.mrb[0].mxu0
        %v1866 = vadd.f32 %v1586, %v1865
        %v1867 = vpop.f32.mrb[0].mxu0
        %1868 = vmatprep.mubr.bf16.mxu0 0
        %1869 = vmatmul.mubr.bf16.gmra.mrb[0].mxu0 %v1557
        %v1870 = vpop.f32.mrb[0].mxu0
        %v1871 = vadd.f32 %v1586, %v1870
        %v1872 = vpop.f32.mrb[0].mxu0
        %v1873 = vpop.f32.mrb[0].mxu0
        %v1874 = vadd.f32 %v1586, %v1873
        %v1875 = vpop.f32.mrb[0].mxu0
        %1876 = vmatprep.mubr.bf16.mxu0 0
        %1877 = vmatmul.mubr.bf16.gmra.mrb[0].mxu0 %v1558
        %v1878 = vpop.f32.mrb[0].mxu0
        %v1879 = vadd.f32 %v1586, %v1878
        %v1880 = vpop.f32.mrb[0].mxu0
        %v1881 = vpop.f32.mrb[0].mxu0
        %v1882 = vadd.f32 %v1586, %v1881
        %v1883 = vpop.f32.mrb[0].mxu0
        %1884 = vmatprep.mubr.bf16.mxu0 0
        %1885 = vmatmul.mubr.bf16.gmra.mrb[0].mxu0 %v1559
        %v1886 = vpop.f32.mrb[0].mxu0
        %v1887 = vadd.f32 %v1586, %v1886
        %v1888 = vpop.f32.mrb[0].mxu0
        %v1889 = vpop.f32.mrb[0].mxu0
        %v1890 = vadd.f32 %v1586, %v1889
        %v1891 = vpop.f32.mrb[0].mxu0
        %1892 = vmatprep.mubr.bf16.mxu0 0
        %1893 = vmatmul.mubr.bf16.gmra.mrb[0].mxu0 %v1560
        %v1894 = vpop.f32.mrb[0].mxu0
        %v1895 = vadd.f32 %v1586, %v1894
        %v1896 = vpop.f32.mrb[0].mxu0
        %v1897 = vpop.f32.mrb[0].mxu0
        %v1898 = vadd.f32 %v1586, %v1897
        %v1899 = vpop.f32.mrb[0].mxu0
        %1900 = vmatprep.mubr.bf16.mxu0 0
        %1901 = vmatmul.mubr.bf16.gmra.mrb[0].mxu0 %v1561
        %v1902 = vpop.f32.mrb[0].mxu0
        %v1903 = vadd.f32 %v1586, %v1902
        %v1904 = vpop.f32.mrb[0].mxu0
        %v1905 = vpop.f32.mrb[0].mxu0
        %v1906 = vadd.f32 %v1586, %v1905
        %v1907 = vpop.f32.mrb[0].mxu0
        %1908 = vmatprep.mubr.bf16.mxu0 0
        %1909 = vmatmul.mubr.bf16.gmra.mrb[0].mxu0 %v1562
        %v1910 = vpop.f32.mrb[0].mxu0
        %v1911 = vadd.f32 %v1586, %v1910
        %v1912 = vpop.f32.mrb[0].mxu0
        %v1913 = vpop.f32.mrb[0].mxu0
        %v1914 = vadd.f32 %v1586, %v1913
        %v1915 = vpop.f32.mrb[0].mxu0
        %1916 = vmatprep.mubr.bf16.mxu0 0
        %1917 = vmatmul.mubr.bf16.gmra.mrb[0].mxu0 %v1563
        %v1918 = vpop.f32.mrb[0].mxu0
        %v1919 = vadd.f32 %v1586, %v1918
        %v1920 = vpop.f32.mrb[0].mxu0
        %v1921 = vpop.f32.mrb[0].mxu0
        %v1922 = vadd.f32 %v1586, %v1921
        %v1923 = vpop.f32.mrb[0].mxu0
        %1924 = vdwg.mxu0
        %v1925 = vmax.f32 %v1671, 0.0
        %v1926 = vmax.f32 %v1674, 0.0
        %v1927 = vmax.f32 %v1679, 0.0
        %v1928 = vmax.f32 %v1682, 0.0
        %v1929 = vmax.f32 %v1687, 0.0
        %v1930 = vmax.f32 %v1690, 0.0
        %v1931 = vmax.f32 %v1695, 0.0
        %v1932 = vmax.f32 %v1698, 0.0
        %v1933 = vmax.f32 %v1703, 0.0
        %v1934 = vmax.f32 %v1706, 0.0
        %v1935 = vmax.f32 %v1711, 0.0
        %v1936 = vmax.f32 %v1714, 0.0
        %v1937 = vmax.f32 %v1719, 0.0
        %v1938 = vmax.f32 %v1722, 0.0
        %v1939 = vmax.f32 %v1727, 0.0
        %v1940 = vmax.f32 %v1730, 0.0
        %v1941 = vmax.f32 %v1735, 0.0
        %v1942 = vmax.f32 %v1738, 0.0
        %v1943 = vmax.f32 %v1743, 0.0
        %v1944 = vmax.f32 %v1746, 0.0
        %v1945 = vmax.f32 %v1751, 0.0
        %v1946 = vmax.f32 %v1754, 0.0
        %v1947 = vmax.f32 %v1759, 0.0
        %v1948 = vmax.f32 %v1762, 0.0
        %v1949 = vmax.f32 %v1767, 0.0
        %v1950 = vmax.f32 %v1770, 0.0
        %v1951 = vmax.f32 %v1775, 0.0
        %v1952 = vmax.f32 %v1778, 0.0
        %v1953 = vmax.f32 %v1783, 0.0
        %v1954 = vmax.f32 %v1786, 0.0
        %v1955 = vmax.f32 %v1791, 0.0
        %v1956 = vmax.f32 %v1794, 0.0
        %v1957 = vmax.f32 %v1799, 0.0
        %v1958 = vmax.f32 %v1802, 0.0
        %v1959 = vmax.f32 %v1807, 0.0
        %v1960 = vmax.f32 %v1810, 0.0
        %v1961 = vmax.f32 %v1815, 0.0
        %v1962 = vmax.f32 %v1818, 0.0
        %v1963 = vmax.f32 %v1823, 0.0
        %v1964 = vmax.f32 %v1826, 0.0
        %v1965 = vmax.f32 %v1831, 0.0
        %v1966 = vmax.f32 %v1834, 0.0
        %v1967 = vmax.f32 %v1839, 0.0
        %v1968 = vmax.f32 %v1842, 0.0
        %v1969 = vmax.f32 %v1847, 0.0
        %v1970 = vmax.f32 %v1850, 0.0
        %v1971 = vmax.f32 %v1855, 0.0
        %v1972 = vmax.f32 %v1858, 0.0
        %v1973 = vmax.f32 %v1863, 0.0
        %v1974 = vmax.f32 %v1866, 0.0
        %v1975 = vmax.f32 %v1871, 0.0
        %v1976 = vmax.f32 %v1874, 0.0
        %v1977 = vmax.f32 %v1879, 0.0
        %v1978 = vmax.f32 %v1882, 0.0
        %v1979 = vmax.f32 %v1887, 0.0
        %v1980 = vmax.f32 %v1890, 0.0
        %v1981 = vmax.f32 %v1895, 0.0
        %v1982 = vmax.f32 %v1898, 0.0
        %v1983 = vmax.f32 %v1903, 0.0
        %v1984 = vmax.f32 %v1906, 0.0
        %v1985 = vmax.f32 %v1911, 0.0
        %v1986 = vmax.f32 %v1914, 0.0
        %v1987 = vmax.f32 %v1919, 0.0
        %v1988 = vmax.f32 %v1922, 0.0
        %v1989 = vpack.c.bf16 %v1926, %v1925
        %v1990 = vpack.c.bf16 %v1928, %v1927
        %v1991 = vpack.c.bf16 %v1930, %v1929
        %v1992 = vpack.c.bf16 %v1932, %v1931
        %v1993 = vpack.c.bf16 %v1934, %v1933
        %v1994 = vpack.c.bf16 %v1936, %v1935
        %v1995 = vpack.c.bf16 %v1938, %v1937
        %v1996 = vpack.c.bf16 %v1940, %v1939
        %v1997 = vpack.c.bf16 %v1942, %v1941
        %v1998 = vpack.c.bf16 %v1944, %v1943
        %v1999 = vpack.c.bf16 %v1946, %v1945
        %v2000 = vpack.c.bf16 %v1948, %v1947
        %v2001 = vpack.c.bf16 %v1950, %v1949
        %v2002 = vpack.c.bf16 %v1952, %v1951
        %v2003 = vpack.c.bf16 %v1954, %v1953
        %v2004 = vpack.c.bf16 %v1956, %v1955
        %v2005 = vpack.c.bf16 %v1958, %v1957
        %v2006 = vpack.c.bf16 %v1960, %v1959
        %v2007 = vpack.c.bf16 %v1962, %v1961
        %v2008 = vpack.c.bf16 %v1964, %v1963
        %v2009 = vpack.c.bf16 %v1966, %v1965
        %v2010 = vpack.c.bf16 %v1968, %v1967
        %v2011 = vpack.c.bf16 %v1970, %v1969
        %v2012 = vpack.c.bf16 %v1972, %v1971
        %v2013 = vpack.c.bf16 %v1974, %v1973
        %v2014 = vpack.c.bf16 %v1976, %v1975
        %v2015 = vpack.c.bf16 %v1978, %v1977
        %v2016 = vpack.c.bf16 %v1980, %v1979
        %v2017 = vpack.c.bf16 %v1982, %v1981
        %v2018 = vpack.c.bf16 %v1984, %v1983
        %v2019 = vpack.c.bf16 %v1986, %v1985
        %v2020 = vpack.c.bf16 %v1988, %v1987
        %s2021 = scalar_lea.vmem [#allocation8], 64
        %v2022 = vld [vmem:[%s2021] sm:$0xf]
        %v2023 = vld [vmem:[%s2021 + $0x4] sm:$0xf]
        %v2024 = vld [vmem:[%s2021 + $0x8] sm:$0xf]
        %v2025 = vld [vmem:[%s2021 + $0xc] sm:$0xf]
        %v2026 = vld [vmem:[%s2021 + $0x10] sm:$0xf]
        %v2027 = vld [vmem:[%s2021 + $0x14] sm:$0xf]
        %v2028 = vld [vmem:[%s2021 + $0x18] sm:$0xf]
        %v2029 = vld [vmem:[%s2021 + $0x1c] sm:$0xf]
        %v2030 = vld [vmem:[%s2021 + $0x20] sm:$0xf]
        %v2031 = vld [vmem:[%s2021 + $0x24] sm:$0xf]
        %v2032 = vld [vmem:[%s2021 + $0x28] sm:$0xf]
        %v2033 = vld [vmem:[%s2021 + $0x2c] sm:$0xf]
        %v2034 = vld [vmem:[%s2021 + $0x30] sm:$0xf]
        %v2035 = vld [vmem:[%s2021 + $0x34] sm:$0xf]
        %v2036 = vld [vmem:[%s2021 + $0x38] sm:$0xf]
        %v2037 = vld [vmem:[%s2021 + $0x3c] sm:$0xf]
        %s2038 = scalar_lea.vmem %s5, 2
        %v2039 = vld [vmem:[%s2038] sm:$0x1]
        %v2041 = vlaneseq
        %v2042 = vshrl.u32 %v2041, 7
        %v2043 = vsub.s32 0, %v2042
        %v2044 = vrot.slane %v2039, %v2043
        %v2062 = vunpack.c.l.b16 %v2022
        %v2063 = vunpack.c.l.b16 %v2023
        %v2064 = vunpack.c.l.b16 %v2024
        %v2065 = vunpack.c.l.b16 %v2025
        %v2066 = vunpack.c.l.b16 %v2026
        %v2067 = vunpack.c.l.b16 %v2027
        %v2068 = vunpack.c.l.b16 %v2028
        %v2069 = vunpack.c.l.b16 %v2029
        %v2070 = vunpack.c.l.b16 %v2030
        %v2071 = vunpack.c.l.b16 %v2031
        %v2072 = vunpack.c.l.b16 %v2032
        %v2073 = vunpack.c.l.b16 %v2033
        %v2074 = vunpack.c.l.b16 %v2034
        %v2075 = vunpack.c.l.b16 %v2035
        %v2076 = vunpack.c.l.b16 %v2036
        %v2077 = vunpack.c.l.b16 %v2037
        %v2078 = vpack.c.b16 %v2063, %v2062
        %v2079 = vpack.c.b16 %v2065, %v2064
        %v2080 = vpack.c.b16 %v2067, %v2066
        %v2081 = vpack.c.b16 %v2069, %v2068
        %v2082 = vpack.c.b16 %v2071, %v2070
        %v2083 = vpack.c.b16 %v2073, %v2072
        %v2084 = vpack.c.b16 %v2075, %v2074
        %v2085 = vpack.c.b16 %v2077, %v2076
        %2094 = vmatprep.subr.bf16.mxu0 0
        %2095 = vmatpush1.bf16.msra.mxu0 %v2078
        %2096 = vmatprep.subr.bf16.mxu0 0
        %2097 = vmatpush1.bf16.msra.mxu0 %v2079
        %2098 = vmatprep.subr.bf16.mxu0 0
        %2099 = vmatpush1.bf16.msra.mxu0 %v2080
        %2100 = vmatprep.subr.bf16.mxu0 0
        %2101 = vmatpush1.bf16.msra.mxu0 %v2081
        %2102 = vmatprep.subr.bf16.mxu0 0
        %2103 = vmatpush1.bf16.msra.mxu0 %v2082
        %2104 = vmatprep.subr.bf16.mxu0 0
        %2105 = vmatpush1.bf16.msra.mxu0 %v2083
        %2106 = vmatprep.subr.bf16.mxu0 0
        %2107 = vmatpush1.bf16.msra.mxu0 %v2084
        %2108 = vmatprep.subr.bf16.mxu0 0
        %2109 = vmatpush1.bf16.msra.mxu0 %v2085
        %2110 = vmatprep.subr.bf16.mxu0 0
        %2111 = vmatpush1.bf16.msra.mxu0 0
        %2112 = vmatprep.subr.bf16.mxu0 0
        %2113 = vmatpush1.bf16.msra.mxu0 0
        %2114 = vmatprep.subr.bf16.mxu0 0
        %2115 = vmatpush1.bf16.msra.mxu0 0
        %2116 = vmatprep.subr.bf16.mxu0 0
        %2117 = vmatpush1.bf16.msra.mxu0 0
        %2118 = vmatprep.subr.bf16.mxu0 0
        %2119 = vmatpush1.bf16.msra.mxu0 0
        %2120 = vmatprep.subr.bf16.mxu0 0
        %2121 = vmatpush1.bf16.msra.mxu0 0
        %2122 = vmatprep.subr.bf16.mxu0 0
        %2123 = vmatpush1.bf16.msra.mxu0 0
        %2124 = vmatprep.subr.bf16.mxu0 0
        %2125 = vmatpush1.bf16.msra.mxu0 0
        %2126 = vmatprep.mubr.bf16.mxu0 0
        %2127 = vmatmul.mubr.bf16.gmra.mrb[0].mxu0 %v1989
        %v2128 = vpop.f32.mrb[0].mxu0
        %v2129 = vadd.f32 %v2044, %v2128
        %v2130 = vpop.f32.mrb[0].mxu0
        %v2131 = vpop.f32.mrb[0].mxu0
        %v2132 = vadd.f32 %v2044, %v2131
        %v2133 = vpop.f32.mrb[0].mxu0
        %2134 = vmatprep.mubr.bf16.mxu0 0
        %2135 = vmatmul.mubr.bf16.gmra.mrb[0].mxu0 %v1990
        %v2136 = vpop.f32.mrb[0].mxu0
        %v2137 = vadd.f32 %v2044, %v2136
        %v2138 = vpop.f32.mrb[0].mxu0
        %v2139 = vpop.f32.mrb[0].mxu0
        %v2140 = vadd.f32 %v2044, %v2139
        %v2141 = vpop.f32.mrb[0].mxu0
        %2142 = vmatprep.mubr.bf16.mxu0 0
        %2143 = vmatmul.mubr.bf16.gmra.mrb[0].mxu0 %v1991
        %v2144 = vpop.f32.mrb[0].mxu0
        %v2145 = vadd.f32 %v2044, %v2144
        %v2146 = vpop.f32.mrb[0].mxu0
        %v2147 = vpop.f32.mrb[0].mxu0
        %v2148 = vadd.f32 %v2044, %v2147
        %v2149 = vpop.f32.mrb[0].mxu0
        %2150 = vmatprep.mubr.bf16.mxu0 0
        %2151 = vmatmul.mubr.bf16.gmra.mrb[0].mxu0 %v1992
        %v2152 = vpop.f32.mrb[0].mxu0
        %v2153 = vadd.f32 %v2044, %v2152
        %v2154 = vpop.f32.mrb[0].mxu0
        %v2155 = vpop.f32.mrb[0].mxu0
        %v2156 = vadd.f32 %v2044, %v2155
        %v2157 = vpop.f32.mrb[0].mxu0
        %2158 = vmatprep.mubr.bf16.mxu0 0
        %2159 = vmatmul.mubr.bf16.gmra.mrb[0].mxu0 %v1993
        %v2160 = vpop.f32.mrb[0].mxu0
        %v2161 = vadd.f32 %v2044, %v2160
        %v2162 = vpop.f32.mrb[0].mxu0
        %v2163 = vpop.f32.mrb[0].mxu0
        %v2164 = vadd.f32 %v2044, %v2163
        %v2165 = vpop.f32.mrb[0].mxu0
        %2166 = vmatprep.mubr.bf16.mxu0 0
        %2167 = vmatmul.mubr.bf16.gmra.mrb[0].mxu0 %v1994
        %v2168 = vpop.f32.mrb[0].mxu0
        %v2169 = vadd.f32 %v2044, %v2168
        %v2170 = vpop.f32.mrb[0].mxu0
        %v2171 = vpop.f32.mrb[0].mxu0
        %v2172 = vadd.f32 %v2044, %v2171
        %v2173 = vpop.f32.mrb[0].mxu0
        %2174 = vmatprep.mubr.bf16.mxu0 0
        %2175 = vmatmul.mubr.bf16.gmra.mrb[0].mxu0 %v1995
        %v2176 = vpop.f32.mrb[0].mxu0
        %v2177 = vadd.f32 %v2044, %v2176
        %v2178 = vpop.f32.mrb[0].mxu0
        %v2179 = vpop.f32.mrb[0].mxu0
        %v2180 = vadd.f32 %v2044, %v2179
        %v2181 = vpop.f32.mrb[0].mxu0
        %2182 = vmatprep.mubr.bf16.mxu0 0
        %2183 = vmatmul.mubr.bf16.gmra.mrb[0].mxu0 %v1996
        %v2184 = vpop.f32.mrb[0].mxu0
        %v2185 = vadd.f32 %v2044, %v2184
        %v2186 = vpop.f32.mrb[0].mxu0
        %v2187 = vpop.f32.mrb[0].mxu0
        %v2188 = vadd.f32 %v2044, %v2187
        %v2189 = vpop.f32.mrb[0].mxu0
        %2190 = vmatprep.mubr.bf16.mxu0 0
        %2191 = vmatmul.mubr.bf16.gmra.mrb[0].mxu0 %v1997
        %v2192 = vpop.f32.mrb[0].mxu0
        %v2193 = vadd.f32 %v2044, %v2192
        %v2194 = vpop.f32.mrb[0].mxu0
        %v2195 = vpop.f32.mrb[0].mxu0
        %v2196 = vadd.f32 %v2044, %v2195
        %v2197 = vpop.f32.mrb[0].mxu0
        %2198 = vmatprep.mubr.bf16.mxu0 0
        %2199 = vmatmul.mubr.bf16.gmra.mrb[0].mxu0 %v1998
        %v2200 = vpop.f32.mrb[0].mxu0
        %v2201 = vadd.f32 %v2044, %v2200
        %v2202 = vpop.f32.mrb[0].mxu0
        %v2203 = vpop.f32.mrb[0].mxu0
        %v2204 = vadd.f32 %v2044, %v2203
        %v2205 = vpop.f32.mrb[0].mxu0
        %2206 = vmatprep.mubr.bf16.mxu0 0
        %2207 = vmatmul.mubr.bf16.gmra.mrb[0].mxu0 %v1999
        %v2208 = vpop.f32.mrb[0].mxu0
        %v2209 = vadd.f32 %v2044, %v2208
        %v2210 = vpop.f32.mrb[0].mxu0
        %v2211 = vpop.f32.mrb[0].mxu0
        %v2212 = vadd.f32 %v2044, %v2211
        %v2213 = vpop.f32.mrb[0].mxu0
        %2214 = vmatprep.mubr.bf16.mxu0 0
        %2215 = vmatmul.mubr.bf16.gmra.mrb[0].mxu0 %v2000
        %v2216 = vpop.f32.mrb[0].mxu0
        %v2217 = vadd.f32 %v2044, %v2216
        %v2218 = vpop.f32.mrb[0].mxu0
        %v2219 = vpop.f32.mrb[0].mxu0
        %v2220 = vadd.f32 %v2044, %v2219
        %v2221 = vpop.f32.mrb[0].mxu0
        %2222 = vmatprep.mubr.bf16.mxu0 0
        %2223 = vmatmul.mubr.bf16.gmra.mrb[0].mxu0 %v2001
        %v2224 = vpop.f32.mrb[0].mxu0
        %v2225 = vadd.f32 %v2044, %v2224
        %v2226 = vpop.f32.mrb[0].mxu0
        %v2227 = vpop.f32.mrb[0].mxu0
        %v2228 = vadd.f32 %v2044, %v2227
        %v2229 = vpop.f32.mrb[0].mxu0
        %2230 = vmatprep.mubr.bf16.mxu0 0
        %2231 = vmatmul.mubr.bf16.gmra.mrb[0].mxu0 %v2002
        %v2232 = vpop.f32.mrb[0].mxu0
        %v2233 = vadd.f32 %v2044, %v2232
        %v2234 = vpop.f32.mrb[0].mxu0
        %v2235 = vpop.f32.mrb[0].mxu0
        %v2236 = vadd.f32 %v2044, %v2235
        %v2237 = vpop.f32.mrb[0].mxu0
        %2238 = vmatprep.mubr.bf16.mxu0 0
        %2239 = vmatmul.mubr.bf16.gmra.mrb[0].mxu0 %v2003
        %v2240 = vpop.f32.mrb[0].mxu0
        %v2241 = vadd.f32 %v2044, %v2240
        %v2242 = vpop.f32.mrb[0].mxu0
        %v2243 = vpop.f32.mrb[0].mxu0
        %v2244 = vadd.f32 %v2044, %v2243
        %v2245 = vpop.f32.mrb[0].mxu0
        %2246 = vmatprep.mubr.bf16.mxu0 0
        %2247 = vmatmul.mubr.bf16.gmra.mrb[0].mxu0 %v2004
        %v2248 = vpop.f32.mrb[0].mxu0
        %v2249 = vadd.f32 %v2044, %v2248
        %v2250 = vpop.f32.mrb[0].mxu0
        %v2251 = vpop.f32.mrb[0].mxu0
        %v2252 = vadd.f32 %v2044, %v2251
        %v2253 = vpop.f32.mrb[0].mxu0
        %2254 = vmatprep.mubr.bf16.mxu0 0
        %2255 = vmatmul.mubr.bf16.gmra.mrb[0].mxu0 %v2005
        %v2256 = vpop.f32.mrb[0].mxu0
        %v2257 = vadd.f32 %v2044, %v2256
        %v2258 = vpop.f32.mrb[0].mxu0
        %v2259 = vpop.f32.mrb[0].mxu0
        %v2260 = vadd.f32 %v2044, %v2259
        %v2261 = vpop.f32.mrb[0].mxu0
        %2262 = vmatprep.mubr.bf16.mxu0 0
        %2263 = vmatmul.mubr.bf16.gmra.mrb[0].mxu0 %v2006
        %v2264 = vpop.f32.mrb[0].mxu0
        %v2265 = vadd.f32 %v2044, %v2264
        %v2266 = vpop.f32.mrb[0].mxu0
        %v2267 = vpop.f32.mrb[0].mxu0
        %v2268 = vadd.f32 %v2044, %v2267
        %v2269 = vpop.f32.mrb[0].mxu0
        %2270 = vmatprep.mubr.bf16.mxu0 0
        %2271 = vmatmul.mubr.bf16.gmra.mrb[0].mxu0 %v2007
        %v2272 = vpop.f32.mrb[0].mxu0
        %v2273 = vadd.f32 %v2044, %v2272
        %v2274 = vpop.f32.mrb[0].mxu0
        %v2275 = vpop.f32.mrb[0].mxu0
        %v2276 = vadd.f32 %v2044, %v2275
        %v2277 = vpop.f32.mrb[0].mxu0
        %2278 = vmatprep.mubr.bf16.mxu0 0
        %2279 = vmatmul.mubr.bf16.gmra.mrb[0].mxu0 %v2008
        %v2280 = vpop.f32.mrb[0].mxu0
        %v2281 = vadd.f32 %v2044, %v2280
        %v2282 = vpop.f32.mrb[0].mxu0
        %v2283 = vpop.f32.mrb[0].mxu0
        %v2284 = vadd.f32 %v2044, %v2283
        %v2285 = vpop.f32.mrb[0].mxu0
        %2286 = vmatprep.mubr.bf16.mxu0 0
        %2287 = vmatmul.mubr.bf16.gmra.mrb[0].mxu0 %v2009
        %v2288 = vpop.f32.mrb[0].mxu0
        %v2289 = vadd.f32 %v2044, %v2288
        %v2290 = vpop.f32.mrb[0].mxu0
        %v2291 = vpop.f32.mrb[0].mxu0
        %v2292 = vadd.f32 %v2044, %v2291
        %v2293 = vpop.f32.mrb[0].mxu0
        %2294 = vmatprep.mubr.bf16.mxu0 0
        %2295 = vmatmul.mubr.bf16.gmra.mrb[0].mxu0 %v2010
        %v2296 = vpop.f32.mrb[0].mxu0
        %v2297 = vadd.f32 %v2044, %v2296
        %v2298 = vpop.f32.mrb[0].mxu0
        %v2299 = vpop.f32.mrb[0].mxu0
        %v2300 = vadd.f32 %v2044, %v2299
        %v2301 = vpop.f32.mrb[0].mxu0
        %2302 = vmatprep.mubr.bf16.mxu0 0
        %2303 = vmatmul.mubr.bf16.gmra.mrb[0].mxu0 %v2011
        %v2304 = vpop.f32.mrb[0].mxu0
        %v2305 = vadd.f32 %v2044, %v2304
        %v2306 = vpop.f32.mrb[0].mxu0
        %v2307 = vpop.f32.mrb[0].mxu0
        %v2308 = vadd.f32 %v2044, %v2307
        %v2309 = vpop.f32.mrb[0].mxu0
        %2310 = vmatprep.mubr.bf16.mxu0 0
        %2311 = vmatmul.mubr.bf16.gmra.mrb[0].mxu0 %v2012
        %v2312 = vpop.f32.mrb[0].mxu0
        %v2313 = vadd.f32 %v2044, %v2312
        %v2314 = vpop.f32.mrb[0].mxu0
        %v2315 = vpop.f32.mrb[0].mxu0
        %v2316 = vadd.f32 %v2044, %v2315
        %v2317 = vpop.f32.mrb[0].mxu0
        %2318 = vmatprep.mubr.bf16.mxu0 0
        %2319 = vmatmul.mubr.bf16.gmra.mrb[0].mxu0 %v2013
        %v2320 = vpop.f32.mrb[0].mxu0
        %v2321 = vadd.f32 %v2044, %v2320
        %v2322 = vpop.f32.mrb[0].mxu0
        %v2323 = vpop.f32.mrb[0].mxu0
        %v2324 = vadd.f32 %v2044, %v2323
        %v2325 = vpop.f32.mrb[0].mxu0
        %2326 = vmatprep.mubr.bf16.mxu0 0
        %2327 = vmatmul.mubr.bf16.gmra.mrb[0].mxu0 %v2014
        %v2328 = vpop.f32.mrb[0].mxu0
        %v2329 = vadd.f32 %v2044, %v2328
        %v2330 = vpop.f32.mrb[0].mxu0
        %v2331 = vpop.f32.mrb[0].mxu0
        %v2332 = vadd.f32 %v2044, %v2331
        %v2333 = vpop.f32.mrb[0].mxu0
        %2334 = vmatprep.mubr.bf16.mxu0 0
        %2335 = vmatmul.mubr.bf16.gmra.mrb[0].mxu0 %v2015
        %v2336 = vpop.f32.mrb[0].mxu0
        %v2337 = vadd.f32 %v2044, %v2336
        %v2338 = vpop.f32.mrb[0].mxu0
        %v2339 = vpop.f32.mrb[0].mxu0
        %v2340 = vadd.f32 %v2044, %v2339
        %v2341 = vpop.f32.mrb[0].mxu0
        %2342 = vmatprep.mubr.bf16.mxu0 0
        %2343 = vmatmul.mubr.bf16.gmra.mrb[0].mxu0 %v2016
        %v2344 = vpop.f32.mrb[0].mxu0
        %v2345 = vadd.f32 %v2044, %v2344
        %v2346 = vpop.f32.mrb[0].mxu0
        %v2347 = vpop.f32.mrb[0].mxu0
        %v2348 = vadd.f32 %v2044, %v2347
        %v2349 = vpop.f32.mrb[0].mxu0
        %2350 = vmatprep.mubr.bf16.mxu0 0
        %2351 = vmatmul.mubr.bf16.gmra.mrb[0].mxu0 %v2017
        %v2352 = vpop.f32.mrb[0].mxu0
        %v2353 = vadd.f32 %v2044, %v2352
        %v2354 = vpop.f32.mrb[0].mxu0
        %v2355 = vpop.f32.mrb[0].mxu0
        %v2356 = vadd.f32 %v2044, %v2355
        %v2357 = vpop.f32.mrb[0].mxu0
        %2358 = vmatprep.mubr.bf16.mxu0 0
        %2359 = vmatmul.mubr.bf16.gmra.mrb[0].mxu0 %v2018
        %v2360 = vpop.f32.mrb[0].mxu0
        %v2361 = vadd.f32 %v2044, %v2360
        %v2362 = vpop.f32.mrb[0].mxu0
        %v2363 = vpop.f32.mrb[0].mxu0
        %v2364 = vadd.f32 %v2044, %v2363
        %v2365 = vpop.f32.mrb[0].mxu0
        %2366 = vmatprep.mubr.bf16.mxu0 0
        %2367 = vmatmul.mubr.bf16.gmra.mrb[0].mxu0 %v2019
        %v2368 = vpop.f32.mrb[0].mxu0
        %v2369 = vadd.f32 %v2044, %v2368
        %v2370 = vpop.f32.mrb[0].mxu0
        %v2371 = vpop.f32.mrb[0].mxu0
        %v2372 = vadd.f32 %v2044, %v2371
        %v2373 = vpop.f32.mrb[0].mxu0
        %2374 = vmatprep.mubr.bf16.mxu0 0
        %2375 = vmatmul.mubr.bf16.gmra.mrb[0].mxu0 %v2020
        %v2376 = vpop.f32.mrb[0].mxu0
        %v2377 = vadd.f32 %v2044, %v2376
        %v2378 = vpop.f32.mrb[0].mxu0
        %v2379 = vpop.f32.mrb[0].mxu0
        %v2380 = vadd.f32 %v2044, %v2379
        %v2381 = vpop.f32.mrb[0].mxu0
        %2382 = vdwg.mxu0
        %v2383 = vmax.f32 %v2129, 0.0
        %v2384 = vmax.f32 %v2132, 0.0
        %v2385 = vmax.f32 %v2137, 0.0
        %v2386 = vmax.f32 %v2140, 0.0
        %v2387 = vmax.f32 %v2145, 0.0
        %v2388 = vmax.f32 %v2148, 0.0
        %v2389 = vmax.f32 %v2153, 0.0
        %v2390 = vmax.f32 %v2156, 0.0
        %v2391 = vmax.f32 %v2161, 0.0
        %v2392 = vmax.f32 %v2164, 0.0
        %v2393 = vmax.f32 %v2169, 0.0
        %v2394 = vmax.f32 %v2172, 0.0
        %v2395 = vmax.f32 %v2177, 0.0
        %v2396 = vmax.f32 %v2180, 0.0
        %v2397 = vmax.f32 %v2185, 0.0
        %v2398 = vmax.f32 %v2188, 0.0
        %v2399 = vmax.f32 %v2193, 0.0
        %v2400 = vmax.f32 %v2196, 0.0
        %v2401 = vmax.f32 %v2201, 0.0
        %v2402 = vmax.f32 %v2204, 0.0
        %v2403 = vmax.f32 %v2209, 0.0
        %v2404 = vmax.f32 %v2212, 0.0
        %v2405 = vmax.f32 %v2217, 0.0
        %v2406 = vmax.f32 %v2220, 0.0
        %v2407 = vmax.f32 %v2225, 0.0
        %v2408 = vmax.f32 %v2228, 0.0
        %v2409 = vmax.f32 %v2233, 0.0
        %v2410 = vmax.f32 %v2236, 0.0
        %v2411 = vmax.f32 %v2241, 0.0
        %v2412 = vmax.f32 %v2244, 0.0
        %v2413 = vmax.f32 %v2249, 0.0
        %v2414 = vmax.f32 %v2252, 0.0
        %v2415 = vmax.f32 %v2257, 0.0
        %v2416 = vmax.f32 %v2260, 0.0
        %v2417 = vmax.f32 %v2265, 0.0
        %v2418 = vmax.f32 %v2268, 0.0
        %v2419 = vmax.f32 %v2273, 0.0
        %v2420 = vmax.f32 %v2276, 0.0
        %v2421 = vmax.f32 %v2281, 0.0
        %v2422 = vmax.f32 %v2284, 0.0
        %v2423 = vmax.f32 %v2289, 0.0
        %v2424 = vmax.f32 %v2292, 0.0
        %v2425 = vmax.f32 %v2297, 0.0
        %v2426 = vmax.f32 %v2300, 0.0
        %v2427 = vmax.f32 %v2305, 0.0
        %v2428 = vmax.f32 %v2308, 0.0
        %v2429 = vmax.f32 %v2313, 0.0
        %v2430 = vmax.f32 %v2316, 0.0
        %v2431 = vmax.f32 %v2321, 0.0
        %v2432 = vmax.f32 %v2324, 0.0
        %v2433 = vmax.f32 %v2329, 0.0
        %v2434 = vmax.f32 %v2332, 0.0
        %v2435 = vmax.f32 %v2337, 0.0
        %v2436 = vmax.f32 %v2340, 0.0
        %v2437 = vmax.f32 %v2345, 0.0
        %v2438 = vmax.f32 %v2348, 0.0
        %v2439 = vmax.f32 %v2353, 0.0
        %v2440 = vmax.f32 %v2356, 0.0
        %v2441 = vmax.f32 %v2361, 0.0
        %v2442 = vmax.f32 %v2364, 0.0
        %v2443 = vmax.f32 %v2369, 0.0
        %v2444 = vmax.f32 %v2372, 0.0
        %v2445 = vmax.f32 %v2377, 0.0
        %v2446 = vmax.f32 %v2380, 0.0
        %v2447 = vadd.f32 %v2383, %v1468
        %v2448 = vadd.f32 %v2384, %v1469
        %v2449 = vadd.f32 %v2385, %v1470
        %v2450 = vadd.f32 %v2386, %v1471
        %v2451 = vadd.f32 %v2387, %v1472
        %v2452 = vadd.f32 %v2388, %v1473
        %v2453 = vadd.f32 %v2389, %v1474
        %v2454 = vadd.f32 %v2390, %v1475
        %v2455 = vadd.f32 %v2391, %v1476
        %v2456 = vadd.f32 %v2392, %v1477
        %v2457 = vadd.f32 %v2393, %v1478
        %v2458 = vadd.f32 %v2394, %v1479
        %v2459 = vadd.f32 %v2395, %v1480
        %v2460 = vadd.f32 %v2396, %v1481
        %v2461 = vadd.f32 %v2397, %v1482
        %v2462 = vadd.f32 %v2398, %v1483
        %v2463 = vadd.f32 %v2399, %v1484
        %v2464 = vadd.f32 %v2400, %v1485
        %v2465 = vadd.f32 %v2401, %v1486
        %v2466 = vadd.f32 %v2402, %v1487
        %v2467 = vadd.f32 %v2403, %v1488
        %v2468 = vadd.f32 %v2404, %v1489
        %v2469 = vadd.f32 %v2405, %v1490
        %v2470 = vadd.f32 %v2406, %v1491
        %v2471 = vadd.f32 %v2407, %v1492
        %v2472 = vadd.f32 %v2408, %v1493
        %v2473 = vadd.f32 %v2409, %v1494
        %v2474 = vadd.f32 %v2410, %v1495
        %v2475 = vadd.f32 %v2411, %v1496
        %v2476 = vadd.f32 %v2412, %v1497
        %v2477 = vadd.f32 %v2413, %v1498
        %v2478 = vadd.f32 %v2414, %v1499
        %v2479 = vadd.f32 %v2415, %v1500
        %v2480 = vadd.f32 %v2416, %v1501
        %v2481 = vadd.f32 %v2417, %v1502
        %v2482 = vadd.f32 %v2418, %v1503
        %v2483 = vadd.f32 %v2419, %v1504
        %v2484 = vadd.f32 %v2420, %v1505
        %v2485 = vadd.f32 %v2421, %v1506
        %v2486 = vadd.f32 %v2422, %v1507
        %v2487 = vadd.f32 %v2423, %v1508
        %v2488 = vadd.f32 %v2424, %v1509
        %v2489 = vadd.f32 %v2425, %v1510
        %v2490 = vadd.f32 %v2426, %v1511
        %v2491 = vadd.f32 %v2427, %v1512
        %v2492 = vadd.f32 %v2428, %v1513
        %v2493 = vadd.f32 %v2429, %v1514
        %v2494 = vadd.f32 %v2430, %v1515
        %v2495 = vadd.f32 %v2431, %v1516
        %v2496 = vadd.f32 %v2432, %v1517
        %v2497 = vadd.f32 %v2433, %v1518
        %v2498 = vadd.f32 %v2434, %v1519
        %v2499 = vadd.f32 %v2435, %v1520
        %v2500 = vadd.f32 %v2436, %v1521
        %v2501 = vadd.f32 %v2437, %v1522
        %v2502 = vadd.f32 %v2438, %v1523
        %v2503 = vadd.f32 %v2439, %v1524
        %v2504 = vadd.f32 %v2440, %v1525
        %v2505 = vadd.f32 %v2441, %v1526
        %v2506 = vadd.f32 %v2442, %v1527
        %v2507 = vadd.f32 %v2443, %v1528
        %v2508 = vadd.f32 %v2444, %v1529
        %v2509 = vadd.f32 %v2445, %v1530
        %v2510 = vadd.f32 %v2446, %v1531
        %v2511 = vpack.c.bf16 %v2448, %v2447
        %v2512 = vpack.c.bf16 %v2450, %v2449
        %v2513 = vpack.c.bf16 %v2452, %v2451
        %v2514 = vpack.c.bf16 %v2454, %v2453
        %v2515 = vpack.c.bf16 %v2456, %v2455
        %v2516 = vpack.c.bf16 %v2458, %v2457
        %v2517 = vpack.c.bf16 %v2460, %v2459
        %v2518 = vpack.c.bf16 %v2462, %v2461
        %v2519 = vpack.c.bf16 %v2464, %v2463
        %v2520 = vpack.c.bf16 %v2466, %v2465
        %v2521 = vpack.c.bf16 %v2468, %v2467
        %v2522 = vpack.c.bf16 %v2470, %v2469
        %v2523 = vpack.c.bf16 %v2472, %v2471
        %v2524 = vpack.c.bf16 %v2474, %v2473
        %v2525 = vpack.c.bf16 %v2476, %v2475
        %v2526 = vpack.c.bf16 %v2478, %v2477
        %v2527 = vpack.c.bf16 %v2480, %v2479
        %v2528 = vpack.c.bf16 %v2482, %v2481
        %v2529 = vpack.c.bf16 %v2484, %v2483
        %v2530 = vpack.c.bf16 %v2486, %v2485
        %v2531 = vpack.c.bf16 %v2488, %v2487
        %v2532 = vpack.c.bf16 %v2490, %v2489
        %v2533 = vpack.c.bf16 %v2492, %v2491
        %v2534 = vpack.c.bf16 %v2494, %v2493
        %v2535 = vpack.c.bf16 %v2496, %v2495
        %v2536 = vpack.c.bf16 %v2498, %v2497
        %v2537 = vpack.c.bf16 %v2500, %v2499
        %v2538 = vpack.c.bf16 %v2502, %v2501
        %v2539 = vpack.c.bf16 %v2504, %v2503
        %v2540 = vpack.c.bf16 %v2506, %v2505
        %v2541 = vpack.c.bf16 %v2508, %v2507
        %v2542 = vpack.c.bf16 %v2510, %v2509
        %s2543 = scalar_lea.vmem [#allocation8], 128
        %v2544 = vld [vmem:[%s2543] sm:$0xf]
        %v2545 = vld [vmem:[%s2543 + $0x4] sm:$0xf]
        %v2546 = vld [vmem:[%s2543 + $0x8] sm:$0xf]
        %v2547 = vld [vmem:[%s2543 + $0xc] sm:$0xf]
        %v2548 = vld [vmem:[%s2543 + $0x10] sm:$0xf]
        %v2549 = vld [vmem:[%s2543 + $0x14] sm:$0xf]
        %v2550 = vld [vmem:[%s2543 + $0x18] sm:$0xf]
        %v2551 = vld [vmem:[%s2543 + $0x1c] sm:$0xf]
        %v2552 = vld [vmem:[%s2543 + $0x20] sm:$0xf]
        %v2553 = vld [vmem:[%s2543 + $0x24] sm:$0xf]
        %v2554 = vld [vmem:[%s2543 + $0x28] sm:$0xf]
        %v2555 = vld [vmem:[%s2543 + $0x2c] sm:$0xf]
        %v2556 = vld [vmem:[%s2543 + $0x30] sm:$0xf]
        %v2557 = vld [vmem:[%s2543 + $0x34] sm:$0xf]
        %v2558 = vld [vmem:[%s2543 + $0x38] sm:$0xf]
        %v2559 = vld [vmem:[%s2543 + $0x3c] sm:$0xf]
        %s2560 = scalar_lea.vmem %s5, 4
        %v2561 = vld [vmem:[%s2560] sm:$0x1]
        %v2563 = vlaneseq
        %v2564 = vshrl.u32 %v2563, 7
        %v2565 = vsub.s32 0, %v2564
        %v2566 = vrot.slane %v2561, %v2565
        %v2584 = vunpack.c.l.b16 %v2544
        %v2585 = vunpack.c.l.b16 %v2545
        %v2586 = vunpack.c.l.b16 %v2546
        %v2587 = vunpack.c.l.b16 %v2547
        %v2588 = vunpack.c.l.b16 %v2548
        %v2589 = vunpack.c.l.b16 %v2549
        %v2590 = vunpack.c.l.b16 %v2550
        %v2591 = vunpack.c.l.b16 %v2551
        %v2592 = vunpack.c.l.b16 %v2552
        %v2593 = vunpack.c.l.b16 %v2553
        %v2594 = vunpack.c.l.b16 %v2554
        %v2595 = vunpack.c.l.b16 %v2555
        %v2596 = vunpack.c.l.b16 %v2556
        %v2597 = vunpack.c.l.b16 %v2557
        %v2598 = vunpack.c.l.b16 %v2558
        %v2599 = vunpack.c.l.b16 %v2559
        %v2600 = vpack.c.b16 %v2585, %v2584
        %v2601 = vpack.c.b16 %v2587, %v2586
        %v2602 = vpack.c.b16 %v2589, %v2588
        %v2603 = vpack.c.b16 %v2591, %v2590
        %v2604 = vpack.c.b16 %v2593, %v2592
        %v2605 = vpack.c.b16 %v2595, %v2594
        %v2606 = vpack.c.b16 %v2597, %v2596
        %v2607 = vpack.c.b16 %v2599, %v2598
        %2616 = vmatprep.subr.bf16.mxu0 0
        %2617 = vmatpush1.bf16.msra.mxu0 %v2600
        %2618 = vmatprep.subr.bf16.mxu0 0
        %2619 = vmatpush1.bf16.msra.mxu0 %v2601
        %2620 = vmatprep.subr.bf16.mxu0 0
        %2621 = vmatpush1.bf16.msra.mxu0 %v2602
        %2622 = vmatprep.subr.bf16.mxu0 0
        %2623 = vmatpush1.bf16.msra.mxu0 %v2603
        %2624 = vmatprep.subr.bf16.mxu0 0
        %2625 = vmatpush1.bf16.msra.mxu0 %v2604
        %2626 = vmatprep.subr.bf16.mxu0 0
        %2627 = vmatpush1.bf16.msra.mxu0 %v2605
        %2628 = vmatprep.subr.bf16.mxu0 0
        %2629 = vmatpush1.bf16.msra.mxu0 %v2606
        %2630 = vmatprep.subr.bf16.mxu0 0
        %2631 = vmatpush1.bf16.msra.mxu0 %v2607
        %2632 = vmatprep.subr.bf16.mxu0 0
        %2633 = vmatpush1.bf16.msra.mxu0 0
        %2634 = vmatprep.subr.bf16.mxu0 0
        %2635 = vmatpush1.bf16.msra.mxu0 0
        %2636 = vmatprep.subr.bf16.mxu0 0
        %2637 = vmatpush1.bf16.msra.mxu0 0
        %2638 = vmatprep.subr.bf16.mxu0 0
        %2639 = vmatpush1.bf16.msra.mxu0 0
        %2640 = vmatprep.subr.bf16.mxu0 0
        %2641 = vmatpush1.bf16.msra.mxu0 0
        %2642 = vmatprep.subr.bf16.mxu0 0
        %2643 = vmatpush1.bf16.msra.mxu0 0
        %2644 = vmatprep.subr.bf16.mxu0 0
        %2645 = vmatpush1.bf16.msra.mxu0 0
        %2646 = vmatprep.subr.bf16.mxu0 0
        %2647 = vmatpush1.bf16.msra.mxu0 0
        %2648 = vmatprep.mubr.bf16.mxu0 0
        %2649 = vmatmul.mubr.bf16.gmra.mrb[0].mxu0 %v2511
        %v2650 = vpop.f32.mrb[0].mxu0
        %v2651 = vadd.f32 %v2566, %v2650
        %v2652 = vpop.f32.mrb[0].mxu0
        %v2653 = vpop.f32.mrb[0].mxu0
        %v2654 = vadd.f32 %v2566, %v2653
        %v2655 = vpop.f32.mrb[0].mxu0
        %2656 = vmatprep.mubr.bf16.mxu0 0
        %2657 = vmatmul.mubr.bf16.gmra.mrb[0].mxu0 %v2512
        %v2658 = vpop.f32.mrb[0].mxu0
        %v2659 = vadd.f32 %v2566, %v2658
        %v2660 = vpop.f32.mrb[0].mxu0
        %v2661 = vpop.f32.mrb[0].mxu0
        %v2662 = vadd.f32 %v2566, %v2661
        %v2663 = vpop.f32.mrb[0].mxu0
        %2664 = vmatprep.mubr.bf16.mxu0 0
        %2665 = vmatmul.mubr.bf16.gmra.mrb[0].mxu0 %v2513
        %v2666 = vpop.f32.mrb[0].mxu0
        %v2667 = vadd.f32 %v2566, %v2666
        %v2668 = vpop.f32.mrb[0].mxu0
        %v2669 = vpop.f32.mrb[0].mxu0
        %v2670 = vadd.f32 %v2566, %v2669
        %v2671 = vpop.f32.mrb[0].mxu0
        %2672 = vmatprep.mubr.bf16.mxu0 0
        %2673 = vmatmul.mubr.bf16.gmra.mrb[0].mxu0 %v2514
        %v2674 = vpop.f32.mrb[0].mxu0
        %v2675 = vadd.f32 %v2566, %v2674
        %v2676 = vpop.f32.mrb[0].mxu0
        %v2677 = vpop.f32.mrb[0].mxu0
        %v2678 = vadd.f32 %v2566, %v2677
        %v2679 = vpop.f32.mrb[0].mxu0
        %2680 = vmatprep.mubr.bf16.mxu0 0
        %2681 = vmatmul.mubr.bf16.gmra.mrb[0].mxu0 %v2515
        %v2682 = vpop.f32.mrb[0].mxu0
        %v2683 = vadd.f32 %v2566, %v2682
        %v2684 = vpop.f32.mrb[0].mxu0
        %v2685 = vpop.f32.mrb[0].mxu0
        %v2686 = vadd.f32 %v2566, %v2685
        %v2687 = vpop.f32.mrb[0].mxu0
        %2688 = vmatprep.mubr.bf16.mxu0 0
        %2689 = vmatmul.mubr.bf16.gmra.mrb[0].mxu0 %v2516
        %v2690 = vpop.f32.mrb[0].mxu0
        %v2691 = vadd.f32 %v2566, %v2690
        %v2692 = vpop.f32.mrb[0].mxu0
        %v2693 = vpop.f32.mrb[0].mxu0
        %v2694 = vadd.f32 %v2566, %v2693
        %v2695 = vpop.f32.mrb[0].mxu0
        %2696 = vmatprep.mubr.bf16.mxu0 0
        %2697 = vmatmul.mubr.bf16.gmra.mrb[0].mxu0 %v2517
        %v2698 = vpop.f32.mrb[0].mxu0
        %v2699 = vadd.f32 %v2566, %v2698
        %v2700 = vpop.f32.mrb[0].mxu0
        %v2701 = vpop.f32.mrb[0].mxu0
        %v2702 = vadd.f32 %v2566, %v2701
        %v2703 = vpop.f32.mrb[0].mxu0
        %2704 = vmatprep.mubr.bf16.mxu0 0
        %2705 = vmatmul.mubr.bf16.gmra.mrb[0].mxu0 %v2518
        %v2706 = vpop.f32.mrb[0].mxu0
        %v2707 = vadd.f32 %v2566, %v2706
        %v2708 = vpop.f32.mrb[0].mxu0
        %v2709 = vpop.f32.mrb[0].mxu0
        %v2710 = vadd.f32 %v2566, %v2709
        %v2711 = vpop.f32.mrb[0].mxu0
        %2712 = vmatprep.mubr.bf16.mxu0 0
        %2713 = vmatmul.mubr.bf16.gmra.mrb[0].mxu0 %v2519
        %v2714 = vpop.f32.mrb[0].mxu0
        %v2715 = vadd.f32 %v2566, %v2714
        %v2716 = vpop.f32.mrb[0].mxu0
        %v2717 = vpop.f32.mrb[0].mxu0
        %v2718 = vadd.f32 %v2566, %v2717
        %v2719 = vpop.f32.mrb[0].mxu0
        %2720 = vmatprep.mubr.bf16.mxu0 0
        %2721 = vmatmul.mubr.bf16.gmra.mrb[0].mxu0 %v2520
        %v2722 = vpop.f32.mrb[0].mxu0
        %v2723 = vadd.f32 %v2566, %v2722
        %v2724 = vpop.f32.mrb[0].mxu0
        %v2725 = vpop.f32.mrb[0].mxu0
        %v2726 = vadd.f32 %v2566, %v2725
        %v2727 = vpop.f32.mrb[0].mxu0
        %2728 = vmatprep.mubr.bf16.mxu0 0
        %2729 = vmatmul.mubr.bf16.gmra.mrb[0].mxu0 %v2521
        %v2730 = vpop.f32.mrb[0].mxu0
        %v2731 = vadd.f32 %v2566, %v2730
        %v2732 = vpop.f32.mrb[0].mxu0
        %v2733 = vpop.f32.mrb[0].mxu0
        %v2734 = vadd.f32 %v2566, %v2733
        %v2735 = vpop.f32.mrb[0].mxu0
        %2736 = vmatprep.mubr.bf16.mxu0 0
        %2737 = vmatmul.mubr.bf16.gmra.mrb[0].mxu0 %v2522
        %v2738 = vpop.f32.mrb[0].mxu0
        %v2739 = vadd.f32 %v2566, %v2738
        %v2740 = vpop.f32.mrb[0].mxu0
        %v2741 = vpop.f32.mrb[0].mxu0
        %v2742 = vadd.f32 %v2566, %v2741
        %v2743 = vpop.f32.mrb[0].mxu0
        %2744 = vmatprep.mubr.bf16.mxu0 0
        %2745 = vmatmul.mubr.bf16.gmra.mrb[0].mxu0 %v2523
        %v2746 = vpop.f32.mrb[0].mxu0
        %v2747 = vadd.f32 %v2566, %v2746
        %v2748 = vpop.f32.mrb[0].mxu0
        %v2749 = vpop.f32.mrb[0].mxu0
        %v2750 = vadd.f32 %v2566, %v2749
        %v2751 = vpop.f32.mrb[0].mxu0
        %2752 = vmatprep.mubr.bf16.mxu0 0
        %2753 = vmatmul.mubr.bf16.gmra.mrb[0].mxu0 %v2524
        %v2754 = vpop.f32.mrb[0].mxu0
        %v2755 = vadd.f32 %v2566, %v2754
        %v2756 = vpop.f32.mrb[0].mxu0
        %v2757 = vpop.f32.mrb[0].mxu0
        %v2758 = vadd.f32 %v2566, %v2757
        %v2759 = vpop.f32.mrb[0].mxu0
        %2760 = vmatprep.mubr.bf16.mxu0 0
        %2761 = vmatmul.mubr.bf16.gmra.mrb[0].mxu0 %v2525
        %v2762 = vpop.f32.mrb[0].mxu0
        %v2763 = vadd.f32 %v2566, %v2762
        %v2764 = vpop.f32.mrb[0].mxu0
        %v2765 = vpop.f32.mrb[0].mxu0
        %v2766 = vadd.f32 %v2566, %v2765
        %v2767 = vpop.f32.mrb[0].mxu0
        %2768 = vmatprep.mubr.bf16.mxu0 0
        %2769 = vmatmul.mubr.bf16.gmra.mrb[0].mxu0 %v2526
        %v2770 = vpop.f32.mrb[0].mxu0
        %v2771 = vadd.f32 %v2566, %v2770
        %v2772 = vpop.f32.mrb[0].mxu0
        %v2773 = vpop.f32.mrb[0].mxu0
        %v2774 = vadd.f32 %v2566, %v2773
        %v2775 = vpop.f32.mrb[0].mxu0
        %2776 = vmatprep.mubr.bf16.mxu0 0
        %2777 = vmatmul.mubr.bf16.gmra.mrb[0].mxu0 %v2527
        %v2778 = vpop.f32.mrb[0].mxu0
        %v2779 = vadd.f32 %v2566, %v2778
        %v2780 = vpop.f32.mrb[0].mxu0
        %v2781 = vpop.f32.mrb[0].mxu0
        %v2782 = vadd.f32 %v2566, %v2781
        %v2783 = vpop.f32.mrb[0].mxu0
        %2784 = vmatprep.mubr.bf16.mxu0 0
        %2785 = vmatmul.mubr.bf16.gmra.mrb[0].mxu0 %v2528
        %v2786 = vpop.f32.mrb[0].mxu0
        %v2787 = vadd.f32 %v2566, %v2786
        %v2788 = vpop.f32.mrb[0].mxu0
        %v2789 = vpop.f32.mrb[0].mxu0
        %v2790 = vadd.f32 %v2566, %v2789
        %v2791 = vpop.f32.mrb[0].mxu0
        %2792 = vmatprep.mubr.bf16.mxu0 0
        %2793 = vmatmul.mubr.bf16.gmra.mrb[0].mxu0 %v2529
        %v2794 = vpop.f32.mrb[0].mxu0
        %v2795 = vadd.f32 %v2566, %v2794
        %v2796 = vpop.f32.mrb[0].mxu0
        %v2797 = vpop.f32.mrb[0].mxu0
        %v2798 = vadd.f32 %v2566, %v2797
        %v2799 = vpop.f32.mrb[0].mxu0
        %2800 = vmatprep.mubr.bf16.mxu0 0
        %2801 = vmatmul.mubr.bf16.gmra.mrb[0].mxu0 %v2530
        %v2802 = vpop.f32.mrb[0].mxu0
        %v2803 = vadd.f32 %v2566, %v2802
        %v2804 = vpop.f32.mrb[0].mxu0
        %v2805 = vpop.f32.mrb[0].mxu0
        %v2806 = vadd.f32 %v2566, %v2805
        %v2807 = vpop.f32.mrb[0].mxu0
        %2808 = vmatprep.mubr.bf16.mxu0 0
        %2809 = vmatmul.mubr.bf16.gmra.mrb[0].mxu0 %v2531
        %v2810 = vpop.f32.mrb[0].mxu0
        %v2811 = vadd.f32 %v2566, %v2810
        %v2812 = vpop.f32.mrb[0].mxu0
        %v2813 = vpop.f32.mrb[0].mxu0
        %v2814 = vadd.f32 %v2566, %v2813
        %v2815 = vpop.f32.mrb[0].mxu0
        %2816 = vmatprep.mubr.bf16.mxu0 0
        %2817 = vmatmul.mubr.bf16.gmra.mrb[0].mxu0 %v2532
        %v2818 = vpop.f32.mrb[0].mxu0
        %v2819 = vadd.f32 %v2566, %v2818
        %v2820 = vpop.f32.mrb[0].mxu0
        %v2821 = vpop.f32.mrb[0].mxu0
        %v2822 = vadd.f32 %v2566, %v2821
        %v2823 = vpop.f32.mrb[0].mxu0
        %2824 = vmatprep.mubr.bf16.mxu0 0
        %2825 = vmatmul.mubr.bf16.gmra.mrb[0].mxu0 %v2533
        %v2826 = vpop.f32.mrb[0].mxu0
        %v2827 = vadd.f32 %v2566, %v2826
        %v2828 = vpop.f32.mrb[0].mxu0
        %v2829 = vpop.f32.mrb[0].mxu0
        %v2830 = vadd.f32 %v2566, %v2829
        %v2831 = vpop.f32.mrb[0].mxu0
        %2832 = vmatprep.mubr.bf16.mxu0 0
        %2833 = vmatmul.mubr.bf16.gmra.mrb[0].mxu0 %v2534
        %v2834 = vpop.f32.mrb[0].mxu0
        %v2835 = vadd.f32 %v2566, %v2834
        %v2836 = vpop.f32.mrb[0].mxu0
        %v2837 = vpop.f32.mrb[0].mxu0
        %v2838 = vadd.f32 %v2566, %v2837
        %v2839 = vpop.f32.mrb[0].mxu0
        %2840 = vmatprep.mubr.bf16.mxu0 0
        %2841 = vmatmul.mubr.bf16.gmra.mrb[0].mxu0 %v2535
        %v2842 = vpop.f32.mrb[0].mxu0
        %v2843 = vadd.f32 %v2566, %v2842
        %v2844 = vpop.f32.mrb[0].mxu0
        %v2845 = vpop.f32.mrb[0].mxu0
        %v2846 = vadd.f32 %v2566, %v2845
        %v2847 = vpop.f32.mrb[0].mxu0
        %2848 = vmatprep.mubr.bf16.mxu0 0
        %2849 = vmatmul.mubr.bf16.gmra.mrb[0].mxu0 %v2536
        %v2850 = vpop.f32.mrb[0].mxu0
        %v2851 = vadd.f32 %v2566, %v2850
        %v2852 = vpop.f32.mrb[0].mxu0
        %v2853 = vpop.f32.mrb[0].mxu0
        %v2854 = vadd.f32 %v2566, %v2853
        %v2855 = vpop.f32.mrb[0].mxu0
        %2856 = vmatprep.mubr.bf16.mxu0 0
        %2857 = vmatmul.mubr.bf16.gmra.mrb[0].mxu0 %v2537
        %v2858 = vpop.f32.mrb[0].mxu0
        %v2859 = vadd.f32 %v2566, %v2858
        %v2860 = vpop.f32.mrb[0].mxu0
        %v2861 = vpop.f32.mrb[0].mxu0
        %v2862 = vadd.f32 %v2566, %v2861
        %v2863 = vpop.f32.mrb[0].mxu0
        %2864 = vmatprep.mubr.bf16.mxu0 0
        %2865 = vmatmul.mubr.bf16.gmra.mrb[0].mxu0 %v2538
        %v2866 = vpop.f32.mrb[0].mxu0
        %v2867 = vadd.f32 %v2566, %v2866
        %v2868 = vpop.f32.mrb[0].mxu0
        %v2869 = vpop.f32.mrb[0].mxu0
        %v2870 = vadd.f32 %v2566, %v2869
        %v2871 = vpop.f32.mrb[0].mxu0
        %2872 = vmatprep.mubr.bf16.mxu0 0
        %2873 = vmatmul.mubr.bf16.gmra.mrb[0].mxu0 %v2539
        %v2874 = vpop.f32.mrb[0].mxu0
        %v2875 = vadd.f32 %v2566, %v2874
        %v2876 = vpop.f32.mrb[0].mxu0
        %v2877 = vpop.f32.mrb[0].mxu0
        %v2878 = vadd.f32 %v2566, %v2877
        %v2879 = vpop.f32.mrb[0].mxu0
        %2880 = vmatprep.mubr.bf16.mxu0 0
        %2881 = vmatmul.mubr.bf16.gmra.mrb[0].mxu0 %v2540
        %v2882 = vpop.f32.mrb[0].mxu0
        %v2883 = vadd.f32 %v2566, %v2882
        %v2884 = vpop.f32.mrb[0].mxu0
        %v2885 = vpop.f32.mrb[0].mxu0
        %v2886 = vadd.f32 %v2566, %v2885
        %v2887 = vpop.f32.mrb[0].mxu0
        %2888 = vmatprep.mubr.bf16.mxu0 0
        %2889 = vmatmul.mubr.bf16.gmra.mrb[0].mxu0 %v2541
        %v2890 = vpop.f32.mrb[0].mxu0
        %v2891 = vadd.f32 %v2566, %v2890
        %v2892 = vpop.f32.mrb[0].mxu0
        %v2893 = vpop.f32.mrb[0].mxu0
        %v2894 = vadd.f32 %v2566, %v2893
        %v2895 = vpop.f32.mrb[0].mxu0
        %2896 = vmatprep.mubr.bf16.mxu0 0
        %2897 = vmatmul.mubr.bf16.gmra.mrb[0].mxu0 %v2542
        %v2898 = vpop.f32.mrb[0].mxu0
        %v2899 = vadd.f32 %v2566, %v2898
        %v2900 = vpop.f32.mrb[0].mxu0
        %v2901 = vpop.f32.mrb[0].mxu0
        %v2902 = vadd.f32 %v2566, %v2901
        %v2903 = vpop.f32.mrb[0].mxu0
        %2904 = vdwg.mxu0
        %v2905 = vmax.f32 %v2651, 0.0
        %v2906 = vmax.f32 %v2654, 0.0
        %v2907 = vmax.f32 %v2659, 0.0
        %v2908 = vmax.f32 %v2662, 0.0
        %v2909 = vmax.f32 %v2667, 0.0
        %v2910 = vmax.f32 %v2670, 0.0
        %v2911 = vmax.f32 %v2675, 0.0
        %v2912 = vmax.f32 %v2678, 0.0
        %v2913 = vmax.f32 %v2683, 0.0
        %v2914 = vmax.f32 %v2686, 0.0
        %v2915 = vmax.f32 %v2691, 0.0
        %v2916 = vmax.f32 %v2694, 0.0
        %v2917 = vmax.f32 %v2699, 0.0
        %v2918 = vmax.f32 %v2702, 0.0
        %v2919 = vmax.f32 %v2707, 0.0
        %v2920 = vmax.f32 %v2710, 0.0
        %v2921 = vmax.f32 %v2715, 0.0
        %v2922 = vmax.f32 %v2718, 0.0
        %v2923 = vmax.f32 %v2723, 0.0
        %v2924 = vmax.f32 %v2726, 0.0
        %v2925 = vmax.f32 %v2731, 0.0
        %v2926 = vmax.f32 %v2734, 0.0
        %v2927 = vmax.f32 %v2739, 0.0
        %v2928 = vmax.f32 %v2742, 0.0
        %v2929 = vmax.f32 %v2747, 0.0
        %v2930 = vmax.f32 %v2750, 0.0
        %v2931 = vmax.f32 %v2755, 0.0
        %v2932 = vmax.f32 %v2758, 0.0
        %v2933 = vmax.f32 %v2763, 0.0
        %v2934 = vmax.f32 %v2766, 0.0
        %v2935 = vmax.f32 %v2771, 0.0
        %v2936 = vmax.f32 %v2774, 0.0
        %v2937 = vmax.f32 %v2779, 0.0
        %v2938 = vmax.f32 %v2782, 0.0
        %v2939 = vmax.f32 %v2787, 0.0
        %v2940 = vmax.f32 %v2790, 0.0
        %v2941 = vmax.f32 %v2795, 0.0
        %v2942 = vmax.f32 %v2798, 0.0
        %v2943 = vmax.f32 %v2803, 0.0
        %v2944 = vmax.f32 %v2806, 0.0
        %v2945 = vmax.f32 %v2811, 0.0
        %v2946 = vmax.f32 %v2814, 0.0
        %v2947 = vmax.f32 %v2819, 0.0
        %v2948 = vmax.f32 %v2822, 0.0
        %v2949 = vmax.f32 %v2827, 0.0
        %v2950 = vmax.f32 %v2830, 0.0
        %v2951 = vmax.f32 %v2835, 0.0
        %v2952 = vmax.f32 %v2838, 0.0
        %v2953 = vmax.f32 %v2843, 0.0
        %v2954 = vmax.f32 %v2846, 0.0
        %v2955 = vmax.f32 %v2851, 0.0
        %v2956 = vmax.f32 %v2854, 0.0
        %v2957 = vmax.f32 %v2859, 0.0
        %v2958 = vmax.f32 %v2862, 0.0
        %v2959 = vmax.f32 %v2867, 0.0
        %v2960 = vmax.f32 %v2870, 0.0
        %v2961 = vmax.f32 %v2875, 0.0
        %v2962 = vmax.f32 %v2878, 0.0
        %v2963 = vmax.f32 %v2883, 0.0
        %v2964 = vmax.f32 %v2886, 0.0
        %v2965 = vmax.f32 %v2891, 0.0
        %v2966 = vmax.f32 %v2894, 0.0
        %v2967 = vmax.f32 %v2899, 0.0
        %v2968 = vmax.f32 %v2902, 0.0
        %v2969 = vpack.c.bf16 %v2906, %v2905
        %v2970 = vpack.c.bf16 %v2908, %v2907
        %v2971 = vpack.c.bf16 %v2910, %v2909
        %v2972 = vpack.c.bf16 %v2912, %v2911
        %v2973 = vpack.c.bf16 %v2914, %v2913
        %v2974 = vpack.c.bf16 %v2916, %v2915
        %v2975 = vpack.c.bf16 %v2918, %v2917
        %v2976 = vpack.c.bf16 %v2920, %v2919
        %v2977 = vpack.c.bf16 %v2922, %v2921
        %v2978 = vpack.c.bf16 %v2924, %v2923
        %v2979 = vpack.c.bf16 %v2926, %v2925
        %v2980 = vpack.c.bf16 %v2928, %v2927
        %v2981 = vpack.c.bf16 %v2930, %v2929
        %v2982 = vpack.c.bf16 %v2932, %v2931
        %v2983 = vpack.c.bf16 %v2934, %v2933
        %v2984 = vpack.c.bf16 %v2936, %v2935
        %v2985 = vpack.c.bf16 %v2938, %v2937
        %v2986 = vpack.c.bf16 %v2940, %v2939
        %v2987 = vpack.c.bf16 %v2942, %v2941
        %v2988 = vpack.c.bf16 %v2944, %v2943
        %v2989 = vpack.c.bf16 %v2946, %v2945
        %v2990 = vpack.c.bf16 %v2948, %v2947
        %v2991 = vpack.c.bf16 %v2950, %v2949
        %v2992 = vpack.c.bf16 %v2952, %v2951
        %v2993 = vpack.c.bf16 %v2954, %v2953
        %v2994 = vpack.c.bf16 %v2956, %v2955
        %v2995 = vpack.c.bf16 %v2958, %v2957
        %v2996 = vpack.c.bf16 %v2960, %v2959
        %v2997 = vpack.c.bf16 %v2962, %v2961
        %v2998 = vpack.c.bf16 %v2964, %v2963
        %v2999 = vpack.c.bf16 %v2966, %v2965
        %v3000 = vpack.c.bf16 %v2968, %v2967
        %3001 = vst [vmem:[#allocation2] sm:$0xff] %v2969
        %3002 = vst [vmem:[#allocation2 + $0x10] sm:$0xff] %v2970
        %3003 = vst [vmem:[#allocation2 + $0x20] sm:$0xff] %v2971
        %3004 = vst [vmem:[#allocation2 + $0x30] sm:$0xff] %v2972
        %3005 = vst [vmem:[#allocation2 + $0x40] sm:$0xff] %v2973
        %3006 = vst [vmem:[#allocation2 + $0x50] sm:$0xff] %v2974
        %3007 = vst [vmem:[#allocation2 + $0x60] sm:$0xff] %v2975
        %3008 = vst [vmem:[#allocation2 + $0x70] sm:$0xff] %v2976
        %3009 = vst [vmem:[#allocation2 + $0x80] sm:$0xff] %v2977
        %3010 = vst [vmem:[#allocation2 + $0x90] sm:$0xff] %v2978
        %3011 = vst [vmem:[#allocation2 + $0xa0] sm:$0xff] %v2979
        %3012 = vst [vmem:[#allocation2 + $0xb0] sm:$0xff] %v2980
        %3013 = vst [vmem:[#allocation2 + $0xc0] sm:$0xff] %v2981
        %3014 = vst [vmem:[#allocation2 + $0xd0] sm:$0xff] %v2982
        %3015 = vst [vmem:[#allocation2 + $0xe0] sm:$0xff] %v2983
        %3016 = vst [vmem:[#allocation2 + $0xf0] sm:$0xff] %v2984
        %3017 = vst [vmem:[#allocation2 + $0x100] sm:$0xff] %v2985
        %3018 = vst [vmem:[#allocation2 + $0x110] sm:$0xff] %v2986
        %3019 = vst [vmem:[#allocation2 + $0x120] sm:$0xff] %v2987
        %3020 = vst [vmem:[#allocation2 + $0x130] sm:$0xff] %v2988
        %3021 = vst [vmem:[#allocation2 + $0x140] sm:$0xff] %v2989
        %3022 = vst [vmem:[#allocation2 + $0x150] sm:$0xff] %v2990
        %3023 = vst [vmem:[#allocation2 + $0x160] sm:$0xff] %v2991
        %3024 = vst [vmem:[#allocation2 + $0x170] sm:$0xff] %v2992
        %3025 = vst [vmem:[#allocation2 + $0x180] sm:$0xff] %v2993
        %3026 = vst [vmem:[#allocation2 + $0x190] sm:$0xff] %v2994
        %3027 = vst [vmem:[#allocation2 + $0x1a0] sm:$0xff] %v2995
        %3028 = vst [vmem:[#allocation2 + $0x1b0] sm:$0xff] %v2996
        %3029 = vst [vmem:[#allocation2 + $0x1c0] sm:$0xff] %v2997
        %3030 = vst [vmem:[#allocation2 + $0x1d0] sm:$0xff] %v2998
        %3031 = vst [vmem:[#allocation2 + $0x1e0] sm:$0xff] %v2999
        %3032 = vst [vmem:[#allocation2 + $0x1f0] sm:$0xff] %v3000
        %v3033 = vld [vmem:[#allocation2] sm:$0xff]
        %v3034 = vld [vmem:[#allocation2 + $0x8] sm:$0xff]
        %v3035 = vld [vmem:[#allocation2 + $0x10] sm:$0xff]
        %v3036 = vld [vmem:[#allocation2 + $0x18] sm:$0xff]
        %v3037 = vld [vmem:[#allocation2 + $0x20] sm:$0xff]
        %v3038 = vld [vmem:[#allocation2 + $0x28] sm:$0xff]
        %v3039 = vld [vmem:[#allocation2 + $0x30] sm:$0xff]
        %v3040 = vld [vmem:[#allocation2 + $0x38] sm:$0xff]
        %v3041 = vld [vmem:[#allocation2 + $0x40] sm:$0xff]
        %v3042 = vld [vmem:[#allocation2 + $0x48] sm:$0xff]
        %v3043 = vld [vmem:[#allocation2 + $0x50] sm:$0xff]
        %v3044 = vld [vmem:[#allocation2 + $0x58] sm:$0xff]
        %v3045 = vld [vmem:[#allocation2 + $0x60] sm:$0xff]
        %v3046 = vld [vmem:[#allocation2 + $0x68] sm:$0xff]
        %v3047 = vld [vmem:[#allocation2 + $0x70] sm:$0xff]
        %v3048 = vld [vmem:[#allocation2 + $0x78] sm:$0xff]
        %v3049 = vld [vmem:[#allocation2 + $0x80] sm:$0xff]
        %v3050 = vld [vmem:[#allocation2 + $0x88] sm:$0xff]
        %v3051 = vld [vmem:[#allocation2 + $0x90] sm:$0xff]
        %v3052 = vld [vmem:[#allocation2 + $0x98] sm:$0xff]
        %v3053 = vld [vmem:[#allocation2 + $0xa0] sm:$0xff]
        %v3054 = vld [vmem:[#allocation2 + $0xa8] sm:$0xff]
        %v3055 = vld [vmem:[#allocation2 + $0xb0] sm:$0xff]
        %v3056 = vld [vmem:[#allocation2 + $0xb8] sm:$0xff]
        %v3057 = vld [vmem:[#allocation2 + $0xc0] sm:$0xff]
        %v3058 = vld [vmem:[#allocation2 + $0xc8] sm:$0xff]
        %v3059 = vld [vmem:[#allocation2 + $0xd0] sm:$0xff]
        %v3060 = vld [vmem:[#allocation2 + $0xd8] sm:$0xff]
        %v3061 = vld [vmem:[#allocation2 + $0xe0] sm:$0xff]
        %v3062 = vld [vmem:[#allocation2 + $0xe8] sm:$0xff]
        %v3063 = vld [vmem:[#allocation2 + $0xf0] sm:$0xff]
        %v3064 = vld [vmem:[#allocation2 + $0xf8] sm:$0xff]
        %v3065 = vld [vmem:[#allocation2 + $0x100] sm:$0xff]
        %v3066 = vld [vmem:[#allocation2 + $0x108] sm:$0xff]
        %v3067 = vld [vmem:[#allocation2 + $0x110] sm:$0xff]
        %v3068 = vld [vmem:[#allocation2 + $0x118] sm:$0xff]
        %v3069 = vld [vmem:[#allocation2 + $0x120] sm:$0xff]
        %v3070 = vld [vmem:[#allocation2 + $0x128] sm:$0xff]
        %v3071 = vld [vmem:[#allocation2 + $0x130] sm:$0xff]
        %v3072 = vld [vmem:[#allocation2 + $0x138] sm:$0xff]
        %v3073 = vld [vmem:[#allocation2 + $0x140] sm:$0xff]
        %v3074 = vld [vmem:[#allocation2 + $0x148] sm:$0xff]
        %v3075 = vld [vmem:[#allocation2 + $0x150] sm:$0xff]
        %v3076 = vld [vmem:[#allocation2 + $0x158] sm:$0xff]
        %v3077 = vld [vmem:[#allocation2 + $0x160] sm:$0xff]
        %v3078 = vld [vmem:[#allocation2 + $0x168] sm:$0xff]
        %v3079 = vld [vmem:[#allocation2 + $0x170] sm:$0xff]
        %v3080 = vld [vmem:[#allocation2 + $0x178] sm:$0xff]
        %v3081 = vld [vmem:[#allocation2 + $0x180] sm:$0xff]
        %v3082 = vld [vmem:[#allocation2 + $0x188] sm:$0xff]
        %v3083 = vld [vmem:[#allocation2 + $0x190] sm:$0xff]
        %v3084 = vld [vmem:[#allocation2 + $0x198] sm:$0xff]
        %v3085 = vld [vmem:[#allocation2 + $0x1a0] sm:$0xff]
        %v3086 = vld [vmem:[#allocation2 + $0x1a8] sm:$0xff]
        %v3087 = vld [vmem:[#allocation2 + $0x1b0] sm:$0xff]
        %v3088 = vld [vmem:[#allocation2 + $0x1b8] sm:$0xff]
        %v3089 = vld [vmem:[#allocation2 + $0x1c0] sm:$0xff]
        %v3090 = vld [vmem:[#allocation2 + $0x1c8] sm:$0xff]
        %v3091 = vld [vmem:[#allocation2 + $0x1d0] sm:$0xff]
        %v3092 = vld [vmem:[#allocation2 + $0x1d8] sm:$0xff]
        %v3093 = vld [vmem:[#allocation2 + $0x1e0] sm:$0xff]
        %v3094 = vld [vmem:[#allocation2 + $0x1e8] sm:$0xff]
        %v3095 = vld [vmem:[#allocation2 + $0x1f0] sm:$0xff]
        %v3096 = vld [vmem:[#allocation2 + $0x1f8] sm:$0xff]
        %v3097 = vld [vmem:[#allocation9] sm:$0xf]
        %v3098 = vld [vmem:[#allocation9 + $0x4] sm:$0xf]
        %v3099 = vld [vmem:[#allocation9 + $0x8] sm:$0xf]
        %v3100 = vld [vmem:[#allocation9 + $0xc] sm:$0xf]
        %v3101 = vld [vmem:[#allocation9 + $0x10] sm:$0xf]
        %v3102 = vld [vmem:[#allocation9 + $0x14] sm:$0xf]
        %v3103 = vld [vmem:[#allocation9 + $0x18] sm:$0xf]
        %v3104 = vld [vmem:[#allocation9 + $0x1c] sm:$0xf]
        %v3105 = vld [vmem:[#allocation9 + $0x20] sm:$0xf]
        %v3106 = vld [vmem:[#allocation9 + $0x24] sm:$0xf]
        %v3107 = vld [vmem:[#allocation9 + $0x28] sm:$0xf]
        %v3108 = vld [vmem:[#allocation9 + $0x2c] sm:$0xf]
        %v3109 = vld [vmem:[#allocation9 + $0x30] sm:$0xf]
        %v3110 = vld [vmem:[#allocation9 + $0x34] sm:$0xf]
        %v3111 = vld [vmem:[#allocation9 + $0x38] sm:$0xf]
        %v3112 = vld [vmem:[#allocation9 + $0x3c] sm:$0xf]
        %v3113 = vld [vmem:[#allocation9 + $0x40] sm:$0xf]
        %v3114 = vld [vmem:[#allocation9 + $0x44] sm:$0xf]
        %v3115 = vld [vmem:[#allocation9 + $0x48] sm:$0xf]
        %v3116 = vld [vmem:[#allocation9 + $0x4c] sm:$0xf]
        %v3117 = vld [vmem:[#allocation9 + $0x50] sm:$0xf]
        %v3118 = vld [vmem:[#allocation9 + $0x54] sm:$0xf]
        %v3119 = vld [vmem:[#allocation9 + $0x58] sm:$0xf]
        %v3120 = vld [vmem:[#allocation9 + $0x5c] sm:$0xf]
        %v3121 = vld [vmem:[#allocation9 + $0x60] sm:$0xf]
        %v3122 = vld [vmem:[#allocation9 + $0x64] sm:$0xf]
        %v3123 = vld [vmem:[#allocation9 + $0x68] sm:$0xf]
        %v3124 = vld [vmem:[#allocation9 + $0x6c] sm:$0xf]
        %v3125 = vld [vmem:[#allocation9 + $0x70] sm:$0xf]
        %v3126 = vld [vmem:[#allocation9 + $0x74] sm:$0xf]
        %v3127 = vld [vmem:[#allocation9 + $0x78] sm:$0xf]
        %v3128 = vld [vmem:[#allocation9 + $0x7c] sm:$0xf]
        %s3129 = scalar_lea.vmem %s5, 5
        %v3130 = vld [vmem:[%s3129] sm:$0x1]
        %v3132 = vlaneseq
        %v3133 = vshrl.u32 %v3132, 7
        %v3134 = vsub.s32 0, %v3133
        %v3135 = vrot.slane %v3130, %v3134
        %v3169 = vunpack.c.l.b16 %v3097
        %v3170 = vunpack.c.l.b16 %v3098
        %v3171 = vunpack.c.l.b16 %v3099
        %v3172 = vunpack.c.l.b16 %v3100
        %v3173 = vunpack.c.l.b16 %v3101
        %v3174 = vunpack.c.l.b16 %v3102
        %v3175 = vunpack.c.l.b16 %v3103
        %v3176 = vunpack.c.l.b16 %v3104
        %v3177 = vunpack.c.l.b16 %v3105
        %v3178 = vunpack.c.l.b16 %v3106
        %v3179 = vunpack.c.l.b16 %v3107
        %v3180 = vunpack.c.l.b16 %v3108
        %v3181 = vunpack.c.l.b16 %v3109
        %v3182 = vunpack.c.l.b16 %v3110
        %v3183 = vunpack.c.l.b16 %v3111
        %v3184 = vunpack.c.l.b16 %v3112
        %v3185 = vunpack.c.l.b16 %v3113
        %v3186 = vunpack.c.l.b16 %v3114
        %v3187 = vunpack.c.l.b16 %v3115
        %v3188 = vunpack.c.l.b16 %v3116
        %v3189 = vunpack.c.l.b16 %v3117
        %v3190 = vunpack.c.l.b16 %v3118
        %v3191 = vunpack.c.l.b16 %v3119
        %v3192 = vunpack.c.l.b16 %v3120
        %v3193 = vunpack.c.l.b16 %v3121
        %v3194 = vunpack.c.l.b16 %v3122
        %v3195 = vunpack.c.l.b16 %v3123
        %v3196 = vunpack.c.l.b16 %v3124
        %v3197 = vunpack.c.l.b16 %v3125
        %v3198 = vunpack.c.l.b16 %v3126
        %v3199 = vunpack.c.l.b16 %v3127
        %v3200 = vunpack.c.l.b16 %v3128
        %v3201 = vpack.c.b16 %v3170, %v3169
        %v3202 = vpack.c.b16 %v3172, %v3171
        %v3203 = vpack.c.b16 %v3174, %v3173
        %v3204 = vpack.c.b16 %v3176, %v3175
        %v3205 = vpack.c.b16 %v3178, %v3177
        %v3206 = vpack.c.b16 %v3180, %v3179
        %v3207 = vpack.c.b16 %v3182, %v3181
        %v3208 = vpack.c.b16 %v3184, %v3183
        %v3209 = vpack.c.b16 %v3186, %v3185
        %v3210 = vpack.c.b16 %v3188, %v3187
        %v3211 = vpack.c.b16 %v3190, %v3189
        %v3212 = vpack.c.b16 %v3192, %v3191
        %v3213 = vpack.c.b16 %v3194, %v3193
        %v3214 = vpack.c.b16 %v3196, %v3195
        %v3215 = vpack.c.b16 %v3198, %v3197
        %v3216 = vpack.c.b16 %v3200, %v3199
        %3233 = vmatprep.subr.bf16.mxu0 0
        %3234 = vmatpush1.bf16.msra.mxu0 %v3201
        %3235 = vmatprep.subr.bf16.mxu0 0
        %3236 = vmatpush1.bf16.msra.mxu0 %v3202
        %3237 = vmatprep.subr.bf16.mxu0 0
        %3238 = vmatpush1.bf16.msra.mxu0 %v3203
        %3239 = vmatprep.subr.bf16.mxu0 0
        %3240 = vmatpush1.bf16.msra.mxu0 %v3204
        %3241 = vmatprep.subr.bf16.mxu0 0
        %3242 = vmatpush1.bf16.msra.mxu0 %v3205
        %3243 = vmatprep.subr.bf16.mxu0 0
        %3244 = vmatpush1.bf16.msra.mxu0 %v3206
        %3245 = vmatprep.subr.bf16.mxu0 0
        %3246 = vmatpush1.bf16.msra.mxu0 %v3207
        %3247 = vmatprep.subr.bf16.mxu0 0
        %3248 = vmatpush1.bf16.msra.mxu0 %v3208
        %3249 = vmatprep.subr.bf16.mxu0 0
        %3250 = vmatpush1.bf16.msra.mxu0 %v3209
        %3251 = vmatprep.subr.bf16.mxu0 0
        %3252 = vmatpush1.bf16.msra.mxu0 %v3210
        %3253 = vmatprep.subr.bf16.mxu0 0
        %3254 = vmatpush1.bf16.msra.mxu0 %v3211
        %3255 = vmatprep.subr.bf16.mxu0 0
        %3256 = vmatpush1.bf16.msra.mxu0 %v3212
        %3257 = vmatprep.subr.bf16.mxu0 0
        %3258 = vmatpush1.bf16.msra.mxu0 %v3213
        %3259 = vmatprep.subr.bf16.mxu0 0
        %3260 = vmatpush1.bf16.msra.mxu0 %v3214
        %3261 = vmatprep.subr.bf16.mxu0 0
        %3262 = vmatpush1.bf16.msra.mxu0 %v3215
        %3263 = vmatprep.subr.bf16.mxu0 0
        %3264 = vmatpush1.bf16.msra.mxu0 %v3216
        %3265 = vmatprep.mubr.bf16.mxu0 %v3034
        %3266 = vmatmul.mubr.bf16.gmra.mrb[0].mxu0 %v3033
        %v3267 = vpop.f32.mrb[0].mxu0
        %v3268 = vadd.f32 %v3135, %v3267
        %v3269 = vpop.f32.mrb[0].mxu0
        %v3270 = vpop.f32.mrb[0].mxu0
        %v3271 = vadd.f32 %v3135, %v3270
        %v3272 = vpop.f32.mrb[0].mxu0
        %3273 = vmatprep.mubr.bf16.mxu0 %v3036
        %3274 = vmatmul.mubr.bf16.gmra.mrb[0].mxu0 %v3035
        %v3275 = vpop.f32.mrb[0].mxu0
        %v3276 = vadd.f32 %v3135, %v3275
        %v3277 = vpop.f32.mrb[0].mxu0
        %v3278 = vpop.f32.mrb[0].mxu0
        %v3279 = vadd.f32 %v3135, %v3278
        %v3280 = vpop.f32.mrb[0].mxu0
        %3281 = vmatprep.mubr.bf16.mxu0 %v3038
        %3282 = vmatmul.mubr.bf16.gmra.mrb[0].mxu0 %v3037
        %v3283 = vpop.f32.mrb[0].mxu0
        %v3284 = vadd.f32 %v3135, %v3283
        %v3285 = vpop.f32.mrb[0].mxu0
        %v3286 = vpop.f32.mrb[0].mxu0
        %v3287 = vadd.f32 %v3135, %v3286
        %v3288 = vpop.f32.mrb[0].mxu0
        %3289 = vmatprep.mubr.bf16.mxu0 %v3040
        %3290 = vmatmul.mubr.bf16.gmra.mrb[0].mxu0 %v3039
        %v3291 = vpop.f32.mrb[0].mxu0
        %v3292 = vadd.f32 %v3135, %v3291
        %v3293 = vpop.f32.mrb[0].mxu0
        %v3294 = vpop.f32.mrb[0].mxu0
        %v3295 = vadd.f32 %v3135, %v3294
        %v3296 = vpop.f32.mrb[0].mxu0
        %3297 = vmatprep.mubr.bf16.mxu0 %v3042
        %3298 = vmatmul.mubr.bf16.gmra.mrb[0].mxu0 %v3041
        %v3299 = vpop.f32.mrb[0].mxu0
        %v3300 = vadd.f32 %v3135, %v3299
        %v3301 = vpop.f32.mrb[0].mxu0
        %v3302 = vpop.f32.mrb[0].mxu0
        %v3303 = vadd.f32 %v3135, %v3302
        %v3304 = vpop.f32.mrb[0].mxu0
        %3305 = vmatprep.mubr.bf16.mxu0 %v3044
        %3306 = vmatmul.mubr.bf16.gmra.mrb[0].mxu0 %v3043
        %v3307 = vpop.f32.mrb[0].mxu0
        %v3308 = vadd.f32 %v3135, %v3307
        %v3309 = vpop.f32.mrb[0].mxu0
        %v3310 = vpop.f32.mrb[0].mxu0
        %v3311 = vadd.f32 %v3135, %v3310
        %v3312 = vpop.f32.mrb[0].mxu0
        %3313 = vmatprep.mubr.bf16.mxu0 %v3046
        %3314 = vmatmul.mubr.bf16.gmra.mrb[0].mxu0 %v3045
        %v3315 = vpop.f32.mrb[0].mxu0
        %v3316 = vadd.f32 %v3135, %v3315
        %v3317 = vpop.f32.mrb[0].mxu0
        %v3318 = vpop.f32.mrb[0].mxu0
        %v3319 = vadd.f32 %v3135, %v3318
        %v3320 = vpop.f32.mrb[0].mxu0
        %3321 = vmatprep.mubr.bf16.mxu0 %v3048
        %3322 = vmatmul.mubr.bf16.gmra.mrb[0].mxu0 %v3047
        %v3323 = vpop.f32.mrb[0].mxu0
        %v3324 = vadd.f32 %v3135, %v3323
        %v3325 = vpop.f32.mrb[0].mxu0
        %v3326 = vpop.f32.mrb[0].mxu0
        %v3327 = vadd.f32 %v3135, %v3326
        %v3328 = vpop.f32.mrb[0].mxu0
        %3329 = vmatprep.mubr.bf16.mxu0 %v3050
        %3330 = vmatmul.mubr.bf16.gmra.mrb[0].mxu0 %v3049
        %v3331 = vpop.f32.mrb[0].mxu0
        %v3332 = vadd.f32 %v3135, %v3331
        %v3333 = vpop.f32.mrb[0].mxu0
        %v3334 = vpop.f32.mrb[0].mxu0
        %v3335 = vadd.f32 %v3135, %v3334
        %v3336 = vpop.f32.mrb[0].mxu0
        %3337 = vmatprep.mubr.bf16.mxu0 %v3052
        %3338 = vmatmul.mubr.bf16.gmra.mrb[0].mxu0 %v3051
        %v3339 = vpop.f32.mrb[0].mxu0
        %v3340 = vadd.f32 %v3135, %v3339
        %v3341 = vpop.f32.mrb[0].mxu0
        %v3342 = vpop.f32.mrb[0].mxu0
        %v3343 = vadd.f32 %v3135, %v3342
        %v3344 = vpop.f32.mrb[0].mxu0
        %3345 = vmatprep.mubr.bf16.mxu0 %v3054
        %3346 = vmatmul.mubr.bf16.gmra.mrb[0].mxu0 %v3053
        %v3347 = vpop.f32.mrb[0].mxu0
        %v3348 = vadd.f32 %v3135, %v3347
        %v3349 = vpop.f32.mrb[0].mxu0
        %v3350 = vpop.f32.mrb[0].mxu0
        %v3351 = vadd.f32 %v3135, %v3350
        %v3352 = vpop.f32.mrb[0].mxu0
        %3353 = vmatprep.mubr.bf16.mxu0 %v3056
        %3354 = vmatmul.mubr.bf16.gmra.mrb[0].mxu0 %v3055
        %v3355 = vpop.f32.mrb[0].mxu0
        %v3356 = vadd.f32 %v3135, %v3355
        %v3357 = vpop.f32.mrb[0].mxu0
        %v3358 = vpop.f32.mrb[0].mxu0
        %v3359 = vadd.f32 %v3135, %v3358
        %v3360 = vpop.f32.mrb[0].mxu0
        %3361 = vmatprep.mubr.bf16.mxu0 %v3058
        %3362 = vmatmul.mubr.bf16.gmra.mrb[0].mxu0 %v3057
        %v3363 = vpop.f32.mrb[0].mxu0
        %v3364 = vadd.f32 %v3135, %v3363
        %v3365 = vpop.f32.mrb[0].mxu0
        %v3366 = vpop.f32.mrb[0].mxu0
        %v3367 = vadd.f32 %v3135, %v3366
        %v3368 = vpop.f32.mrb[0].mxu0
        %3369 = vmatprep.mubr.bf16.mxu0 %v3060
        %3370 = vmatmul.mubr.bf16.gmra.mrb[0].mxu0 %v3059
        %v3371 = vpop.f32.mrb[0].mxu0
        %v3372 = vadd.f32 %v3135, %v3371
        %v3373 = vpop.f32.mrb[0].mxu0
        %v3374 = vpop.f32.mrb[0].mxu0
        %v3375 = vadd.f32 %v3135, %v3374
        %v3376 = vpop.f32.mrb[0].mxu0
        %3377 = vmatprep.mubr.bf16.mxu0 %v3062
        %3378 = vmatmul.mubr.bf16.gmra.mrb[0].mxu0 %v3061
        %v3379 = vpop.f32.mrb[0].mxu0
        %v3380 = vadd.f32 %v3135, %v3379
        %v3381 = vpop.f32.mrb[0].mxu0
        %v3382 = vpop.f32.mrb[0].mxu0
        %v3383 = vadd.f32 %v3135, %v3382
        %v3384 = vpop.f32.mrb[0].mxu0
        %3385 = vmatprep.mubr.bf16.mxu0 %v3064
        %3386 = vmatmul.mubr.bf16.gmra.mrb[0].mxu0 %v3063
        %v3387 = vpop.f32.mrb[0].mxu0
        %v3388 = vadd.f32 %v3135, %v3387
        %v3389 = vpop.f32.mrb[0].mxu0
        %v3390 = vpop.f32.mrb[0].mxu0
        %v3391 = vadd.f32 %v3135, %v3390
        %v3392 = vpop.f32.mrb[0].mxu0
        %3393 = vmatprep.mubr.bf16.mxu0 %v3066
        %3394 = vmatmul.mubr.bf16.gmra.mrb[0].mxu0 %v3065
        %v3395 = vpop.f32.mrb[0].mxu0
        %v3396 = vadd.f32 %v3135, %v3395
        %v3397 = vpop.f32.mrb[0].mxu0
        %v3398 = vpop.f32.mrb[0].mxu0
        %v3399 = vadd.f32 %v3135, %v3398
        %v3400 = vpop.f32.mrb[0].mxu0
        %3401 = vmatprep.mubr.bf16.mxu0 %v3068
        %3402 = vmatmul.mubr.bf16.gmra.mrb[0].mxu0 %v3067
        %v3403 = vpop.f32.mrb[0].mxu0
        %v3404 = vadd.f32 %v3135, %v3403
        %v3405 = vpop.f32.mrb[0].mxu0
        %v3406 = vpop.f32.mrb[0].mxu0
        %v3407 = vadd.f32 %v3135, %v3406
        %v3408 = vpop.f32.mrb[0].mxu0
        %3409 = vmatprep.mubr.bf16.mxu0 %v3070
        %3410 = vmatmul.mubr.bf16.gmra.mrb[0].mxu0 %v3069
        %v3411 = vpop.f32.mrb[0].mxu0
        %v3412 = vadd.f32 %v3135, %v3411
        %v3413 = vpop.f32.mrb[0].mxu0
        %v3414 = vpop.f32.mrb[0].mxu0
        %v3415 = vadd.f32 %v3135, %v3414
        %v3416 = vpop.f32.mrb[0].mxu0
        %3417 = vmatprep.mubr.bf16.mxu0 %v3072
        %3418 = vmatmul.mubr.bf16.gmra.mrb[0].mxu0 %v3071
        %v3419 = vpop.f32.mrb[0].mxu0
        %v3420 = vadd.f32 %v3135, %v3419
        %v3421 = vpop.f32.mrb[0].mxu0
        %v3422 = vpop.f32.mrb[0].mxu0
        %v3423 = vadd.f32 %v3135, %v3422
        %v3424 = vpop.f32.mrb[0].mxu0
        %3425 = vmatprep.mubr.bf16.mxu0 %v3074
        %3426 = vmatmul.mubr.bf16.gmra.mrb[0].mxu0 %v3073
        %v3427 = vpop.f32.mrb[0].mxu0
        %v3428 = vadd.f32 %v3135, %v3427
        %v3429 = vpop.f32.mrb[0].mxu0
        %v3430 = vpop.f32.mrb[0].mxu0
        %v3431 = vadd.f32 %v3135, %v3430
        %v3432 = vpop.f32.mrb[0].mxu0
        %3433 = vmatprep.mubr.bf16.mxu0 %v3076
        %3434 = vmatmul.mubr.bf16.gmra.mrb[0].mxu0 %v3075
        %v3435 = vpop.f32.mrb[0].mxu0
        %v3436 = vadd.f32 %v3135, %v3435
        %v3437 = vpop.f32.mrb[0].mxu0
        %v3438 = vpop.f32.mrb[0].mxu0
        %v3439 = vadd.f32 %v3135, %v3438
        %v3440 = vpop.f32.mrb[0].mxu0
        %3441 = vmatprep.mubr.bf16.mxu0 %v3078
        %3442 = vmatmul.mubr.bf16.gmra.mrb[0].mxu0 %v3077
        %v3443 = vpop.f32.mrb[0].mxu0
        %v3444 = vadd.f32 %v3135, %v3443
        %v3445 = vpop.f32.mrb[0].mxu0
        %v3446 = vpop.f32.mrb[0].mxu0
        %v3447 = vadd.f32 %v3135, %v3446
        %v3448 = vpop.f32.mrb[0].mxu0
        %3449 = vmatprep.mubr.bf16.mxu0 %v3080
        %3450 = vmatmul.mubr.bf16.gmra.mrb[0].mxu0 %v3079
        %v3451 = vpop.f32.mrb[0].mxu0
        %v3452 = vadd.f32 %v3135, %v3451
        %v3453 = vpop.f32.mrb[0].mxu0
        %v3454 = vpop.f32.mrb[0].mxu0
        %v3455 = vadd.f32 %v3135, %v3454
        %v3456 = vpop.f32.mrb[0].mxu0
        %3457 = vmatprep.mubr.bf16.mxu0 %v3082
        %3458 = vmatmul.mubr.bf16.gmra.mrb[0].mxu0 %v3081
        %v3459 = vpop.f32.mrb[0].mxu0
        %v3460 = vadd.f32 %v3135, %v3459
        %v3461 = vpop.f32.mrb[0].mxu0
        %v3462 = vpop.f32.mrb[0].mxu0
        %v3463 = vadd.f32 %v3135, %v3462
        %v3464 = vpop.f32.mrb[0].mxu0
        %3465 = vmatprep.mubr.bf16.mxu0 %v3084
        %3466 = vmatmul.mubr.bf16.gmra.mrb[0].mxu0 %v3083
        %v3467 = vpop.f32.mrb[0].mxu0
        %v3468 = vadd.f32 %v3135, %v3467
        %v3469 = vpop.f32.mrb[0].mxu0
        %v3470 = vpop.f32.mrb[0].mxu0
        %v3471 = vadd.f32 %v3135, %v3470
        %v3472 = vpop.f32.mrb[0].mxu0
        %3473 = vmatprep.mubr.bf16.mxu0 %v3086
        %3474 = vmatmul.mubr.bf16.gmra.mrb[0].mxu0 %v3085
        %v3475 = vpop.f32.mrb[0].mxu0
        %v3476 = vadd.f32 %v3135, %v3475
        %v3477 = vpop.f32.mrb[0].mxu0
        %v3478 = vpop.f32.mrb[0].mxu0
        %v3479 = vadd.f32 %v3135, %v3478
        %v3480 = vpop.f32.mrb[0].mxu0
        %3481 = vmatprep.mubr.bf16.mxu0 %v3088
        %3482 = vmatmul.mubr.bf16.gmra.mrb[0].mxu0 %v3087
        %v3483 = vpop.f32.mrb[0].mxu0
        %v3484 = vadd.f32 %v3135, %v3483
        %v3485 = vpop.f32.mrb[0].mxu0
        %v3486 = vpop.f32.mrb[0].mxu0
        %v3487 = vadd.f32 %v3135, %v3486
        %v3488 = vpop.f32.mrb[0].mxu0
        %3489 = vmatprep.mubr.bf16.mxu0 %v3090
        %3490 = vmatmul.mubr.bf16.gmra.mrb[0].mxu0 %v3089
        %v3491 = vpop.f32.mrb[0].mxu0
        %v3492 = vadd.f32 %v3135, %v3491
        %v3493 = vpop.f32.mrb[0].mxu0
        %v3494 = vpop.f32.mrb[0].mxu0
        %v3495 = vadd.f32 %v3135, %v3494
        %v3496 = vpop.f32.mrb[0].mxu0
        %3497 = vmatprep.mubr.bf16.mxu0 %v3092
        %3498 = vmatmul.mubr.bf16.gmra.mrb[0].mxu0 %v3091
        %v3499 = vpop.f32.mrb[0].mxu0
        %v3500 = vadd.f32 %v3135, %v3499
        %v3501 = vpop.f32.mrb[0].mxu0
        %v3502 = vpop.f32.mrb[0].mxu0
        %v3503 = vadd.f32 %v3135, %v3502
        %v3504 = vpop.f32.mrb[0].mxu0
        %3505 = vmatprep.mubr.bf16.mxu0 %v3094
        %3506 = vmatmul.mubr.bf16.gmra.mrb[0].mxu0 %v3093
        %v3507 = vpop.f32.mrb[0].mxu0
        %v3508 = vadd.f32 %v3135, %v3507
        %v3509 = vpop.f32.mrb[0].mxu0
        %v3510 = vpop.f32.mrb[0].mxu0
        %v3511 = vadd.f32 %v3135, %v3510
        %v3512 = vpop.f32.mrb[0].mxu0
        %3513 = vmatprep.mubr.bf16.mxu0 %v3096
        %3514 = vmatmul.mubr.bf16.gmra.mrb[0].mxu0 %v3095
        %v3515 = vpop.f32.mrb[0].mxu0
        %v3516 = vadd.f32 %v3135, %v3515
        %v3517 = vpop.f32.mrb[0].mxu0
        %v3518 = vpop.f32.mrb[0].mxu0
        %v3519 = vadd.f32 %v3135, %v3518
        %v3520 = vpop.f32.mrb[0].mxu0
        %3521 = vdwg.mxu0
        %v3522 = vmax.f32 %v3268, 0.0
        %v3523 = vmax.f32 %v3271, 0.0
        %v3524 = vmax.f32 %v3276, 0.0
        %v3525 = vmax.f32 %v3279, 0.0
        %v3526 = vmax.f32 %v3284, 0.0
        %v3527 = vmax.f32 %v3287, 0.0
        %v3528 = vmax.f32 %v3292, 0.0
        %v3529 = vmax.f32 %v3295, 0.0
        %v3530 = vmax.f32 %v3300, 0.0
        %v3531 = vmax.f32 %v3303, 0.0
        %v3532 = vmax.f32 %v3308, 0.0
        %v3533 = vmax.f32 %v3311, 0.0
        %v3534 = vmax.f32 %v3316, 0.0
        %v3535 = vmax.f32 %v3319, 0.0
        %v3536 = vmax.f32 %v3324, 0.0
        %v3537 = vmax.f32 %v3327, 0.0
        %v3538 = vmax.f32 %v3332, 0.0
        %v3539 = vmax.f32 %v3335, 0.0
        %v3540 = vmax.f32 %v3340, 0.0
        %v3541 = vmax.f32 %v3343, 0.0
        %v3542 = vmax.f32 %v3348, 0.0
        %v3543 = vmax.f32 %v3351, 0.0
        %v3544 = vmax.f32 %v3356, 0.0
        %v3545 = vmax.f32 %v3359, 0.0
        %v3546 = vmax.f32 %v3364, 0.0
        %v3547 = vmax.f32 %v3367, 0.0
        %v3548 = vmax.f32 %v3372, 0.0
        %v3549 = vmax.f32 %v3375, 0.0
        %v3550 = vmax.f32 %v3380, 0.0
        %v3551 = vmax.f32 %v3383, 0.0
        %v3552 = vmax.f32 %v3388, 0.0
        %v3553 = vmax.f32 %v3391, 0.0
        %v3554 = vmax.f32 %v3396, 0.0
        %v3555 = vmax.f32 %v3399, 0.0
        %v3556 = vmax.f32 %v3404, 0.0
        %v3557 = vmax.f32 %v3407, 0.0
        %v3558 = vmax.f32 %v3412, 0.0
        %v3559 = vmax.f32 %v3415, 0.0
        %v3560 = vmax.f32 %v3420, 0.0
        %v3561 = vmax.f32 %v3423, 0.0
        %v3562 = vmax.f32 %v3428, 0.0
        %v3563 = vmax.f32 %v3431, 0.0
        %v3564 = vmax.f32 %v3436, 0.0
        %v3565 = vmax.f32 %v3439, 0.0
        %v3566 = vmax.f32 %v3444, 0.0
        %v3567 = vmax.f32 %v3447, 0.0
        %v3568 = vmax.f32 %v3452, 0.0
        %v3569 = vmax.f32 %v3455, 0.0
        %v3570 = vmax.f32 %v3460, 0.0
        %v3571 = vmax.f32 %v3463, 0.0
        %v3572 = vmax.f32 %v3468, 0.0
        %v3573 = vmax.f32 %v3471, 0.0
        %v3574 = vmax.f32 %v3476, 0.0
        %v3575 = vmax.f32 %v3479, 0.0
        %v3576 = vmax.f32 %v3484, 0.0
        %v3577 = vmax.f32 %v3487, 0.0
        %v3578 = vmax.f32 %v3492, 0.0
        %v3579 = vmax.f32 %v3495, 0.0
        %v3580 = vmax.f32 %v3500, 0.0
        %v3581 = vmax.f32 %v3503, 0.0
        %v3582 = vmax.f32 %v3508, 0.0
        %v3583 = vmax.f32 %v3511, 0.0
        %v3584 = vmax.f32 %v3516, 0.0
        %v3585 = vmax.f32 %v3519, 0.0
        %v3586 = vpack.c.bf16 %v3523, %v3522
        %v3587 = vpack.c.bf16 %v3525, %v3524
        %v3588 = vpack.c.bf16 %v3527, %v3526
        %v3589 = vpack.c.bf16 %v3529, %v3528
        %v3590 = vpack.c.bf16 %v3531, %v3530
        %v3591 = vpack.c.bf16 %v3533, %v3532
        %v3592 = vpack.c.bf16 %v3535, %v3534
        %v3593 = vpack.c.bf16 %v3537, %v3536
        %v3594 = vpack.c.bf16 %v3539, %v3538
        %v3595 = vpack.c.bf16 %v3541, %v3540
        %v3596 = vpack.c.bf16 %v3543, %v3542
        %v3597 = vpack.c.bf16 %v3545, %v3544
        %v3598 = vpack.c.bf16 %v3547, %v3546
        %v3599 = vpack.c.bf16 %v3549, %v3548
        %v3600 = vpack.c.bf16 %v3551, %v3550
        %v3601 = vpack.c.bf16 %v3553, %v3552
        %v3602 = vpack.c.bf16 %v3555, %v3554
        %v3603 = vpack.c.bf16 %v3557, %v3556
        %v3604 = vpack.c.bf16 %v3559, %v3558
        %v3605 = vpack.c.bf16 %v3561, %v3560
        %v3606 = vpack.c.bf16 %v3563, %v3562
        %v3607 = vpack.c.bf16 %v3565, %v3564
        %v3608 = vpack.c.bf16 %v3567, %v3566
        %v3609 = vpack.c.bf16 %v3569, %v3568
        %v3610 = vpack.c.bf16 %v3571, %v3570
        %v3611 = vpack.c.bf16 %v3573, %v3572
        %v3612 = vpack.c.bf16 %v3575, %v3574
        %v3613 = vpack.c.bf16 %v3577, %v3576
        %v3614 = vpack.c.bf16 %v3579, %v3578
        %v3615 = vpack.c.bf16 %v3581, %v3580
        %v3616 = vpack.c.bf16 %v3583, %v3582
        %v3617 = vpack.c.bf16 %v3585, %v3584
        %v3618 = vld [vmem:[#allocation11] sm:$0xf]
        %v3619 = vld [vmem:[#allocation11 + $0x4] sm:$0xf]
        %v3620 = vld [vmem:[#allocation11 + $0x8] sm:$0xf]
        %v3621 = vld [vmem:[#allocation11 + $0xc] sm:$0xf]
        %v3622 = vld [vmem:[#allocation11 + $0x10] sm:$0xf]
        %v3623 = vld [vmem:[#allocation11 + $0x14] sm:$0xf]
        %v3624 = vld [vmem:[#allocation11 + $0x18] sm:$0xf]
        %v3625 = vld [vmem:[#allocation11 + $0x1c] sm:$0xf]
        %v3626 = vld [vmem:[#allocation11 + $0x20] sm:$0xf]
        %v3627 = vld [vmem:[#allocation11 + $0x24] sm:$0xf]
        %v3628 = vld [vmem:[#allocation11 + $0x28] sm:$0xf]
        %v3629 = vld [vmem:[#allocation11 + $0x2c] sm:$0xf]
        %v3630 = vld [vmem:[#allocation11 + $0x30] sm:$0xf]
        %v3631 = vld [vmem:[#allocation11 + $0x34] sm:$0xf]
        %v3632 = vld [vmem:[#allocation11 + $0x38] sm:$0xf]
        %v3633 = vld [vmem:[#allocation11 + $0x3c] sm:$0xf]
        %s3634 = scalar_lea.vmem %s5, 6
        %v3635 = vld [vmem:[%s3634] sm:$0x1]
        %v3637 = vlaneseq
        %v3638 = vshrl.u32 %v3637, 7
        %v3639 = vsub.s32 0, %v3638
        %v3640 = vrot.slane %v3635, %v3639
        %v3658 = vunpack.c.l.b16 %v3618
        %v3659 = vunpack.c.l.b16 %v3619
        %v3660 = vunpack.c.l.b16 %v3620
        %v3661 = vunpack.c.l.b16 %v3621
        %v3662 = vunpack.c.l.b16 %v3622
        %v3663 = vunpack.c.l.b16 %v3623
        %v3664 = vunpack.c.l.b16 %v3624
        %v3665 = vunpack.c.l.b16 %v3625
        %v3666 = vunpack.c.l.b16 %v3626
        %v3667 = vunpack.c.l.b16 %v3627
        %v3668 = vunpack.c.l.b16 %v3628
        %v3669 = vunpack.c.l.b16 %v3629
        %v3670 = vunpack.c.l.b16 %v3630
        %v3671 = vunpack.c.l.b16 %v3631
        %v3672 = vunpack.c.l.b16 %v3632
        %v3673 = vunpack.c.l.b16 %v3633
        %v3674 = vpack.c.b16 %v3659, %v3658
        %v3675 = vpack.c.b16 %v3661, %v3660
        %v3676 = vpack.c.b16 %v3663, %v3662
        %v3677 = vpack.c.b16 %v3665, %v3664
        %v3678 = vpack.c.b16 %v3667, %v3666
        %v3679 = vpack.c.b16 %v3669, %v3668
        %v3680 = vpack.c.b16 %v3671, %v3670
        %v3681 = vpack.c.b16 %v3673, %v3672
        %3690 = vmatprep.subr.bf16.mxu0 0
        %3691 = vmatpush1.bf16.msra.mxu0 %v3674
        %3692 = vmatprep.subr.bf16.mxu0 0
        %3693 = vmatpush1.bf16.msra.mxu0 %v3675
        %3694 = vmatprep.subr.bf16.mxu0 0
        %3695 = vmatpush1.bf16.msra.mxu0 %v3676
        %3696 = vmatprep.subr.bf16.mxu0 0
        %3697 = vmatpush1.bf16.msra.mxu0 %v3677
        %3698 = vmatprep.subr.bf16.mxu0 0
        %3699 = vmatpush1.bf16.msra.mxu0 %v3678
        %3700 = vmatprep.subr.bf16.mxu0 0
        %3701 = vmatpush1.bf16.msra.mxu0 %v3679
        %3702 = vmatprep.subr.bf16.mxu0 0
        %3703 = vmatpush1.bf16.msra.mxu0 %v3680
        %3704 = vmatprep.subr.bf16.mxu0 0
        %3705 = vmatpush1.bf16.msra.mxu0 %v3681
        %3706 = vmatprep.subr.bf16.mxu0 0
        %3707 = vmatpush1.bf16.msra.mxu0 0
        %3708 = vmatprep.subr.bf16.mxu0 0
        %3709 = vmatpush1.bf16.msra.mxu0 0
        %3710 = vmatprep.subr.bf16.mxu0 0
        %3711 = vmatpush1.bf16.msra.mxu0 0
        %3712 = vmatprep.subr.bf16.mxu0 0
        %3713 = vmatpush1.bf16.msra.mxu0 0
        %3714 = vmatprep.subr.bf16.mxu0 0
        %3715 = vmatpush1.bf16.msra.mxu0 0
        %3716 = vmatprep.subr.bf16.mxu0 0
        %3717 = vmatpush1.bf16.msra.mxu0 0
        %3718 = vmatprep.subr.bf16.mxu0 0
        %3719 = vmatpush1.bf16.msra.mxu0 0
        %3720 = vmatprep.subr.bf16.mxu0 0
        %3721 = vmatpush1.bf16.msra.mxu0 0
        %3722 = vmatprep.mubr.bf16.mxu0 0
        %3723 = vmatmul.mubr.bf16.gmra.mrb[0].mxu0 %v3586
        %v3724 = vpop.f32.mrb[0].mxu0
        %v3725 = vadd.f32 %v3640, %v3724
        %v3726 = vpop.f32.mrb[0].mxu0
        %v3727 = vpop.f32.mrb[0].mxu0
        %v3728 = vadd.f32 %v3640, %v3727
        %v3729 = vpop.f32.mrb[0].mxu0
        %3730 = vmatprep.mubr.bf16.mxu0 0
        %3731 = vmatmul.mubr.bf16.gmra.mrb[0].mxu0 %v3587
        %v3732 = vpop.f32.mrb[0].mxu0
        %v3733 = vadd.f32 %v3640, %v3732
        %v3734 = vpop.f32.mrb[0].mxu0
        %v3735 = vpop.f32.mrb[0].mxu0
        %v3736 = vadd.f32 %v3640, %v3735
        %v3737 = vpop.f32.mrb[0].mxu0
        %3738 = vmatprep.mubr.bf16.mxu0 0
        %3739 = vmatmul.mubr.bf16.gmra.mrb[0].mxu0 %v3588
        %v3740 = vpop.f32.mrb[0].mxu0
        %v3741 = vadd.f32 %v3640, %v3740
        %v3742 = vpop.f32.mrb[0].mxu0
        %v3743 = vpop.f32.mrb[0].mxu0
        %v3744 = vadd.f32 %v3640, %v3743
        %v3745 = vpop.f32.mrb[0].mxu0
        %3746 = vmatprep.mubr.bf16.mxu0 0
        %3747 = vmatmul.mubr.bf16.gmra.mrb[0].mxu0 %v3589
        %v3748 = vpop.f32.mrb[0].mxu0
        %v3749 = vadd.f32 %v3640, %v3748
        %v3750 = vpop.f32.mrb[0].mxu0
        %v3751 = vpop.f32.mrb[0].mxu0
        %v3752 = vadd.f32 %v3640, %v3751
        %v3753 = vpop.f32.mrb[0].mxu0
        %3754 = vmatprep.mubr.bf16.mxu0 0
        %3755 = vmatmul.mubr.bf16.gmra.mrb[0].mxu0 %v3590
        %v3756 = vpop.f32.mrb[0].mxu0
        %v3757 = vadd.f32 %v3640, %v3756
        %v3758 = vpop.f32.mrb[0].mxu0
        %v3759 = vpop.f32.mrb[0].mxu0
        %v3760 = vadd.f32 %v3640, %v3759
        %v3761 = vpop.f32.mrb[0].mxu0
        %3762 = vmatprep.mubr.bf16.mxu0 0
        %3763 = vmatmul.mubr.bf16.gmra.mrb[0].mxu0 %v3591
        %v3764 = vpop.f32.mrb[0].mxu0
        %v3765 = vadd.f32 %v3640, %v3764
        %v3766 = vpop.f32.mrb[0].mxu0
        %v3767 = vpop.f32.mrb[0].mxu0
        %v3768 = vadd.f32 %v3640, %v3767
        %v3769 = vpop.f32.mrb[0].mxu0
        %3770 = vmatprep.mubr.bf16.mxu0 0
        %3771 = vmatmul.mubr.bf16.gmra.mrb[0].mxu0 %v3592
        %v3772 = vpop.f32.mrb[0].mxu0
        %v3773 = vadd.f32 %v3640, %v3772
        %v3774 = vpop.f32.mrb[0].mxu0
        %v3775 = vpop.f32.mrb[0].mxu0
        %v3776 = vadd.f32 %v3640, %v3775
        %v3777 = vpop.f32.mrb[0].mxu0
        %3778 = vmatprep.mubr.bf16.mxu0 0
        %3779 = vmatmul.mubr.bf16.gmra.mrb[0].mxu0 %v3593
        %v3780 = vpop.f32.mrb[0].mxu0
        %v3781 = vadd.f32 %v3640, %v3780
        %v3782 = vpop.f32.mrb[0].mxu0
        %v3783 = vpop.f32.mrb[0].mxu0
        %v3784 = vadd.f32 %v3640, %v3783
        %v3785 = vpop.f32.mrb[0].mxu0
        %3786 = vmatprep.mubr.bf16.mxu0 0
        %3787 = vmatmul.mubr.bf16.gmra.mrb[0].mxu0 %v3594
        %v3788 = vpop.f32.mrb[0].mxu0
        %v3789 = vadd.f32 %v3640, %v3788
        %v3790 = vpop.f32.mrb[0].mxu0
        %v3791 = vpop.f32.mrb[0].mxu0
        %v3792 = vadd.f32 %v3640, %v3791
        %v3793 = vpop.f32.mrb[0].mxu0
        %3794 = vmatprep.mubr.bf16.mxu0 0
        %3795 = vmatmul.mubr.bf16.gmra.mrb[0].mxu0 %v3595
        %v3796 = vpop.f32.mrb[0].mxu0
        %v3797 = vadd.f32 %v3640, %v3796
        %v3798 = vpop.f32.mrb[0].mxu0
        %v3799 = vpop.f32.mrb[0].mxu0
        %v3800 = vadd.f32 %v3640, %v3799
        %v3801 = vpop.f32.mrb[0].mxu0
        %3802 = vmatprep.mubr.bf16.mxu0 0
        %3803 = vmatmul.mubr.bf16.gmra.mrb[0].mxu0 %v3596
        %v3804 = vpop.f32.mrb[0].mxu0
        %v3805 = vadd.f32 %v3640, %v3804
        %v3806 = vpop.f32.mrb[0].mxu0
        %v3807 = vpop.f32.mrb[0].mxu0
        %v3808 = vadd.f32 %v3640, %v3807
        %v3809 = vpop.f32.mrb[0].mxu0
        %3810 = vmatprep.mubr.bf16.mxu0 0
        %3811 = vmatmul.mubr.bf16.gmra.mrb[0].mxu0 %v3597
        %v3812 = vpop.f32.mrb[0].mxu0
        %v3813 = vadd.f32 %v3640, %v3812
        %v3814 = vpop.f32.mrb[0].mxu0
        %v3815 = vpop.f32.mrb[0].mxu0
        %v3816 = vadd.f32 %v3640, %v3815
        %v3817 = vpop.f32.mrb[0].mxu0
        %3818 = vmatprep.mubr.bf16.mxu0 0
        %3819 = vmatmul.mubr.bf16.gmra.mrb[0].mxu0 %v3598
        %v3820 = vpop.f32.mrb[0].mxu0
        %v3821 = vadd.f32 %v3640, %v3820
        %v3822 = vpop.f32.mrb[0].mxu0
        %v3823 = vpop.f32.mrb[0].mxu0
        %v3824 = vadd.f32 %v3640, %v3823
        %v3825 = vpop.f32.mrb[0].mxu0
        %3826 = vmatprep.mubr.bf16.mxu0 0
        %3827 = vmatmul.mubr.bf16.gmra.mrb[0].mxu0 %v3599
        %v3828 = vpop.f32.mrb[0].mxu0
        %v3829 = vadd.f32 %v3640, %v3828
        %v3830 = vpop.f32.mrb[0].mxu0
        %v3831 = vpop.f32.mrb[0].mxu0
        %v3832 = vadd.f32 %v3640, %v3831
        %v3833 = vpop.f32.mrb[0].mxu0
        %3834 = vmatprep.mubr.bf16.mxu0 0
        %3835 = vmatmul.mubr.bf16.gmra.mrb[0].mxu0 %v3600
        %v3836 = vpop.f32.mrb[0].mxu0
        %v3837 = vadd.f32 %v3640, %v3836
        %v3838 = vpop.f32.mrb[0].mxu0
        %v3839 = vpop.f32.mrb[0].mxu0
        %v3840 = vadd.f32 %v3640, %v3839
        %v3841 = vpop.f32.mrb[0].mxu0
        %3842 = vmatprep.mubr.bf16.mxu0 0
        %3843 = vmatmul.mubr.bf16.gmra.mrb[0].mxu0 %v3601
        %v3844 = vpop.f32.mrb[0].mxu0
        %v3845 = vadd.f32 %v3640, %v3844
        %v3846 = vpop.f32.mrb[0].mxu0
        %v3847 = vpop.f32.mrb[0].mxu0
        %v3848 = vadd.f32 %v3640, %v3847
        %v3849 = vpop.f32.mrb[0].mxu0
        %3850 = vmatprep.mubr.bf16.mxu0 0
        %3851 = vmatmul.mubr.bf16.gmra.mrb[0].mxu0 %v3602
        %v3852 = vpop.f32.mrb[0].mxu0
        %v3853 = vadd.f32 %v3640, %v3852
        %v3854 = vpop.f32.mrb[0].mxu0
        %v3855 = vpop.f32.mrb[0].mxu0
        %v3856 = vadd.f32 %v3640, %v3855
        %v3857 = vpop.f32.mrb[0].mxu0
        %3858 = vmatprep.mubr.bf16.mxu0 0
        %3859 = vmatmul.mubr.bf16.gmra.mrb[0].mxu0 %v3603
        %v3860 = vpop.f32.mrb[0].mxu0
        %v3861 = vadd.f32 %v3640, %v3860
        %v3862 = vpop.f32.mrb[0].mxu0
        %v3863 = vpop.f32.mrb[0].mxu0
        %v3864 = vadd.f32 %v3640, %v3863
        %v3865 = vpop.f32.mrb[0].mxu0
        %3866 = vmatprep.mubr.bf16.mxu0 0
        %3867 = vmatmul.mubr.bf16.gmra.mrb[0].mxu0 %v3604
        %v3868 = vpop.f32.mrb[0].mxu0
        %v3869 = vadd.f32 %v3640, %v3868
        %v3870 = vpop.f32.mrb[0].mxu0
        %v3871 = vpop.f32.mrb[0].mxu0
        %v3872 = vadd.f32 %v3640, %v3871
        %v3873 = vpop.f32.mrb[0].mxu0
        %3874 = vmatprep.mubr.bf16.mxu0 0
        %3875 = vmatmul.mubr.bf16.gmra.mrb[0].mxu0 %v3605
        %v3876 = vpop.f32.mrb[0].mxu0
        %v3877 = vadd.f32 %v3640, %v3876
        %v3878 = vpop.f32.mrb[0].mxu0
        %v3879 = vpop.f32.mrb[0].mxu0
        %v3880 = vadd.f32 %v3640, %v3879
        %v3881 = vpop.f32.mrb[0].mxu0
        %3882 = vmatprep.mubr.bf16.mxu0 0
        %3883 = vmatmul.mubr.bf16.gmra.mrb[0].mxu0 %v3606
        %v3884 = vpop.f32.mrb[0].mxu0
        %v3885 = vadd.f32 %v3640, %v3884
        %v3886 = vpop.f32.mrb[0].mxu0
        %v3887 = vpop.f32.mrb[0].mxu0
        %v3888 = vadd.f32 %v3640, %v3887
        %v3889 = vpop.f32.mrb[0].mxu0
        %3890 = vmatprep.mubr.bf16.mxu0 0
        %3891 = vmatmul.mubr.bf16.gmra.mrb[0].mxu0 %v3607
        %v3892 = vpop.f32.mrb[0].mxu0
        %v3893 = vadd.f32 %v3640, %v3892
        %v3894 = vpop.f32.mrb[0].mxu0
        %v3895 = vpop.f32.mrb[0].mxu0
        %v3896 = vadd.f32 %v3640, %v3895
        %v3897 = vpop.f32.mrb[0].mxu0
        %3898 = vmatprep.mubr.bf16.mxu0 0
        %3899 = vmatmul.mubr.bf16.gmra.mrb[0].mxu0 %v3608
        %v3900 = vpop.f32.mrb[0].mxu0
        %v3901 = vadd.f32 %v3640, %v3900
        %v3902 = vpop.f32.mrb[0].mxu0
        %v3903 = vpop.f32.mrb[0].mxu0
        %v3904 = vadd.f32 %v3640, %v3903
        %v3905 = vpop.f32.mrb[0].mxu0
        %3906 = vmatprep.mubr.bf16.mxu0 0
        %3907 = vmatmul.mubr.bf16.gmra.mrb[0].mxu0 %v3609
        %v3908 = vpop.f32.mrb[0].mxu0
        %v3909 = vadd.f32 %v3640, %v3908
        %v3910 = vpop.f32.mrb[0].mxu0
        %v3911 = vpop.f32.mrb[0].mxu0
        %v3912 = vadd.f32 %v3640, %v3911
        %v3913 = vpop.f32.mrb[0].mxu0
        %3914 = vmatprep.mubr.bf16.mxu0 0
        %3915 = vmatmul.mubr.bf16.gmra.mrb[0].mxu0 %v3610
        %v3916 = vpop.f32.mrb[0].mxu0
        %v3917 = vadd.f32 %v3640, %v3916
        %v3918 = vpop.f32.mrb[0].mxu0
        %v3919 = vpop.f32.mrb[0].mxu0
        %v3920 = vadd.f32 %v3640, %v3919
        %v3921 = vpop.f32.mrb[0].mxu0
        %3922 = vmatprep.mubr.bf16.mxu0 0
        %3923 = vmatmul.mubr.bf16.gmra.mrb[0].mxu0 %v3611
        %v3924 = vpop.f32.mrb[0].mxu0
        %v3925 = vadd.f32 %v3640, %v3924
        %v3926 = vpop.f32.mrb[0].mxu0
        %v3927 = vpop.f32.mrb[0].mxu0
        %v3928 = vadd.f32 %v3640, %v3927
        %v3929 = vpop.f32.mrb[0].mxu0
        %3930 = vmatprep.mubr.bf16.mxu0 0
        %3931 = vmatmul.mubr.bf16.gmra.mrb[0].mxu0 %v3612
        %v3932 = vpop.f32.mrb[0].mxu0
        %v3933 = vadd.f32 %v3640, %v3932
        %v3934 = vpop.f32.mrb[0].mxu0
        %v3935 = vpop.f32.mrb[0].mxu0
        %v3936 = vadd.f32 %v3640, %v3935
        %v3937 = vpop.f32.mrb[0].mxu0
        %3938 = vmatprep.mubr.bf16.mxu0 0
        %3939 = vmatmul.mubr.bf16.gmra.mrb[0].mxu0 %v3613
        %v3940 = vpop.f32.mrb[0].mxu0
        %v3941 = vadd.f32 %v3640, %v3940
        %v3942 = vpop.f32.mrb[0].mxu0
        %v3943 = vpop.f32.mrb[0].mxu0
        %v3944 = vadd.f32 %v3640, %v3943
        %v3945 = vpop.f32.mrb[0].mxu0
        %3946 = vmatprep.mubr.bf16.mxu0 0
        %3947 = vmatmul.mubr.bf16.gmra.mrb[0].mxu0 %v3614
        %v3948 = vpop.f32.mrb[0].mxu0
        %v3949 = vadd.f32 %v3640, %v3948
        %v3950 = vpop.f32.mrb[0].mxu0
        %v3951 = vpop.f32.mrb[0].mxu0
        %v3952 = vadd.f32 %v3640, %v3951
        %v3953 = vpop.f32.mrb[0].mxu0
        %3954 = vmatprep.mubr.bf16.mxu0 0
        %3955 = vmatmul.mubr.bf16.gmra.mrb[0].mxu0 %v3615
        %v3956 = vpop.f32.mrb[0].mxu0
        %v3957 = vadd.f32 %v3640, %v3956
        %v3958 = vpop.f32.mrb[0].mxu0
        %v3959 = vpop.f32.mrb[0].mxu0
        %v3960 = vadd.f32 %v3640, %v3959
        %v3961 = vpop.f32.mrb[0].mxu0
        %3962 = vmatprep.mubr.bf16.mxu0 0
        %3963 = vmatmul.mubr.bf16.gmra.mrb[0].mxu0 %v3616
        %v3964 = vpop.f32.mrb[0].mxu0
        %v3965 = vadd.f32 %v3640, %v3964
        %v3966 = vpop.f32.mrb[0].mxu0
        %v3967 = vpop.f32.mrb[0].mxu0
        %v3968 = vadd.f32 %v3640, %v3967
        %v3969 = vpop.f32.mrb[0].mxu0
        %3970 = vmatprep.mubr.bf16.mxu0 0
        %3971 = vmatmul.mubr.bf16.gmra.mrb[0].mxu0 %v3617
        %v3972 = vpop.f32.mrb[0].mxu0
        %v3973 = vadd.f32 %v3640, %v3972
        %v3974 = vpop.f32.mrb[0].mxu0
        %v3975 = vpop.f32.mrb[0].mxu0
        %v3976 = vadd.f32 %v3640, %v3975
        %v3977 = vpop.f32.mrb[0].mxu0
        %3978 = vdwg.mxu0
        %v3979 = vpack.c.bf16 %v3728, %v3725
        %v3980 = vpack.c.bf16 %v3736, %v3733
        %v3981 = vpack.c.bf16 %v3744, %v3741
        %v3982 = vpack.c.bf16 %v3752, %v3749
        %v3983 = vpack.c.bf16 %v3760, %v3757
        %v3984 = vpack.c.bf16 %v3768, %v3765
        %v3985 = vpack.c.bf16 %v3776, %v3773
        %v3986 = vpack.c.bf16 %v3784, %v3781
        %v3987 = vpack.c.bf16 %v3792, %v3789
        %v3988 = vpack.c.bf16 %v3800, %v3797
        %v3989 = vpack.c.bf16 %v3808, %v3805
        %v3990 = vpack.c.bf16 %v3816, %v3813
        %v3991 = vpack.c.bf16 %v3824, %v3821
        %v3992 = vpack.c.bf16 %v3832, %v3829
        %v3993 = vpack.c.bf16 %v3840, %v3837
        %v3994 = vpack.c.bf16 %v3848, %v3845
        %v3995 = vpack.c.bf16 %v3856, %v3853
        %v3996 = vpack.c.bf16 %v3864, %v3861
        %v3997 = vpack.c.bf16 %v3872, %v3869
        %v3998 = vpack.c.bf16 %v3880, %v3877
        %v3999 = vpack.c.bf16 %v3888, %v3885
        %v4000 = vpack.c.bf16 %v3896, %v3893
        %v4001 = vpack.c.bf16 %v3904, %v3901
        %v4002 = vpack.c.bf16 %v3912, %v3909
        %v4003 = vpack.c.bf16 %v3920, %v3917
        %v4004 = vpack.c.bf16 %v3928, %v3925
        %v4005 = vpack.c.bf16 %v3936, %v3933
        %v4006 = vpack.c.bf16 %v3944, %v3941
        %v4007 = vpack.c.bf16 %v3952, %v3949
        %v4008 = vpack.c.bf16 %v3960, %v3957
        %v4009 = vpack.c.bf16 %v3968, %v3965
        %v4010 = vpack.c.bf16 %v3976, %v3973
        %v4043 = vunpack.c.l.b16 %v3979
        %v4044 = vunpack.c.h.b16 %v3979
        %v4045 = vunpack.c.l.b16 %v3980
        %v4046 = vunpack.c.h.b16 %v3980
        %v4047 = vunpack.c.l.b16 %v3981
        %v4048 = vunpack.c.h.b16 %v3981
        %v4049 = vunpack.c.l.b16 %v3982
        %v4050 = vunpack.c.h.b16 %v3982
        %v4051 = vunpack.c.l.b16 %v3983
        %v4052 = vunpack.c.h.b16 %v3983
        %v4053 = vunpack.c.l.b16 %v3984
        %v4054 = vunpack.c.h.b16 %v3984
        %v4055 = vunpack.c.l.b16 %v3985
        %v4056 = vunpack.c.h.b16 %v3985
        %v4057 = vunpack.c.l.b16 %v3986
        %v4058 = vunpack.c.h.b16 %v3986
        %v4059 = vunpack.c.l.b16 %v3987
        %v4060 = vunpack.c.h.b16 %v3987
        %v4061 = vunpack.c.l.b16 %v3988
        %v4062 = vunpack.c.h.b16 %v3988
        %v4063 = vunpack.c.l.b16 %v3989
        %v4064 = vunpack.c.h.b16 %v3989
        %v4065 = vunpack.c.l.b16 %v3990
        %v4066 = vunpack.c.h.b16 %v3990
        %v4067 = vunpack.c.l.b16 %v3991
        %v4068 = vunpack.c.h.b16 %v3991
        %v4069 = vunpack.c.l.b16 %v3992
        %v4070 = vunpack.c.h.b16 %v3992
        %v4071 = vunpack.c.l.b16 %v3993
        %v4072 = vunpack.c.h.b16 %v3993
        %v4073 = vunpack.c.l.b16 %v3994
        %v4074 = vunpack.c.h.b16 %v3994
        %v4075 = vunpack.c.l.b16 %v3995
        %v4076 = vunpack.c.h.b16 %v3995
        %v4077 = vunpack.c.l.b16 %v3996
        %v4078 = vunpack.c.h.b16 %v3996
        %v4079 = vunpack.c.l.b16 %v3997
        %v4080 = vunpack.c.h.b16 %v3997
        %v4081 = vunpack.c.l.b16 %v3998
        %v4082 = vunpack.c.h.b16 %v3998
        %v4083 = vunpack.c.l.b16 %v3999
        %v4084 = vunpack.c.h.b16 %v3999
        %v4085 = vunpack.c.l.b16 %v4000
        %v4086 = vunpack.c.h.b16 %v4000
        %v4087 = vunpack.c.l.b16 %v4001
        %v4088 = vunpack.c.h.b16 %v4001
        %v4089 = vunpack.c.l.b16 %v4002
        %v4090 = vunpack.c.h.b16 %v4002
        %v4091 = vunpack.c.l.b16 %v4003
        %v4092 = vunpack.c.h.b16 %v4003
        %v4093 = vunpack.c.l.b16 %v4004
        %v4094 = vunpack.c.h.b16 %v4004
        %v4095 = vunpack.c.l.b16 %v4005
        %v4096 = vunpack.c.h.b16 %v4005
        %v4097 = vunpack.c.l.b16 %v4006
        %v4098 = vunpack.c.h.b16 %v4006
        %v4099 = vunpack.c.l.b16 %v4007
        %v4100 = vunpack.c.h.b16 %v4007
        %v4101 = vunpack.c.l.b16 %v4008
        %v4102 = vunpack.c.h.b16 %v4008
        %v4103 = vunpack.c.l.b16 %v4009
        %v4104 = vunpack.c.h.b16 %v4009
        %v4105 = vunpack.c.l.b16 %v4010
        %v4106 = vunpack.c.h.b16 %v4010
        %v4107 = vpack.c.b16 %v4043, %v4043
        %v4108 = vpack.c.b16 %v4044, %v4044
        %v4109 = vpack.c.b16 %v4045, %v4045
        %v4110 = vpack.c.b16 %v4046, %v4046
        %v4111 = vpack.c.b16 %v4047, %v4047
        %v4112 = vpack.c.b16 %v4048, %v4048
        %v4113 = vpack.c.b16 %v4049, %v4049
        %v4114 = vpack.c.b16 %v4050, %v4050
        %v4115 = vpack.c.b16 %v4051, %v4051
        %v4116 = vpack.c.b16 %v4052, %v4052
        %v4117 = vpack.c.b16 %v4053, %v4053
        %v4118 = vpack.c.b16 %v4054, %v4054
        %v4119 = vpack.c.b16 %v4055, %v4055
        %v4120 = vpack.c.b16 %v4056, %v4056
        %v4121 = vpack.c.b16 %v4057, %v4057
        %v4122 = vpack.c.b16 %v4058, %v4058
        %v4123 = vpack.c.b16 %v4059, %v4059
        %v4124 = vpack.c.b16 %v4060, %v4060
        %v4125 = vpack.c.b16 %v4061, %v4061
        %v4126 = vpack.c.b16 %v4062, %v4062
        %v4127 = vpack.c.b16 %v4063, %v4063
        %v4128 = vpack.c.b16 %v4064, %v4064
        %v4129 = vpack.c.b16 %v4065, %v4065
        %v4130 = vpack.c.b16 %v4066, %v4066
        %v4131 = vpack.c.b16 %v4067, %v4067
        %v4132 = vpack.c.b16 %v4068, %v4068
        %v4133 = vpack.c.b16 %v4069, %v4069
        %v4134 = vpack.c.b16 %v4070, %v4070
        %v4135 = vpack.c.b16 %v4071, %v4071
        %v4136 = vpack.c.b16 %v4072, %v4072
        %v4137 = vpack.c.b16 %v4073, %v4073
        %v4138 = vpack.c.b16 %v4074, %v4074
        %v4139 = vpack.c.b16 %v4075, %v4075
        %v4140 = vpack.c.b16 %v4076, %v4076
        %v4141 = vpack.c.b16 %v4077, %v4077
        %v4142 = vpack.c.b16 %v4078, %v4078
        %v4143 = vpack.c.b16 %v4079, %v4079
        %v4144 = vpack.c.b16 %v4080, %v4080
        %v4145 = vpack.c.b16 %v4081, %v4081
        %v4146 = vpack.c.b16 %v4082, %v4082
        %v4147 = vpack.c.b16 %v4083, %v4083
        %v4148 = vpack.c.b16 %v4084, %v4084
        %v4149 = vpack.c.b16 %v4085, %v4085
        %v4150 = vpack.c.b16 %v4086, %v4086
        %v4151 = vpack.c.b16 %v4087, %v4087
        %v4152 = vpack.c.b16 %v4088, %v4088
        %v4153 = vpack.c.b16 %v4089, %v4089
        %v4154 = vpack.c.b16 %v4090, %v4090
        %v4155 = vpack.c.b16 %v4091, %v4091
        %v4156 = vpack.c.b16 %v4092, %v4092
        %v4157 = vpack.c.b16 %v4093, %v4093
        %v4158 = vpack.c.b16 %v4094, %v4094
        %v4159 = vpack.c.b16 %v4095, %v4095
        %v4160 = vpack.c.b16 %v4096, %v4096
        %v4161 = vpack.c.b16 %v4097, %v4097
        %v4162 = vpack.c.b16 %v4098, %v4098
        %v4163 = vpack.c.b16 %v4099, %v4099
        %v4164 = vpack.c.b16 %v4100, %v4100
        %v4165 = vpack.c.b16 %v4101, %v4101
        %v4166 = vpack.c.b16 %v4102, %v4102
        %v4167 = vpack.c.b16 %v4103, %v4103
        %v4168 = vpack.c.b16 %v4104, %v4104
        %v4169 = vpack.c.b16 %v4105, %v4105
        %v4170 = vpack.c.b16 %v4106, %v4106
        %4235 = vst [vmem:[%s328] sm:$0xf] %v4107
        %4236 = vst [vmem:[%s328 + $0x4] sm:$0xf] %v4108
        %4237 = vst [vmem:[%s328 + $0x8] sm:$0xf] %v4109
        %4238 = vst [vmem:[%s328 + $0xc] sm:$0xf] %v4110
        %4239 = vst [vmem:[%s328 + $0x10] sm:$0xf] %v4111
        %4240 = vst [vmem:[%s328 + $0x14] sm:$0xf] %v4112
        %4241 = vst [vmem:[%s328 + $0x18] sm:$0xf] %v4113
        %4242 = vst [vmem:[%s328 + $0x1c] sm:$0xf] %v4114
        %4243 = vst [vmem:[%s328 + $0x20] sm:$0xf] %v4115
        %4244 = vst [vmem:[%s328 + $0x24] sm:$0xf] %v4116
        %4245 = vst [vmem:[%s328 + $0x28] sm:$0xf] %v4117
        %4246 = vst [vmem:[%s328 + $0x2c] sm:$0xf] %v4118
        %4247 = vst [vmem:[%s328 + $0x30] sm:$0xf] %v4119
        %4248 = vst [vmem:[%s328 + $0x34] sm:$0xf] %v4120
        %4249 = vst [vmem:[%s328 + $0x38] sm:$0xf] %v4121
        %4250 = vst [vmem:[%s328 + $0x3c] sm:$0xf] %v4122
        %4251 = vst [vmem:[%s328 + $0x40] sm:$0xf] %v4123
        %4252 = vst [vmem:[%s328 + $0x44] sm:$0xf] %v4124
        %4253 = vst [vmem:[%s328 + $0x48] sm:$0xf] %v4125
        %4254 = vst [vmem:[%s328 + $0x4c] sm:$0xf] %v4126
        %4255 = vst [vmem:[%s328 + $0x50] sm:$0xf] %v4127
        %4256 = vst [vmem:[%s328 + $0x54] sm:$0xf] %v4128
        %4257 = vst [vmem:[%s328 + $0x58] sm:$0xf] %v4129
        %4258 = vst [vmem:[%s328 + $0x5c] sm:$0xf] %v4130
        %4259 = vst [vmem:[%s328 + $0x60] sm:$0xf] %v4131
        %4260 = vst [vmem:[%s328 + $0x64] sm:$0xf] %v4132
        %4261 = vst [vmem:[%s328 + $0x68] sm:$0xf] %v4133
        %4262 = vst [vmem:[%s328 + $0x6c] sm:$0xf] %v4134
        %4263 = vst [vmem:[%s328 + $0x70] sm:$0xf] %v4135
        %4264 = vst [vmem:[%s328 + $0x74] sm:$0xf] %v4136
        %4265 = vst [vmem:[%s328 + $0x78] sm:$0xf] %v4137
        %4266 = vst [vmem:[%s328 + $0x7c] sm:$0xf] %v4138
        %4267 = vst [vmem:[%s328 + $0x80] sm:$0xf] %v4139
        %4268 = vst [vmem:[%s328 + $0x84] sm:$0xf] %v4140
        %4269 = vst [vmem:[%s328 + $0x88] sm:$0xf] %v4141
        %4270 = vst [vmem:[%s328 + $0x8c] sm:$0xf] %v4142
        %4271 = vst [vmem:[%s328 + $0x90] sm:$0xf] %v4143
        %4272 = vst [vmem:[%s328 + $0x94] sm:$0xf] %v4144
        %4273 = vst [vmem:[%s328 + $0x98] sm:$0xf] %v4145
        %4274 = vst [vmem:[%s328 + $0x9c] sm:$0xf] %v4146
        %4275 = vst [vmem:[%s328 + $0xa0] sm:$0xf] %v4147
        %4276 = vst [vmem:[%s328 + $0xa4] sm:$0xf] %v4148
        %4277 = vst [vmem:[%s328 + $0xa8] sm:$0xf] %v4149
        %4278 = vst [vmem:[%s328 + $0xac] sm:$0xf] %v4150
        %4279 = vst [vmem:[%s328 + $0xb0] sm:$0xf] %v4151
        %4280 = vst [vmem:[%s328 + $0xb4] sm:$0xf] %v4152
        %4281 = vst [vmem:[%s328 + $0xb8] sm:$0xf] %v4153
        %4282 = vst [vmem:[%s328 + $0xbc] sm:$0xf] %v4154
        %4283 = vst [vmem:[%s328 + $0xc0] sm:$0xf] %v4155
        %4284 = vst [vmem:[%s328 + $0xc4] sm:$0xf] %v4156
        %4285 = vst [vmem:[%s328 + $0xc8] sm:$0xf] %v4157
        %4286 = vst [vmem:[%s328 + $0xcc] sm:$0xf] %v4158
        %4287 = vst [vmem:[%s328 + $0xd0] sm:$0xf] %v4159
        %4288 = vst [vmem:[%s328 + $0xd4] sm:$0xf] %v4160
        %4289 = vst [vmem:[%s328 + $0xd8] sm:$0xf] %v4161
        %4290 = vst [vmem:[%s328 + $0xdc] sm:$0xf] %v4162
        %4291 = vst [vmem:[%s328 + $0xe0] sm:$0xf] %v4163
        %4292 = vst [vmem:[%s328 + $0xe4] sm:$0xf] %v4164
        %4293 = vst [vmem:[%s328 + $0xe8] sm:$0xf] %v4165
        %4294 = vst [vmem:[%s328 + $0xec] sm:$0xf] %v4166
        %4295 = vst [vmem:[%s328 + $0xf0] sm:$0xf] %v4167
        %4296 = vst [vmem:[%s328 + $0xf4] sm:$0xf] %v4168
        %4297 = vst [vmem:[%s328 + $0xf8] sm:$0xf] %v4169
        %4298 = vst [vmem:[%s328 + $0xfc] sm:$0xf] %v4170
        %s4299 = sand.u32 %s164, 1
        %s4300 = scalar_lea.sflag [#allocation5], %s4299
        %s4301 = sand.u32 %s164, 1
        %s4302 = smul.addr %s4301, 256
        %s4303 = scalar_lea.vmem [#allocation12], %s4302
        // Predicated region
        $region65: #{tpu_custom_call.1} parent=43 // pred_check
          %p4304 = pneg %p174
        $region66: #{tpu_custom_call.1} parent=43 // pred_check_branch
          %4306 = sbr.rel (%p4304) target = $region68
        $region67: #{tpu_custom_call.1} parent=43 // pred_region
          %s4307 = smul.u32 64, %s25
          %s4309 = ssub.s32 4096, 4096
          %4310 = vsyncadd %s4300, %s4309
          %s4311 = smul.addr %s4307, 64
          %s4312 = scalar_lea.hbm %s6, %s4311
          %s4313 = sshll.u32 %s4303, 4
          %s4314 = int_to_ptr.vmem [resolvable:$true] %s4313
          %4319 = dma.vmem_to_hbm [thread:$0]  %s4314, 4096, %s4312, %s4300, 64, 64, 4
        $region68: #{tpu_custom_call.1} parent=43 // pred_fallthru
          _
      $region44: #{tpu_custom_call.1} parent=5 // pred_fallthru
        _
      %p4320 = scmp.le.s32.totalorder 2, %s20
      // Predicated region
      $region69: #{tpu_custom_call.1} parent=5 // pred_check
        %p4321 = pneg %p4320
      $region70: #{tpu_custom_call.1} parent=5 // pred_check_branch
        %4323 = sbr.rel (%p4321) target = $region72
      $region71: #{tpu_custom_call.1} parent=5 // pred_region
        %s4324 = ssub.s32 %s20, 2
        // Predicated region
        $region73: #{tpu_custom_call.1} parent=71 // pred_check
          %p4325 = pneg %p180
        $region74: #{tpu_custom_call.1} parent=71 // pred_check_branch
          %4327 = sbr.rel (%p4325) target = $region76
        $region75: #{tpu_custom_call.1} parent=71 // pred_region
          %s4328 = sand.u32 %s165, 1
          %s4329 = scalar_lea.sflag [#allocation5], %s4328
          %s4330 = sand.u32 %s165, 1
          %s4331 = smul.addr %s4330, 256
          %s4332 = scalar_lea.vmem [#allocation12], %s4331
          %4333 = dma.done %s4329, 4096
        $region76: #{tpu_custom_call.1} parent=71 // pred_fallthru
          _
      $region72: #{tpu_custom_call.1} parent=5 // pred_fallthru
        _
    $region6: #{tpu_custom_call.1} parent=1 // loop_footer
      %s24 = sadd.s32 1, %s20
    $region7: #{tpu_custom_call.1} parent=1 // loop_footer_branch
      %19 = sbr.rel target = $region3
    $region8: #{tpu_custom_call.1} parent=1 // loop_exit
      _
    %4334 = vsyncpa [#allocation4], 1
    %s4335 = scalar_lea.sflag [#allocation4], 1
    %4336 = vsyncpa %s4335, 1
    %4337 = vsyncpa [#allocation7], 1
    %4338 = vsyncpa [#allocation10], 1
    %4339 = vsyncpa [#allocation5], 1
    %s4340 = scalar_lea.sflag [#allocation5], 1
    %4341 = vsyncpa %s4340, 1

</llo_original>
